<compile_context>
chip_gen: v5e
topology: v5e:2x2
jax: 0.10.0
libtpu: 0.0.40
codegen_flags: <defaults>
</compile_context>

<pallas_src>
import jax
import jax.numpy as jnp
from jax.experimental import pallas as pl
from jax.experimental.pallas import tpu as pltpu

TN_MAX = 8192                 # upper bound on points per kernel tile
VMEM_BUDGET = 12 << 20        # ~12 MiB: under v5e's 16 MiB default scoped VMEM


# ---------------------------------------------------------------------------
# Pallas kernel: the GFM fusion hot path
# ---------------------------------------------------------------------------
def _gfm_kernel(r2p_ref, pf_ref, v2p_ref, w_ref, b_ref, fuse_ref):
    c = pf_ref.shape[1]

    # Feature tiles, accumulated in f32 regardless of the storage dtype.
    r2p = r2p_ref[...].astype(jnp.float32)   # [TN, C]
    pf = pf_ref[...].astype(jnp.float32)     # [TN, C]
    v2p = v2p_ref[...].astype(jnp.float32)   # [TN, C]
    w = w_ref[...].astype(jnp.float32)       # [3C, 3]  (rows: W_r | W_p | W_v)

    # Logits on the (otherwise idle) MXU: three [TN,C]x[C,3] matmuls,
    # f32 accumulation.  HIGHEST precision is essentially free at this size
    # and keeps the kernel bit-comparable to the f32 reference.
    hi = jax.lax.Precision.HIGHEST
    logits = (
        jnp.dot(r2p, w[0:c], preferred_element_type=jnp.float32, precision=hi)
        + jnp.dot(pf, w[c:2 * c], preferred_element_type=jnp.float32, precision=hi)
        + jnp.dot(v2p, w[2 * c:3 * c], preferred_element_type=jnp.float32, precision=hi)
    )                                        # [TN, 3]

    # Fold the (3,) fused bias from SMEM into per-column [TN,1] logits.
    l_r = logits[:, 0:1] + b_ref[0]
    l_p = logits[:, 1:2] + b_ref[1]
    l_v = logits[:, 2:3] + b_ref[2]

    # Softmax over the 3 modality logits, per point (VPU + EUP).
    m = jnp.maximum(jnp.maximum(l_r, l_p), l_v)
    e_r = jnp.exp(l_r - m)
    e_p = jnp.exp(l_p - m)
    e_v = jnp.exp(l_v - m)
    inv = pl.reciprocal(e_r + e_p + e_v, approx=False)   # exact: gates sum to 1

    # fuse = r2p * w_r + p.F * w_p + v2p * w_v
    fuse = r2p * (e_r * inv) + pf * (e_p * inv) + v2p * (e_v * inv)
    fuse_ref[...] = fuse.astype(fuse_ref.dtype)


def _choose_tile(n, c, itemsize):
    """Tile rows per grid step.

    Targets a ~VMEM_BUDGET byte budget for the pipeline (3 double-buffered
    inputs + double-buffered output ~= 8 live tile buffers of TN*C*itemsize),
    capped at TN_MAX.  For small clouds that would fit in <= 2 tiles the tile
    is instead an even split rounded to 128 rows, so v7x's two TensorCores
    (dimension_semantics=('parallel',)) get balanced work.
    """
    rows = VMEM_BUDGET // (8 * c * itemsize)
    tn = max(128, min(TN_MAX, (rows // 128) * 128))
    half = ((pl.cdiv(n, 2) + 127) // 128) * 128   # even 2-way split, 128-aligned
    return max(128, min(tn, half))


def gfm_fuse(r2p, pf, v2p, w_all, bias):
    """r2p, pf, v2p: [N, C];  w_all: [3C, 3] (rows = W_r | W_p | W_v);
    bias: [3] (b_r + b_p + b_v).

    NOTE: for bandwidth-bound deployments (esp. v5e at ~0.82 TB/s) store the
    feature streams in bf16 — the kernel upcasts to f32 internally.
    """
    n, c = pf.shape
    tn = _choose_tile(n, c, jnp.dtype(pf.dtype).itemsize)
    grid = (pl.cdiv(n, tn),)   # ragged grid: Pallas masks the partial last block

    return pl.pallas_call(
        _gfm_kernel,
        out_shape=jax.ShapeDtypeStruct((n, c), pf.dtype),
        grid_spec=pltpu.PrefetchScalarGridSpec(
            num_scalar_prefetch=0,
            grid=grid,
            in_specs=[
                pl.BlockSpec((tn, c), lambda i: (i, 0)),      # r2p
                pl.BlockSpec((tn, c), lambda i: (i, 0)),      # p.F
                pl.BlockSpec((tn, c), lambda i: (i, 0)),      # v2p
                pl.BlockSpec((3 * c, 3), lambda i: (0, 0)),   # stacked branch weights
                pl.BlockSpec(memory_space=pltpu.MemorySpace.SMEM),  # fused bias (3,)
            ],
            out_specs=pl.BlockSpec((tn, c), lambda i: (i, 0)),
        ),
        compiler_params=pltpu.CompilerParams(
            dimension_semantics=("parallel",)),
    )(r2p, pf, v2p, w_all, bias)


# ---------------------------------------------------------------------------
# Glue ops (plain JAX): sparse-tensor / grid-sample style gathers & scatters
# ---------------------------------------------------------------------------
def voxel_to_point(v_feats, pv_idx):
    # TODO(synk): torchsparse voxel_to_point does trilinear devoxelization;
    #             simplified here to nearest-voxel gather.
    return v_feats[pv_idx]


def range_to_point(r, px, py):
    """Bilinear sample range feature map r [C,H,W] at normalized coords in [-1,1].

    Uses the align_corners=True convention; adjust if the original RPVNet
    uses F.grid_sample(align_corners=False).
    """
    C, H, W = r.shape
    x = (px + 1.0) * 0.5 * (W - 1)
    y = (py + 1.0) * 0.5 * (H - 1)
    x0 = jnp.clip(jnp.floor(x).astype(jnp.int32), 0, W - 1)
    y0 = jnp.clip(jnp.floor(y).astype(jnp.int32), 0, H - 1)
    x1 = jnp.clip(x0 + 1, 0, W - 1)
    y1 = jnp.clip(y0 + 1, 0, H - 1)
    wx = x - x0.astype(x.dtype)
    wy = y - y0.astype(y.dtype)

    def g(yy, xx):
        return r[:, yy, xx].T  # [N, C]

    return (g(y0, x0) * ((1 - wx) * (1 - wy))[:, None]
            + g(y0, x1) * (wx * (1 - wy))[:, None]
            + g(y1, x0) * ((1 - wx) * wy)[:, None]
            + g(y1, x1) * (wx * wy)[:, None])


def point_to_voxel(p_feats, pv_idx, num_voxels):
    """Scatter-mean point features back into voxels."""
    # TODO(synk): XLA scatter is effectively serial on TPU; replace with a
    #             sort-by-index segmented reduction / Pallas scatter kernel.
    sums = jax.ops.segment_sum(p_feats, pv_idx, num_segments=num_voxels)
    cnts = jax.ops.segment_sum(jnp.ones((p_feats.shape[0],), p_feats.dtype),
                               pv_idx, num_segments=num_voxels)
    return sums / jnp.maximum(cnts, 1.0)[:, None]


def point_to_range(shape_hw, p_feats, px, py):
    """Scatter-mean point features into the range image at nearest pixel."""
    H, W = shape_hw
    C = p_feats.shape[1]
    x = jnp.clip(jnp.round((px + 1.0) * 0.5 * (W - 1)).astype(jnp.int32), 0, W - 1)
    y = jnp.clip(jnp.round((py + 1.0) * 0.5 * (H - 1)).astype(jnp.int32), 0, H - 1)
    flat = y * W + x
    sums = jax.ops.segment_sum(p_feats, flat, num_segments=H * W)
    cnts = jax.ops.segment_sum(jnp.ones((p_feats.shape[0],), p_feats.dtype),
                               flat, num_segments=H * W)
    out = sums / jnp.maximum(cnts, 1.0)[:, None]
    return out.reshape(H, W, C).transpose(2, 0, 1)  # [C, H, W]


# ---------------------------------------------------------------------------
# GFM forward
# ---------------------------------------------------------------------------
def gfm_forward(params, r, p_feats, v_feats, px, py, pv_idx):
    # TODO(synk): fuse these gathers into gfm_fuse (scalar-prefetch indices +
    #             DMA gather) so r2p/v2p never round-trip through HBM.
    v2p = voxel_to_point(v_feats, pv_idx)
    r2p = range_to_point(r, px, py)

    # Stack branch weights into one [3C, 3] slab (rows: W_r | W_p | W_v)
    # and fold the three biases into one (3,) SMEM scalar vector.
    w_all = jnp.concatenate([params["w_r"], params["w_p"], params["w_v"]], axis=0)
    bias = params["b_r"] + params["b_p"] + params["b_v"]

    fuse = gfm_fuse(r2p, p_feats, v2p, w_all, bias)
    v_new = point_to_voxel(fuse, pv_idx, v_feats.shape[0])
    r_new = point_to_range(r.shape[-2:], fuse, px, py)
    return r_new, fuse, v_new


def gfm_reference(params, r2p, pf, v2p):
    """Pure-JAX reference for the Pallas fusion kernel."""
    hi = jax.lax.Precision.HIGHEST
    logits = (jnp.dot(r2p, params["w_r"], precision=hi) + params["b_r"]
              + jnp.dot(pf, params["w_p"], precision=hi) + params["b_p"]
              + jnp.dot(v2p, params["w_v"], precision=hi) + params["b_v"])
    w = jax.nn.softmax(logits, axis=-1)
    return r2p * w[:, 0:1] + pf * w[:, 1:2] + v2p * w[:, 2:3]


if __name__ == "__main__":
    key = jax.random.PRNGKey(0)
    N, C, H, W, M = 256, 32, 16, 16, 64  # points, in_features, range H/W, voxels

    keys = jax.random.split(key, 12)
    # deterministic synthetic parameters (nn.Linear(in_features, 3) per branch)
    params = {
        "w_r": jax.random.normal(keys[0], (C, 3), jnp.float32) * 0.1,
        "w_p": jax.random.normal(keys[1], (C, 3), jnp.float32) * 0.1,
        "w_v": jax.random.normal(keys[2], (C, 3), jnp.float32) * 0.1,
        "b_r": jax.random.normal(keys[3], (3,), jnp.float32) * 0.1,
        "b_p": jax.random.normal(keys[4], (3,), jnp.float32) * 0.1,
        "b_v": jax.random.normal(keys[5], (3,), jnp.float32) * 0.1,
    }

    r = jax.random.normal(keys[6], (C, H, W), jnp.float32)        # range features
    p_feats = jax.random.normal(keys[7], (N, C), jnp.float32)     # point features (p.F)
    v_feats = jax.random.normal(keys[8], (M, C), jnp.float32)     # voxel features
    px = jax.random.uniform(keys[9], (N,), jnp.float32, -1.0, 1.0)
    py = jax.random.uniform(keys[10], (N,), jnp.float32, -1.0, 1.0)
    pv_idx = jax.random.randint(keys[11], (N,), 0, M)              # point -> voxel map

    r_new, p_new, v_new = gfm_forward(params, r, p_feats, v_feats, px, py, pv_idx)
    jax.block_until_ready((r_new, p_new, v_new))

    # verify the Pallas fusion kernel against the pure-JAX reference
    v2p = voxel_to_point(v_feats, pv_idx)
    r2p = range_to_point(r, px, py)
    ref = gfm_reference(params, r2p, p_feats, v2p)
    assert jnp.allclose(p_new, ref, atol=1e-4, rtol=1e-4), "Pallas kernel mismatch"

    print("KERNEL_OK")
</pallas_src>

<mosaic_0001>
module attributes {stable_mosaic.version = 11 : i64} {
  func.func @_gfm_kernel(%arg0: i32, %arg1: memref<128x32xf32, #tpu.memory_space<vmem>>, %arg2: memref<128x32xf32, #tpu.memory_space<vmem>>, %arg3: memref<128x32xf32, #tpu.memory_space<vmem>>, %arg4: memref<96x3xf32, #tpu.memory_space<vmem>>, %arg5: memref<3xf32, #tpu.memory_space<smem>>, %arg6: memref<128x32xf32, #tpu.memory_space<vmem>>) attributes {dimension_semantics = [#tpu.dimension_semantics<parallel>], iteration_bounds = array<i64: 2>, scalar_prefetch = 0 : i64, scratch_operands = 0 : i64, tpu.core_type = #tpu.core_type<tc>, window_params = [{transform_indices = @transform_0, window_bounds = array<i64: 128, 32>}, {transform_indices = @transform_1, window_bounds = array<i64: 128, 32>}, {transform_indices = @transform_2, window_bounds = array<i64: 128, 32>}, {pipeline_mode = #tpu.pipeline_mode<synchronous>, transform_indices = @transform_3, window_bounds = array<i64: 96, 3>}, {transform_indices = @transform_4, window_bounds = array<i64: 3>}, {transform_indices = @transform_5, window_bounds = array<i64: 128, 32>}]} {
    %c0 = arith.constant 0 : index
    %c0_0 = arith.constant 0 : index
    %0 = vector.load %arg1[%c0, %c0_0] : memref<128x32xf32, #tpu.memory_space<vmem>>, vector<128x32xf32>
    %c0_1 = arith.constant 0 : index
    %c0_2 = arith.constant 0 : index
    %1 = vector.load %arg2[%c0_1, %c0_2] : memref<128x32xf32, #tpu.memory_space<vmem>>, vector<128x32xf32>
    %c0_3 = arith.constant 0 : index
    %c0_4 = arith.constant 0 : index
    %2 = vector.load %arg3[%c0_3, %c0_4] : memref<128x32xf32, #tpu.memory_space<vmem>>, vector<128x32xf32>
    %c0_5 = arith.constant 0 : index
    %c0_6 = arith.constant 0 : index
    %3 = vector.load %arg4[%c0_5, %c0_6] : memref<96x3xf32, #tpu.memory_space<vmem>>, vector<96x3xf32>
    %4 = vector.extract_strided_slice %3 {offsets = [0, 0], sizes = [32, 3], strides = [1, 1]} : vector<96x3xf32> to vector<32x3xf32>
    %cst = arith.constant dense<0.000000e+00> : vector<128x3xf32>
    %5 = tpu.matmul %0, %4, %cst {dimension_numbers = #tpu.dot_dimension_numbers<[1], [0], [0], [1], [0, 0, 1, 1], [], []>, precision = #tpu.contract_precision<fp32>} : vector<128x32xf32>, vector<32x3xf32>, vector<128x3xf32> -> vector<128x3xf32>
    %6 = vector.extract_strided_slice %3 {offsets = [32, 0], sizes = [32, 3], strides = [1, 1]} : vector<96x3xf32> to vector<32x3xf32>
    %cst_7 = arith.constant dense<0.000000e+00> : vector<128x3xf32>
    %7 = tpu.matmul %1, %6, %cst_7 {dimension_numbers = #tpu.dot_dimension_numbers<[1], [0], [0], [1], [0, 0, 1, 1], [], []>, precision = #tpu.contract_precision<fp32>} : vector<128x32xf32>, vector<32x3xf32>, vector<128x3xf32> -> vector<128x3xf32>
    %8 = arith.addf %5, %7 : vector<128x3xf32>
    %9 = vector.extract_strided_slice %3 {offsets = [64, 0], sizes = [32, 3], strides = [1, 1]} : vector<96x3xf32> to vector<32x3xf32>
    %cst_8 = arith.constant dense<0.000000e+00> : vector<128x3xf32>
    %10 = tpu.matmul %2, %9, %cst_8 {dimension_numbers = #tpu.dot_dimension_numbers<[1], [0], [0], [1], [0, 0, 1, 1], [], []>, precision = #tpu.contract_precision<fp32>} : vector<128x32xf32>, vector<32x3xf32>, vector<128x3xf32> -> vector<128x3xf32>
    %11 = arith.addf %8, %10 : vector<128x3xf32>
    %12 = vector.extract_strided_slice %11 {offsets = [0, 0], sizes = [128, 1], strides = [1, 1]} : vector<128x3xf32> to vector<128x1xf32>
    %c0_9 = arith.constant 0 : index
    %13 = memref.load %arg5[%c0_9] : memref<3xf32, #tpu.memory_space<smem>>
    %14 = vector.broadcast %13 : f32 to vector<128x1xf32>
    %15 = arith.addf %12, %14 : vector<128x1xf32>
    %16 = vector.extract_strided_slice %11 {offsets = [0, 1], sizes = [128, 1], strides = [1, 1]} : vector<128x3xf32> to vector<128x1xf32>
    %c1 = arith.constant 1 : index
    %17 = memref.load %arg5[%c1] : memref<3xf32, #tpu.memory_space<smem>>
    %18 = vector.broadcast %17 : f32 to vector<128x1xf32>
    %19 = arith.addf %16, %18 : vector<128x1xf32>
    %20 = vector.extract_strided_slice %11 {offsets = [0, 2], sizes = [128, 1], strides = [1, 1]} : vector<128x3xf32> to vector<128x1xf32>
    %c2 = arith.constant 2 : index
    %21 = memref.load %arg5[%c2] : memref<3xf32, #tpu.memory_space<smem>>
    %22 = vector.broadcast %21 : f32 to vector<128x1xf32>
    %23 = arith.addf %20, %22 : vector<128x1xf32>
    %24 = arith.maximumf %15, %19 : vector<128x1xf32>
    %25 = arith.maximumf %24, %23 : vector<128x1xf32>
    %26 = arith.subf %15, %25 : vector<128x1xf32>
    %27 = math.exp %26 : vector<128x1xf32>
    %28 = arith.subf %19, %25 : vector<128x1xf32>
    %29 = math.exp %28 : vector<128x1xf32>
    %30 = arith.subf %23, %25 : vector<128x1xf32>
    %31 = math.exp %30 : vector<128x1xf32>
    %32 = arith.addf %27, %29 : vector<128x1xf32>
    %33 = arith.addf %32, %31 : vector<128x1xf32>
    %34 = tpu.reciprocal %33 : vector<128x1xf32> -> vector<128x1xf32>
    %35 = arith.mulf %27, %34 : vector<128x1xf32>
    %36 = vector.broadcast %35 : vector<128x1xf32> to vector<128x32xf32>
    %37 = arith.mulf %0, %36 : vector<128x32xf32>
    %38 = arith.mulf %29, %34 : vector<128x1xf32>
    %39 = vector.broadcast %38 : vector<128x1xf32> to vector<128x32xf32>
    %40 = arith.mulf %1, %39 : vector<128x32xf32>
    %41 = arith.addf %37, %40 : vector<128x32xf32>
    %42 = arith.mulf %31, %34 : vector<128x1xf32>
    %43 = vector.broadcast %42 : vector<128x1xf32> to vector<128x32xf32>
    %44 = arith.mulf %2, %43 : vector<128x32xf32>
    %45 = arith.addf %41, %44 : vector<128x32xf32>
    %c0_10 = arith.constant 0 : index
    %c0_11 = arith.constant 0 : index
    %46 = vector.load %arg6[%c0_10, %c0_11] : memref<128x32xf32, #tpu.memory_space<vmem>>, vector<128x32xf32>
    tpu.vector_store %arg6[%c0_10, %c0_11], %45 {strides = array<i32>} : memref<128x32xf32, #tpu.memory_space<vmem>>, vector<128x32xf32>,
    return
  }
  func.func @transform_0(%arg0: i32) -> (i32, i32) {
    %c0_i32 = arith.constant 0 : i32
    %c0_i32_0 = arith.constant 0 : i32
    return %arg0, %c0_i32 : i32, i32
  }
  func.func @transform_1(%arg0: i32) -> (i32, i32) {
    %c0_i32 = arith.constant 0 : i32
    %c0_i32_0 = arith.constant 0 : i32
    return %arg0, %c0_i32 : i32, i32
  }
  func.func @transform_2(%arg0: i32) -> (i32, i32) {
    %c0_i32 = arith.constant 0 : i32
    %c0_i32_0 = arith.constant 0 : i32
    return %arg0, %c0_i32 : i32, i32
  }
  func.func @transform_3(%arg0: i32) -> (i32, i32) {
    %c0_i32 = arith.constant 0 : i32
    %c0_i32_0 = arith.constant 0 : i32
    %c0_i32_1 = arith.constant 0 : i32
    return %c0_i32, %c0_i32_0 : i32, i32
  }
  func.func @transform_4(%arg0: i32) -> i32 {
    %c0_i32 = arith.constant 0 : i32
    %c0_i32_0 = arith.constant 0 : i32
    return %c0_i32 : i32
  }
  func.func @transform_5(%arg0: i32) -> (i32, i32) {
    %c0_i32 = arith.constant 0 : i32
    %c0_i32_0 = arith.constant 0 : i32
    return %arg0, %c0_i32 : i32, i32
  }
}

</mosaic_0001>

<llo_original>
// kernel: tpu_custom_call.1
$region0: #{tpu_custom_call.1}
  #allocation0 [shape = 'u32[]', space=smem, size = 0x4, offset = 0x4, fixed_abs, tag = 'smem constant byte address 0x4 - core index']
  #allocation1 [shape = 'u32[72,128]{1,0:T(1,128)}', space=vmem, size = 0x9000, scoped, tag = 'internal scratch']
  %s0 = inlined_call_operand.vmem [shape: f32[256,32], index: 0, kind: input, shape index: {}]
  %s1 = inlined_call_operand.vmem [shape: f32[256,32], index: 1, kind: input, shape index: {}]
  %s2 = inlined_call_operand.vmem [shape: f32[256,32], index: 2, kind: input, shape index: {}]
  %s3 = inlined_call_operand.vmem [shape: f32[96,3], index: 3, kind: input, shape index: {}]
  %s4 = inlined_call_operand.vmem [shape: f32[3], index: 4, kind: input, shape index: {}]
  %s5 = inlined_call_operand.vmem [shape: f32[256,32], index: 5, kind: output, shape index: {}]
  %s6 = sld [smem:[#allocation0]]
  $region57: #{tpu_custom_call.1} parent=0
    _
  %s8 = ssub.s32 1, %s6
  %s9 = scalar_select 0, %s8, %s6
  $region1: #{tpu_custom_call.1} parent=0
    #allocation2 [shape = 'u8[512]{0}', space=smem, size = 0x200, scoped, tag = 'input window, operand 4, single buffered']
    #allocation3 [shape = 's32[2]{0}', space=sflag, size = 0x8, scoped, tag = 'scoped memory for tpu_custom_call.1']
    %10 = vsyncpa [#allocation3], 0
    loop: start=0, step=1, limit=4
    $region2: #{tpu_custom_call.1} parent=1 // loop_pre_header
      _
    $region3: #{tpu_custom_call.1} parent=1 // loop_header
      %s12 = sphi 0, %s16
      %p13 = scmp.ge.s32.totalorder %s12, 4
      %s22 = sphi 0, %s24
      %s25 = sphi 0, %s22
      %s26 = sphi 0, %s25
      %s42 = sphi 0, %s26
      %s48 = sphi 0, %s50
      %s51 = sphi 0, %s48
      %s52 = sphi 0, %s51
      %s68 = sphi 0, %s52
      %s74 = sphi 0, %s76
      %s77 = sphi 0, %s74
      %s78 = sphi 0, %s77
      %s94 = sphi 0, %s78
      %s98 = sphi 0, %s98
      %s100 = sphi 0, %s98
      %s101 = sphi 0, %s100
      %s115 = sphi 0, %s101
      %s119 = sphi 0, %s119
      %s121 = sphi 0, %s119
      %s122 = sphi 0, %s121
      %s136 = sphi 0, %s122
      %s142 = sphi 0, %s144
      %s145 = sphi 0, %s142
      %s146 = sphi 0, %s145
      %s162 = sphi 0, %s146
    $region4: #{tpu_custom_call.1} parent=1 // loop_header_branch
      %15 = sbr.rel (%p13) target = $region8
    $region5: #{tpu_custom_call.1} parent=1 // loop_body
      %s17 = ssub.s32 %s12, 1
      %s18 = ssub.s32 %s12, 2
      %s19 = sadd.s32 %s12, 1
      %s20 = ssub.s32 %s12, %s19
      %p21 = scmp.eq.s32.totalorder %s20, 0
      %s23 = sadd.s32 %s22, 1
      %s24 = scalar_select %p21, %s22, %s23
      %p27 = pneg %p21
      %p28 = scmp.eq.s32.totalorder %s12, 1
      %p29 = por %p27, %p28
      %p30 = scmp.ne.s32.totalorder %s22, %s25
      %p31 = scmp.eq.s32.totalorder %s12, 0
      %p32 = por %p30, %p31
      %p33 = scmp.ne.s32.totalorder %s22, %s25
      %p34 = scmp.eq.s32.totalorder %s17, 1
      %p35 = por %p33, %p34
      %p36 = scmp.ne.s32.totalorder %s25, %s26
      %p37 = scmp.eq.s32.totalorder %s17, 0
      %p38 = por %p36, %p37
      %p39 = scmp.ne.s32.totalorder %s25, %s26
      %p40 = scmp.eq.s32.totalorder %s18, 1
      %p41 = por %p39, %p40
      %p43 = scmp.ne.s32.totalorder %s26, %s42
      %p44 = scmp.eq.s32.totalorder %s18, 0
      %p45 = por %p43, %p44
      %s46 = ssub.s32 %s12, %s19
      %p47 = scmp.eq.s32.totalorder %s46, 0
      %s49 = sadd.s32 %s48, 1
      %s50 = scalar_select %p47, %s48, %s49
      %p53 = pneg %p47
      %p54 = scmp.eq.s32.totalorder %s12, 1
      %p55 = por %p53, %p54
      %p56 = scmp.ne.s32.totalorder %s48, %s51
      %p57 = scmp.eq.s32.totalorder %s12, 0
      %p58 = por %p56, %p57
      %p59 = scmp.ne.s32.totalorder %s48, %s51
      %p60 = scmp.eq.s32.totalorder %s17, 1
      %p61 = por %p59, %p60
      %p62 = scmp.ne.s32.totalorder %s51, %s52
      %p63 = scmp.eq.s32.totalorder %s17, 0
      %p64 = por %p62, %p63
      %p65 = scmp.ne.s32.totalorder %s51, %s52
      %p66 = scmp.eq.s32.totalorder %s18, 1
      %p67 = por %p65, %p66
      %p69 = scmp.ne.s32.totalorder %s52, %s68
      %p70 = scmp.eq.s32.totalorder %s18, 0
      %p71 = por %p69, %p70
      %s72 = ssub.s32 %s12, %s19
      %p73 = scmp.eq.s32.totalorder %s72, 0
      %s75 = sadd.s32 %s74, 1
      %s76 = scalar_select %p73, %s74, %s75
      %p79 = pneg %p73
      %p80 = scmp.eq.s32.totalorder %s12, 1
      %p81 = por %p79, %p80
      %p82 = scmp.ne.s32.totalorder %s74, %s77
      %p83 = scmp.eq.s32.totalorder %s12, 0
      %p84 = por %p82, %p83
      %p85 = scmp.ne.s32.totalorder %s74, %s77
      %p86 = scmp.eq.s32.totalorder %s17, 1
      %p87 = por %p85, %p86
      %p88 = scmp.ne.s32.totalorder %s77, %s78
      %p89 = scmp.eq.s32.totalorder %s17, 0
      %p90 = por %p88, %p89
      %p91 = scmp.ne.s32.totalorder %s77, %s78
      %p92 = scmp.eq.s32.totalorder %s18, 1
      %p93 = por %p91, %p92
      %p95 = scmp.ne.s32.totalorder %s78, %s94
      %p96 = scmp.eq.s32.totalorder %s18, 0
      %p97 = por %p95, %p96
      %s99 = sadd.s32 %s98, 1
      %p102 = scmp.eq.s32.totalorder %s12, 1
      %p103 = scmp.ne.s32.totalorder %s98, %s100
      %p104 = scmp.eq.s32.totalorder %s12, 0
      %p105 = por %p103, %p104
      %p106 = scmp.ne.s32.totalorder %s98, %s100
      %p107 = scmp.eq.s32.totalorder %s17, 1
      %p108 = por %p106, %p107
      %p109 = scmp.ne.s32.totalorder %s100, %s101
      %p110 = scmp.eq.s32.totalorder %s17, 0
      %p111 = por %p109, %p110
      %p112 = scmp.ne.s32.totalorder %s100, %s101
      %p113 = scmp.eq.s32.totalorder %s18, 1
      %p114 = por %p112, %p113
      %p116 = scmp.ne.s32.totalorder %s101, %s115
      %p117 = scmp.eq.s32.totalorder %s18, 0
      %p118 = por %p116, %p117
      %s120 = sadd.s32 %s119, 1
      %p123 = scmp.eq.s32.totalorder %s12, 1
      %p124 = scmp.ne.s32.totalorder %s119, %s121
      %p125 = scmp.eq.s32.totalorder %s12, 0
      %p126 = por %p124, %p125
      %p127 = scmp.ne.s32.totalorder %s119, %s121
      %p128 = scmp.eq.s32.totalorder %s17, 1
      %p129 = por %p127, %p128
      %p130 = scmp.ne.s32.totalorder %s121, %s122
      %p131 = scmp.eq.s32.totalorder %s17, 0
      %p132 = por %p130, %p131
      %p133 = scmp.ne.s32.totalorder %s121, %s122
      %p134 = scmp.eq.s32.totalorder %s18, 1
      %p135 = por %p133, %p134
      %p137 = scmp.ne.s32.totalorder %s122, %s136
      %p138 = scmp.eq.s32.totalorder %s18, 0
      %p139 = por %p137, %p138
      %s140 = ssub.s32 %s12, %s19
      %p141 = scmp.eq.s32.totalorder %s140, 0
      %s143 = sadd.s32 %s142, 1
      %s144 = scalar_select %p141, %s142, %s143
      %p147 = pneg %p141
      %p148 = scmp.eq.s32.totalorder %s12, 1
      %p149 = por %p147, %p148
      %p150 = scmp.ne.s32.totalorder %s142, %s145
      %p151 = scmp.eq.s32.totalorder %s12, 0
      %p152 = por %p150, %p151
      %p153 = scmp.ne.s32.totalorder %s142, %s145
      %p154 = scmp.eq.s32.totalorder %s17, 1
      %p155 = por %p153, %p154
      %p156 = scmp.ne.s32.totalorder %s145, %s146
      %p157 = scmp.eq.s32.totalorder %s17, 0
      %p158 = por %p156, %p157
      %p159 = scmp.ne.s32.totalorder %s145, %s146
      %p160 = scmp.eq.s32.totalorder %s18, 1
      %p161 = por %p159, %p160
      %p163 = scmp.ne.s32.totalorder %s146, %s162
      %p164 = scmp.eq.s32.totalorder %s18, 0
      %p165 = por %p163, %p164
      %p166 = scmp.le.s32.totalorder 1, %s12
      %p167 = scmp.lt.s32.totalorder %s12, 3
      %p168 = pnand %p166, %p167
      %p169 = pneg %p168
      // Predicated region
      $region9: #{tpu_custom_call.1} parent=5 // pred_check
        _
      $region10: #{tpu_custom_call.1} parent=5 // pred_check_branch
        %171 = sbr.rel (%p168) target = $region12
      $region11: #{tpu_custom_call.1} parent=5 // pred_region
        %s172 = ssub.s32 %s12, 1
        // Predicated region
        $region13: #{tpu_custom_call.1} parent=11 // pred_check
          %p173 = pneg %p111
        $region14: #{tpu_custom_call.1} parent=11 // pred_check_branch
          %175 = sbr.rel (%p173) target = $region16
        $region15: #{tpu_custom_call.1} parent=11 // pred_region
          _
        $region16: #{tpu_custom_call.1} parent=11 // pred_fallthru
          _
        // Predicated region
        $region17: #{tpu_custom_call.1} parent=11 // pred_check
          %p176 = pneg %p132
        $region18: #{tpu_custom_call.1} parent=11 // pred_check_branch
          %178 = sbr.rel (%p176) target = $region20
        $region19: #{tpu_custom_call.1} parent=11 // pred_region
          %180 = vsyncadd [#allocation3], 0
          %s182 = sshll.u32 %s4, 4
          %s183 = int_to_ptr.vmem [resolvable:$true] %s182
          %185 = dma.vmem_to_smem %s183, 16, [#allocation2], [#allocation3]
        $region20: #{tpu_custom_call.1} parent=11 // pred_fallthru
          _
      $region12: #{tpu_custom_call.1} parent=5 // pred_fallthru
        _
      %p186 = scmp.lt.s32.totalorder %s12, 2
      // Predicated region
      $region21: #{tpu_custom_call.1} parent=5 // pred_check
        %p187 = pneg %p186
      $region22: #{tpu_custom_call.1} parent=5 // pred_check_branch
        %189 = sbr.rel (%p187) target = $region24
      $region23: #{tpu_custom_call.1} parent=5 // pred_region
        // Predicated region
        $region25: #{tpu_custom_call.1} parent=23 // pred_check
          %p190 = pneg %p32
        $region26: #{tpu_custom_call.1} parent=23 // pred_check_branch
          %192 = sbr.rel (%p190) target = $region28
        $region27: #{tpu_custom_call.1} parent=23 // pred_region
          %s193 = smul.u32 16, %s12
          %p194 = scmp.lt.s32.totalorder %s193, 31
          %s195 = scalar_select %p194, %s193, 31
          %s196 = smul.addr %s195, 8
          %s197 = scalar_lea.vmem %s0, %s196
          %s198 = smul.u32 16, %s12
        $region28: #{tpu_custom_call.1} parent=23 // pred_fallthru
          _
        // Predicated region
        $region29: #{tpu_custom_call.1} parent=23 // pred_check
          %p199 = pneg %p58
        $region30: #{tpu_custom_call.1} parent=23 // pred_check_branch
          %201 = sbr.rel (%p199) target = $region32
        $region31: #{tpu_custom_call.1} parent=23 // pred_region
          %s202 = smul.u32 16, %s12
          %p203 = scmp.lt.s32.totalorder %s202, 31
          %s204 = scalar_select %p203, %s202, 31
          %s205 = smul.addr %s204, 8
          %s206 = scalar_lea.vmem %s1, %s205
          %s207 = smul.u32 16, %s12
        $region32: #{tpu_custom_call.1} parent=23 // pred_fallthru
          _
        // Predicated region
        $region33: #{tpu_custom_call.1} parent=23 // pred_check
          %p208 = pneg %p84
        $region34: #{tpu_custom_call.1} parent=23 // pred_check_branch
          %210 = sbr.rel (%p208) target = $region36
        $region35: #{tpu_custom_call.1} parent=23 // pred_region
          %s211 = smul.u32 16, %s12
          %p212 = scmp.lt.s32.totalorder %s211, 31
          %s213 = scalar_select %p212, %s211, 31
          %s214 = smul.addr %s213, 8
          %s215 = scalar_lea.vmem %s2, %s214
          %s216 = smul.u32 16, %s12
        $region36: #{tpu_custom_call.1} parent=23 // pred_fallthru
          _
      $region24: #{tpu_custom_call.1} parent=5 // pred_fallthru
        _
      %p217 = scmp.le.s32.totalorder 1, %s12
      %p218 = scmp.lt.s32.totalorder %s12, 3
      %p219 = pnand %p217, %p218
      %p220 = pneg %p219
      // Predicated region
      $region37: #{tpu_custom_call.1} parent=5 // pred_check
        _
      $region38: #{tpu_custom_call.1} parent=5 // pred_check_branch
        %222 = sbr.rel (%p219) target = $region40
      $region39: #{tpu_custom_call.1} parent=5 // pred_region
        %s223 = ssub.s32 %s12, 1
        // Predicated region
        $region41: #{tpu_custom_call.1} parent=39 // pred_check
          %p224 = pneg %p132
        $region42: #{tpu_custom_call.1} parent=39 // pred_check_branch
          %226 = sbr.rel (%p224) target = $region44
        $region43: #{tpu_custom_call.1} parent=39 // pred_region
          %228 = dma.done [#allocation3], 16
        $region44: #{tpu_custom_call.1} parent=39 // pred_fallthru
          _
        %229 = sfence
        %s230 = smul.u32 16, %s17
        %p231 = scmp.lt.s32.totalorder %s230, 31
        %s232 = scalar_select %p231, %s230, 31
        %s233 = smul.addr %s232, 8
        %s234 = scalar_lea.vmem %s0, %s233
        %p235 = pneg %p38
        %p236 = pneg %p35
        %s237 = smul.u32 16, %s17
        %p238 = scmp.lt.s32.totalorder %s237, 31
        %s239 = scalar_select %p238, %s237, 31
        %s240 = smul.addr %s239, 8
        %s241 = scalar_lea.vmem %s1, %s240
        %p242 = pneg %p64
        %p243 = pneg %p61
        %s244 = smul.u32 16, %s17
        %p245 = scmp.lt.s32.totalorder %s244, 31
        %s246 = scalar_select %p245, %s244, 31
        %s247 = smul.addr %s246, 8
        %s248 = scalar_lea.vmem %s2, %s247
        %p249 = pneg %p90
        %p250 = pneg %p87
        %p251 = pneg %p111
        %p252 = pneg %p108
        %p253 = pneg %p132
        %p254 = pneg %p129
        %p255 = pneg %p158
        %p256 = pneg %p155
        %s257 = smul.u32 16, %s17
        %p258 = scmp.lt.s32.totalorder %s257, 31
        %s259 = scalar_select %p258, %s257, 31
        %s260 = smul.addr %s259, 8
        %s261 = scalar_lea.vmem %s5, %s260
        %s262 = smul.u32 16, %s17
        %p263 = scmp.lt.s32.totalorder %s262, 31
        %s264 = scalar_select %p263, %s262, 31
        %s265 = smul.addr %s264, 8
        %s266 = scalar_lea.vmem %s0, %s265
        %s267 = smul.u32 16, %s17
        %s268 = smul.u32 16, %s17
        %p269 = scmp.lt.s32.totalorder %s268, 31
        %s270 = scalar_select %p269, %s268, 31
        %s271 = smul.addr %s270, 8
        %s272 = scalar_lea.vmem %s1, %s271
        %s273 = smul.u32 16, %s17
        %s274 = smul.u32 16, %s17
        %p275 = scmp.lt.s32.totalorder %s274, 31
        %s276 = scalar_select %p275, %s274, 31
        %s277 = smul.addr %s276, 8
        %s278 = scalar_lea.vmem %s2, %s277
        %s279 = smul.u32 16, %s17
        %s280 = smul.u32 16, %s17
        %p281 = scmp.lt.s32.totalorder %s280, 31
        %s282 = scalar_select %p281, %s280, 31
        %s283 = smul.addr %s282, 8
        %s284 = scalar_lea.vmem %s5, %s283
        %s285 = smul.u32 16, %s17
        %v286 = vld [vmem:[%s266] sm:$0xff]
        %v287 = vld [vmem:[%s266 + $0x8] sm:$0xff]
        %v288 = vld [vmem:[%s266 + $0x10] sm:$0xff]
        %v289 = vld [vmem:[%s266 + $0x18] sm:$0xff]
        %v290 = vld [vmem:[%s266 + $0x20] sm:$0xff]
        %v291 = vld [vmem:[%s266 + $0x28] sm:$0xff]
        %v292 = vld [vmem:[%s266 + $0x30] sm:$0xff]
        %v293 = vld [vmem:[%s266 + $0x38] sm:$0xff]
        %v294 = vld [vmem:[%s266 + $0x40] sm:$0xff]
        %v295 = vld [vmem:[%s266 + $0x48] sm:$0xff]
        %v296 = vld [vmem:[%s266 + $0x50] sm:$0xff]
        %v297 = vld [vmem:[%s266 + $0x58] sm:$0xff]
        %v298 = vld [vmem:[%s266 + $0x60] sm:$0xff]
        %v299 = vld [vmem:[%s266 + $0x68] sm:$0xff]
        %v300 = vld [vmem:[%s266 + $0x70] sm:$0xff]
        %v301 = vld [vmem:[%s266 + $0x78] sm:$0xff]
        %v302 = vld [vmem:[%s272] sm:$0xff]
        %v303 = vld [vmem:[%s272 + $0x8] sm:$0xff]
        %v304 = vld [vmem:[%s272 + $0x10] sm:$0xff]
        %v305 = vld [vmem:[%s272 + $0x18] sm:$0xff]
        %v306 = vld [vmem:[%s272 + $0x20] sm:$0xff]
        %v307 = vld [vmem:[%s272 + $0x28] sm:$0xff]
        %v308 = vld [vmem:[%s272 + $0x30] sm:$0xff]
        %v309 = vld [vmem:[%s272 + $0x38] sm:$0xff]
        %v310 = vld [vmem:[%s272 + $0x40] sm:$0xff]
        %v311 = vld [vmem:[%s272 + $0x48] sm:$0xff]
        %v312 = vld [vmem:[%s272 + $0x50] sm:$0xff]
        %v313 = vld [vmem:[%s272 + $0x58] sm:$0xff]
        %v314 = vld [vmem:[%s272 + $0x60] sm:$0xff]
        %v315 = vld [vmem:[%s272 + $0x68] sm:$0xff]
        %v316 = vld [vmem:[%s272 + $0x70] sm:$0xff]
        %v317 = vld [vmem:[%s272 + $0x78] sm:$0xff]
        %v318 = vld [vmem:[%s278] sm:$0xff]
        %v319 = vld [vmem:[%s278 + $0x8] sm:$0xff]
        %v320 = vld [vmem:[%s278 + $0x10] sm:$0xff]
        %v321 = vld [vmem:[%s278 + $0x18] sm:$0xff]
        %v322 = vld [vmem:[%s278 + $0x20] sm:$0xff]
        %v323 = vld [vmem:[%s278 + $0x28] sm:$0xff]
        %v324 = vld [vmem:[%s278 + $0x30] sm:$0xff]
        %v325 = vld [vmem:[%s278 + $0x38] sm:$0xff]
        %v326 = vld [vmem:[%s278 + $0x40] sm:$0xff]
        %v327 = vld [vmem:[%s278 + $0x48] sm:$0xff]
        %v328 = vld [vmem:[%s278 + $0x50] sm:$0xff]
        %v329 = vld [vmem:[%s278 + $0x58] sm:$0xff]
        %v330 = vld [vmem:[%s278 + $0x60] sm:$0xff]
        %v331 = vld [vmem:[%s278 + $0x68] sm:$0xff]
        %v332 = vld [vmem:[%s278 + $0x70] sm:$0xff]
        %v333 = vld [vmem:[%s278 + $0x78] sm:$0xff]
        %v334 = vld [vmem:[%s3] sm:$0xff]
        %v335 = vld [vmem:[%s3 + $0x8] sm:$0xff]
        %v336 = vld [vmem:[%s3 + $0x10] sm:$0xff]
        %v337 = vld [vmem:[%s3 + $0x18] sm:$0xff]
        %v338 = vld [vmem:[%s3 + $0x20] sm:$0xff]
        %v339 = vld [vmem:[%s3 + $0x28] sm:$0xff]
        %v340 = vld [vmem:[%s3 + $0x30] sm:$0xff]
        %v341 = vld [vmem:[%s3 + $0x38] sm:$0xff]
        %v342 = vld [vmem:[%s3 + $0x40] sm:$0xff]
        %v343 = vld [vmem:[%s3 + $0x48] sm:$0xff]
        %v344 = vld [vmem:[%s3 + $0x50] sm:$0xff]
        %v345 = vld [vmem:[%s3 + $0x58] sm:$0xff]
        %vm346 = vcmask 261120
        %v348 = vsel %vm346, %v302, 0
        %v351 = vsel %vm346, %v303, 0
        %v354 = vsel %vm346, %v304, 0
        %v357 = vsel %vm346, %v305, 0
        %v360 = vsel %vm346, %v306, 0
        %v363 = vsel %vm346, %v307, 0
        %v366 = vsel %vm346, %v308, 0
        %v369 = vsel %vm346, %v309, 0
        %v372 = vsel %vm346, %v310, 0
        %v375 = vsel %vm346, %v311, 0
        %v378 = vsel %vm346, %v312, 0
        %v381 = vsel %vm346, %v313, 0
        %v384 = vsel %vm346, %v314, 0
        %v387 = vsel %vm346, %v315, 0
        %v390 = vsel %vm346, %v316, 0
        %v393 = vsel %vm346, %v317, 0
        %395 = vmatpush.msra.mxu0 0.0
        %396 = vmatpush.msra.mxu0 0.0
        %397 = vmatpush.msra.mxu0 0.0
        %398 = vmatpush.msra.mxu0 0.0
        %399 = vmatpush.msra.mxu0 0.0
        %400 = vmatpush.msra.mxu0 0.0
        %401 = vmatpush.msra.mxu0 0.0
        %402 = vmatpush.msra.mxu0 0.0
        %403 = vmatpush.msra.mxu0 0.0
        %404 = vmatpush.msra.mxu0 0.0
        %405 = vmatpush.msra.mxu0 0.0
        %406 = vmatpush.msra.mxu0 0.0
        %v407 = vand.u32 %v341, 4294901760
        %408 = vmatpush.msra.mxu0 %v407
        %v409 = vand.u32 %v340, 4294901760
        %410 = vmatpush.msra.mxu0 %v409
        %v411 = vand.u32 %v339, 4294901760
        %412 = vmatpush.msra.mxu0 %v411
        %v413 = vand.u32 %v338, 4294901760
        %414 = vmatpush.msra.mxu0 %v413
        %v415 = vand.u32 %v348, 4294901760
        %v416 = vsub.f32 %v348, %v415
        %v417 = vand.u32 %v416, 4294901760
        %v418 = vsub.f32 %v416, %v417
        %v419 = vand.u32 %v418, 4294901760
        %420 = vmatmul.f32.gmra.mxu0 %v419
        %v421 = vpop.f32.mrf.mxu0
        %v422 = vadd.f32 0.0, %v421
        %v423 = vand.u32 %v351, 4294901760
        %v424 = vsub.f32 %v351, %v423
        %v425 = vand.u32 %v424, 4294901760
        %v426 = vsub.f32 %v424, %v425
        %v427 = vand.u32 %v426, 4294901760
        %428 = vmatmul.f32.gmra.mxu0 %v427
        %v429 = vpop.f32.mrf.mxu0
        %v430 = vadd.f32 0.0, %v429
        %v431 = vand.u32 %v354, 4294901760
        %v432 = vsub.f32 %v354, %v431
        %v433 = vand.u32 %v432, 4294901760
        %v434 = vsub.f32 %v432, %v433
        %v435 = vand.u32 %v434, 4294901760
        %436 = vmatmul.f32.gmra.mxu0 %v435
        %v437 = vpop.f32.mrf.mxu0
        %v438 = vadd.f32 0.0, %v437
        %v439 = vand.u32 %v357, 4294901760
        %v440 = vsub.f32 %v357, %v439
        %v441 = vand.u32 %v440, 4294901760
        %v442 = vsub.f32 %v440, %v441
        %v443 = vand.u32 %v442, 4294901760
        %444 = vmatmul.f32.gmra.mxu0 %v443
        %v445 = vpop.f32.mrf.mxu0
        %v446 = vadd.f32 0.0, %v445
        %v447 = vand.u32 %v360, 4294901760
        %v448 = vsub.f32 %v360, %v447
        %v449 = vand.u32 %v448, 4294901760
        %v450 = vsub.f32 %v448, %v449
        %v451 = vand.u32 %v450, 4294901760
        %452 = vmatmul.f32.gmra.mxu0 %v451
        %v453 = vpop.f32.mrf.mxu0
        %v454 = vadd.f32 0.0, %v453
        %v455 = vand.u32 %v363, 4294901760
        %v456 = vsub.f32 %v363, %v455
        %v457 = vand.u32 %v456, 4294901760
        %v458 = vsub.f32 %v456, %v457
        %v459 = vand.u32 %v458, 4294901760
        %460 = vmatmul.f32.gmra.mxu0 %v459
        %v461 = vpop.f32.mrf.mxu0
        %v462 = vadd.f32 0.0, %v461
        %v463 = vand.u32 %v366, 4294901760
        %v464 = vsub.f32 %v366, %v463
        %v465 = vand.u32 %v464, 4294901760
        %v466 = vsub.f32 %v464, %v465
        %v467 = vand.u32 %v466, 4294901760
        %468 = vmatmul.f32.gmra.mxu0 %v467
        %v469 = vpop.f32.mrf.mxu0
        %v470 = vadd.f32 0.0, %v469
        %v471 = vand.u32 %v369, 4294901760
        %v472 = vsub.f32 %v369, %v471
        %v473 = vand.u32 %v472, 4294901760
        %v474 = vsub.f32 %v472, %v473
        %v475 = vand.u32 %v474, 4294901760
        %476 = vmatmul.f32.gmra.mxu0 %v475
        %v477 = vpop.f32.mrf.mxu0
        %v478 = vadd.f32 0.0, %v477
        %v479 = vand.u32 %v372, 4294901760
        %v480 = vsub.f32 %v372, %v479
        %v481 = vand.u32 %v480, 4294901760
        %v482 = vsub.f32 %v480, %v481
        %v483 = vand.u32 %v482, 4294901760
        %484 = vmatmul.f32.gmra.mxu0 %v483
        %v485 = vpop.f32.mrf.mxu0
        %v486 = vadd.f32 0.0, %v485
        %v487 = vand.u32 %v375, 4294901760
        %v488 = vsub.f32 %v375, %v487
        %v489 = vand.u32 %v488, 4294901760
        %v490 = vsub.f32 %v488, %v489
        %v491 = vand.u32 %v490, 4294901760
        %492 = vmatmul.f32.gmra.mxu0 %v491
        %v493 = vpop.f32.mrf.mxu0
        %v494 = vadd.f32 0.0, %v493
        %v495 = vand.u32 %v378, 4294901760
        %v496 = vsub.f32 %v378, %v495
        %v497 = vand.u32 %v496, 4294901760
        %v498 = vsub.f32 %v496, %v497
        %v499 = vand.u32 %v498, 4294901760
        %500 = vmatmul.f32.gmra.mxu0 %v499
        %v501 = vpop.f32.mrf.mxu0
        %v502 = vadd.f32 0.0, %v501
        %v503 = vand.u32 %v381, 4294901760
        %v504 = vsub.f32 %v381, %v503
        %v505 = vand.u32 %v504, 4294901760
        %v506 = vsub.f32 %v504, %v505
        %v507 = vand.u32 %v506, 4294901760
        %508 = vmatmul.f32.gmra.mxu0 %v507
        %v509 = vpop.f32.mrf.mxu0
        %v510 = vadd.f32 0.0, %v509
        %v511 = vand.u32 %v384, 4294901760
        %v512 = vsub.f32 %v384, %v511
        %v513 = vand.u32 %v512, 4294901760
        %v514 = vsub.f32 %v512, %v513
        %v515 = vand.u32 %v514, 4294901760
        %516 = vmatmul.f32.gmra.mxu0 %v515
        %v517 = vpop.f32.mrf.mxu0
        %v518 = vadd.f32 0.0, %v517
        %v519 = vand.u32 %v387, 4294901760
        %v520 = vsub.f32 %v387, %v519
        %v521 = vand.u32 %v520, 4294901760
        %v522 = vsub.f32 %v520, %v521
        %v523 = vand.u32 %v522, 4294901760
        %524 = vmatmul.f32.gmra.mxu0 %v523
        %v525 = vpop.f32.mrf.mxu0
        %v526 = vadd.f32 0.0, %v525
        %v527 = vand.u32 %v390, 4294901760
        %v528 = vsub.f32 %v390, %v527
        %v529 = vand.u32 %v528, 4294901760
        %v530 = vsub.f32 %v528, %v529
        %v531 = vand.u32 %v530, 4294901760
        %532 = vmatmul.f32.gmra.mxu0 %v531
        %v533 = vpop.f32.mrf.mxu0
        %v534 = vadd.f32 0.0, %v533
        %v535 = vand.u32 %v393, 4294901760
        %v536 = vsub.f32 %v393, %v535
        %v537 = vand.u32 %v536, 4294901760
        %v538 = vsub.f32 %v536, %v537
        %v539 = vand.u32 %v538, 4294901760
        %540 = vmatmul.f32.gmra.mxu0 %v539
        %v541 = vpop.f32.mrf.mxu0
        %v542 = vadd.f32 0.0, %v541
        %543 = vdwg.mxu0
        %544 = vmatpush.msra.mxu0 0.0
        %545 = vmatpush.msra.mxu0 0.0
        %546 = vmatpush.msra.mxu0 0.0
        %547 = vmatpush.msra.mxu0 0.0
        %548 = vmatpush.msra.mxu0 0.0
        %549 = vmatpush.msra.mxu0 0.0
        %550 = vmatpush.msra.mxu0 0.0
        %551 = vmatpush.msra.mxu0 0.0
        %552 = vmatpush.msra.mxu0 0.0
        %553 = vmatpush.msra.mxu0 0.0
        %554 = vmatpush.msra.mxu0 0.0
        %555 = vmatpush.msra.mxu0 0.0
        %v556 = vand.u32 %v341, 4294901760
        %v557 = vsub.f32 %v341, %v556
        %v558 = vand.u32 %v557, 4294901760
        %v559 = vsub.f32 %v557, %v558
        %v560 = vand.u32 %v559, 4294901760
        %561 = vmatpush.msra.mxu0 %v560
        %v562 = vand.u32 %v340, 4294901760
        %v563 = vsub.f32 %v340, %v562
        %v564 = vand.u32 %v563, 4294901760
        %v565 = vsub.f32 %v563, %v564
        %v566 = vand.u32 %v565, 4294901760
        %567 = vmatpush.msra.mxu0 %v566
        %v568 = vand.u32 %v339, 4294901760
        %v569 = vsub.f32 %v339, %v568
        %v570 = vand.u32 %v569, 4294901760
        %v571 = vsub.f32 %v569, %v570
        %v572 = vand.u32 %v571, 4294901760
        %573 = vmatpush.msra.mxu0 %v572
        %v574 = vand.u32 %v338, 4294901760
        %v575 = vsub.f32 %v338, %v574
        %v576 = vand.u32 %v575, 4294901760
        %v577 = vsub.f32 %v575, %v576
        %v578 = vand.u32 %v577, 4294901760
        %579 = vmatpush.msra.mxu0 %v578
        %v580 = vand.u32 %v348, 4294901760
        %581 = vmatmul.f32.gmra.mxu0 %v580
        %v582 = vpop.f32.mrf.mxu0
        %v583 = vadd.f32 %v422, %v582
        %v584 = vand.u32 %v351, 4294901760
        %585 = vmatmul.f32.gmra.mxu0 %v584
        %v586 = vpop.f32.mrf.mxu0
        %v587 = vadd.f32 %v430, %v586
        %v588 = vand.u32 %v354, 4294901760
        %589 = vmatmul.f32.gmra.mxu0 %v588
        %v590 = vpop.f32.mrf.mxu0
        %v591 = vadd.f32 %v438, %v590
        %v592 = vand.u32 %v357, 4294901760
        %593 = vmatmul.f32.gmra.mxu0 %v592
        %v594 = vpop.f32.mrf.mxu0
        %v595 = vadd.f32 %v446, %v594
        %v596 = vand.u32 %v360, 4294901760
        %597 = vmatmul.f32.gmra.mxu0 %v596
        %v598 = vpop.f32.mrf.mxu0
        %v599 = vadd.f32 %v454, %v598
        %v600 = vand.u32 %v363, 4294901760
        %601 = vmatmul.f32.gmra.mxu0 %v600
        %v602 = vpop.f32.mrf.mxu0
        %v603 = vadd.f32 %v462, %v602
        %v604 = vand.u32 %v366, 4294901760
        %605 = vmatmul.f32.gmra.mxu0 %v604
        %v606 = vpop.f32.mrf.mxu0
        %v607 = vadd.f32 %v470, %v606
        %v608 = vand.u32 %v369, 4294901760
        %609 = vmatmul.f32.gmra.mxu0 %v608
        %v610 = vpop.f32.mrf.mxu0
        %v611 = vadd.f32 %v478, %v610
        %v612 = vand.u32 %v372, 4294901760
        %613 = vmatmul.f32.gmra.mxu0 %v612
        %v614 = vpop.f32.mrf.mxu0
        %v615 = vadd.f32 %v486, %v614
        %v616 = vand.u32 %v375, 4294901760
        %617 = vmatmul.f32.gmra.mxu0 %v616
        %v618 = vpop.f32.mrf.mxu0
        %v619 = vadd.f32 %v494, %v618
        %v620 = vand.u32 %v378, 4294901760
        %621 = vmatmul.f32.gmra.mxu0 %v620
        %v622 = vpop.f32.mrf.mxu0
        %v623 = vadd.f32 %v502, %v622
        %v624 = vand.u32 %v381, 4294901760
        %625 = vmatmul.f32.gmra.mxu0 %v624
        %v626 = vpop.f32.mrf.mxu0
        %v627 = vadd.f32 %v510, %v626
        %v628 = vand.u32 %v384, 4294901760
        %629 = vmatmul.f32.gmra.mxu0 %v628
        %v630 = vpop.f32.mrf.mxu0
        %v631 = vadd.f32 %v518, %v630
        %v632 = vand.u32 %v387, 4294901760
        %633 = vmatmul.f32.gmra.mxu0 %v632
        %v634 = vpop.f32.mrf.mxu0
        %v635 = vadd.f32 %v526, %v634
        %v636 = vand.u32 %v390, 4294901760
        %637 = vmatmul.f32.gmra.mxu0 %v636
        %v638 = vpop.f32.mrf.mxu0
        %v639 = vadd.f32 %v534, %v638
        %v640 = vand.u32 %v393, 4294901760
        %641 = vmatmul.f32.gmra.mxu0 %v640
        %v642 = vpop.f32.mrf.mxu0
        %v643 = vadd.f32 %v542, %v642
        %644 = vdwg.mxu0
        %645 = vmatpush.msra.mxu0 0.0
        %646 = vmatpush.msra.mxu0 0.0
        %647 = vmatpush.msra.mxu0 0.0
        %648 = vmatpush.msra.mxu0 0.0
        %649 = vmatpush.msra.mxu0 0.0
        %650 = vmatpush.msra.mxu0 0.0
        %651 = vmatpush.msra.mxu0 0.0
        %652 = vmatpush.msra.mxu0 0.0
        %653 = vmatpush.msra.mxu0 0.0
        %654 = vmatpush.msra.mxu0 0.0
        %655 = vmatpush.msra.mxu0 0.0
        %656 = vmatpush.msra.mxu0 0.0
        %v657 = vand.u32 %v341, 4294901760
        %v658 = vsub.f32 %v341, %v657
        %659 = vmatpush.msra.mxu0 %v658
        %v660 = vand.u32 %v340, 4294901760
        %v661 = vsub.f32 %v340, %v660
        %662 = vmatpush.msra.mxu0 %v661
        %v663 = vand.u32 %v339, 4294901760
        %v664 = vsub.f32 %v339, %v663
        %665 = vmatpush.msra.mxu0 %v664
        %v666 = vand.u32 %v338, 4294901760
        %v667 = vsub.f32 %v338, %v666
        %668 = vmatpush.msra.mxu0 %v667
        %v669 = vand.u32 %v348, 4294901760
        %v670 = vsub.f32 %v348, %v669
        %671 = vmatmul.f32.gmra.mxu0 %v670
        %v672 = vpop.f32.mrf.mxu0
        %v673 = vadd.f32 %v583, %v672
        %v674 = vand.u32 %v351, 4294901760
        %v675 = vsub.f32 %v351, %v674
        %676 = vmatmul.f32.gmra.mxu0 %v675
        %v677 = vpop.f32.mrf.mxu0
        %v678 = vadd.f32 %v587, %v677
        %v679 = vand.u32 %v354, 4294901760
        %v680 = vsub.f32 %v354, %v679
        %681 = vmatmul.f32.gmra.mxu0 %v680
        %v682 = vpop.f32.mrf.mxu0
        %v683 = vadd.f32 %v591, %v682
        %v684 = vand.u32 %v357, 4294901760
        %v685 = vsub.f32 %v357, %v684
        %686 = vmatmul.f32.gmra.mxu0 %v685
        %v687 = vpop.f32.mrf.mxu0
        %v688 = vadd.f32 %v595, %v687
        %v689 = vand.u32 %v360, 4294901760
        %v690 = vsub.f32 %v360, %v689
        %691 = vmatmul.f32.gmra.mxu0 %v690
        %v692 = vpop.f32.mrf.mxu0
        %v693 = vadd.f32 %v599, %v692
        %v694 = vand.u32 %v363, 4294901760
        %v695 = vsub.f32 %v363, %v694
        %696 = vmatmul.f32.gmra.mxu0 %v695
        %v697 = vpop.f32.mrf.mxu0
        %v698 = vadd.f32 %v603, %v697
        %v699 = vand.u32 %v366, 4294901760
        %v700 = vsub.f32 %v366, %v699
        %701 = vmatmul.f32.gmra.mxu0 %v700
        %v702 = vpop.f32.mrf.mxu0
        %v703 = vadd.f32 %v607, %v702
        %v704 = vand.u32 %v369, 4294901760
        %v705 = vsub.f32 %v369, %v704
        %706 = vmatmul.f32.gmra.mxu0 %v705
        %v707 = vpop.f32.mrf.mxu0
        %v708 = vadd.f32 %v611, %v707
        %v709 = vand.u32 %v372, 4294901760
        %v710 = vsub.f32 %v372, %v709
        %711 = vmatmul.f32.gmra.mxu0 %v710
        %v712 = vpop.f32.mrf.mxu0
        %v713 = vadd.f32 %v615, %v712
        %v714 = vand.u32 %v375, 4294901760
        %v715 = vsub.f32 %v375, %v714
        %716 = vmatmul.f32.gmra.mxu0 %v715
        %v717 = vpop.f32.mrf.mxu0
        %v718 = vadd.f32 %v619, %v717
        %v719 = vand.u32 %v378, 4294901760
        %v720 = vsub.f32 %v378, %v719
        %721 = vmatmul.f32.gmra.mxu0 %v720
        %v722 = vpop.f32.mrf.mxu0
        %v723 = vadd.f32 %v623, %v722
        %v724 = vand.u32 %v381, 4294901760
        %v725 = vsub.f32 %v381, %v724
        %726 = vmatmul.f32.gmra.mxu0 %v725
        %v727 = vpop.f32.mrf.mxu0
        %v728 = vadd.f32 %v627, %v727
        %v729 = vand.u32 %v384, 4294901760
        %v730 = vsub.f32 %v384, %v729
        %731 = vmatmul.f32.gmra.mxu0 %v730
        %v732 = vpop.f32.mrf.mxu0
        %v733 = vadd.f32 %v631, %v732
        %v734 = vand.u32 %v387, 4294901760
        %v735 = vsub.f32 %v387, %v734
        %736 = vmatmul.f32.gmra.mxu0 %v735
        %v737 = vpop.f32.mrf.mxu0
        %v738 = vadd.f32 %v635, %v737
        %v739 = vand.u32 %v390, 4294901760
        %v740 = vsub.f32 %v390, %v739
        %741 = vmatmul.f32.gmra.mxu0 %v740
        %v742 = vpop.f32.mrf.mxu0
        %v743 = vadd.f32 %v639, %v742
        %v744 = vand.u32 %v393, 4294901760
        %v745 = vsub.f32 %v393, %v744
        %746 = vmatmul.f32.gmra.mxu0 %v745
        %v747 = vpop.f32.mrf.mxu0
        %v748 = vadd.f32 %v643, %v747
        %749 = vdwg.mxu0
        %750 = vmatpush.msra.mxu0 0.0
        %751 = vmatpush.msra.mxu0 0.0
        %752 = vmatpush.msra.mxu0 0.0
        %753 = vmatpush.msra.mxu0 0.0
        %754 = vmatpush.msra.mxu0 0.0
        %755 = vmatpush.msra.mxu0 0.0
        %756 = vmatpush.msra.mxu0 0.0
        %757 = vmatpush.msra.mxu0 0.0
        %758 = vmatpush.msra.mxu0 0.0
        %759 = vmatpush.msra.mxu0 0.0
        %760 = vmatpush.msra.mxu0 0.0
        %761 = vmatpush.msra.mxu0 0.0
        %v762 = vand.u32 %v341, 4294901760
        %763 = vmatpush.msra.mxu0 %v762
        %v764 = vand.u32 %v340, 4294901760
        %765 = vmatpush.msra.mxu0 %v764
        %v766 = vand.u32 %v339, 4294901760
        %767 = vmatpush.msra.mxu0 %v766
        %v768 = vand.u32 %v338, 4294901760
        %769 = vmatpush.msra.mxu0 %v768
        %v770 = vand.u32 %v348, 4294901760
        %v771 = vsub.f32 %v348, %v770
        %v772 = vand.u32 %v771, 4294901760
        %773 = vmatmul.f32.gmra.mxu0 %v772
        %v774 = vpop.f32.mrf.mxu0
        %v775 = vadd.f32 %v673, %v774
        %v776 = vand.u32 %v351, 4294901760
        %v777 = vsub.f32 %v351, %v776
        %v778 = vand.u32 %v777, 4294901760
        %779 = vmatmul.f32.gmra.mxu0 %v778
        %v780 = vpop.f32.mrf.mxu0
        %v781 = vadd.f32 %v678, %v780
        %v782 = vand.u32 %v354, 4294901760
        %v783 = vsub.f32 %v354, %v782
        %v784 = vand.u32 %v783, 4294901760
        %785 = vmatmul.f32.gmra.mxu0 %v784
        %v786 = vpop.f32.mrf.mxu0
        %v787 = vadd.f32 %v683, %v786
        %v788 = vand.u32 %v357, 4294901760
        %v789 = vsub.f32 %v357, %v788
        %v790 = vand.u32 %v789, 4294901760
        %791 = vmatmul.f32.gmra.mxu0 %v790
        %v792 = vpop.f32.mrf.mxu0
        %v793 = vadd.f32 %v688, %v792
        %v794 = vand.u32 %v360, 4294901760
        %v795 = vsub.f32 %v360, %v794
        %v796 = vand.u32 %v795, 4294901760
        %797 = vmatmul.f32.gmra.mxu0 %v796
        %v798 = vpop.f32.mrf.mxu0
        %v799 = vadd.f32 %v693, %v798
        %v800 = vand.u32 %v363, 4294901760
        %v801 = vsub.f32 %v363, %v800
        %v802 = vand.u32 %v801, 4294901760
        %803 = vmatmul.f32.gmra.mxu0 %v802
        %v804 = vpop.f32.mrf.mxu0
        %v805 = vadd.f32 %v698, %v804
        %v806 = vand.u32 %v366, 4294901760
        %v807 = vsub.f32 %v366, %v806
        %v808 = vand.u32 %v807, 4294901760
        %809 = vmatmul.f32.gmra.mxu0 %v808
        %v810 = vpop.f32.mrf.mxu0
        %v811 = vadd.f32 %v703, %v810
        %v812 = vand.u32 %v369, 4294901760
        %v813 = vsub.f32 %v369, %v812
        %v814 = vand.u32 %v813, 4294901760
        %815 = vmatmul.f32.gmra.mxu0 %v814
        %v816 = vpop.f32.mrf.mxu0
        %v817 = vadd.f32 %v708, %v816
        %v818 = vand.u32 %v372, 4294901760
        %v819 = vsub.f32 %v372, %v818
        %v820 = vand.u32 %v819, 4294901760
        %821 = vmatmul.f32.gmra.mxu0 %v820
        %v822 = vpop.f32.mrf.mxu0
        %v823 = vadd.f32 %v713, %v822
        %v824 = vand.u32 %v375, 4294901760
        %v825 = vsub.f32 %v375, %v824
        %v826 = vand.u32 %v825, 4294901760
        %827 = vmatmul.f32.gmra.mxu0 %v826
        %v828 = vpop.f32.mrf.mxu0
        %v829 = vadd.f32 %v718, %v828
        %v830 = vand.u32 %v378, 4294901760
        %v831 = vsub.f32 %v378, %v830
        %v832 = vand.u32 %v831, 4294901760
        %833 = vmatmul.f32.gmra.mxu0 %v832
        %v834 = vpop.f32.mrf.mxu0
        %v835 = vadd.f32 %v723, %v834
        %v836 = vand.u32 %v381, 4294901760
        %v837 = vsub.f32 %v381, %v836
        %v838 = vand.u32 %v837, 4294901760
        %839 = vmatmul.f32.gmra.mxu0 %v838
        %v840 = vpop.f32.mrf.mxu0
        %v841 = vadd.f32 %v728, %v840
        %v842 = vand.u32 %v384, 4294901760
        %v843 = vsub.f32 %v384, %v842
        %v844 = vand.u32 %v843, 4294901760
        %845 = vmatmul.f32.gmra.mxu0 %v844
        %v846 = vpop.f32.mrf.mxu0
        %v847 = vadd.f32 %v733, %v846
        %v848 = vand.u32 %v387, 4294901760
        %v849 = vsub.f32 %v387, %v848
        %v850 = vand.u32 %v849, 4294901760
        %851 = vmatmul.f32.gmra.mxu0 %v850
        %v852 = vpop.f32.mrf.mxu0
        %v853 = vadd.f32 %v738, %v852
        %v854 = vand.u32 %v390, 4294901760
        %v855 = vsub.f32 %v390, %v854
        %v856 = vand.u32 %v855, 4294901760
        %857 = vmatmul.f32.gmra.mxu0 %v856
        %v858 = vpop.f32.mrf.mxu0
        %v859 = vadd.f32 %v743, %v858
        %v860 = vand.u32 %v393, 4294901760
        %v861 = vsub.f32 %v393, %v860
        %v862 = vand.u32 %v861, 4294901760
        %863 = vmatmul.f32.gmra.mxu0 %v862
        %v864 = vpop.f32.mrf.mxu0
        %v865 = vadd.f32 %v748, %v864
        %866 = vdwg.mxu0
        %867 = vmatpush.msra.mxu0 0.0
        %868 = vmatpush.msra.mxu0 0.0
        %869 = vmatpush.msra.mxu0 0.0
        %870 = vmatpush.msra.mxu0 0.0
        %871 = vmatpush.msra.mxu0 0.0
        %872 = vmatpush.msra.mxu0 0.0
        %873 = vmatpush.msra.mxu0 0.0
        %874 = vmatpush.msra.mxu0 0.0
        %875 = vmatpush.msra.mxu0 0.0
        %876 = vmatpush.msra.mxu0 0.0
        %877 = vmatpush.msra.mxu0 0.0
        %878 = vmatpush.msra.mxu0 0.0
        %v879 = vand.u32 %v341, 4294901760
        %v880 = vsub.f32 %v341, %v879
        %v881 = vand.u32 %v880, 4294901760
        %882 = vmatpush.msra.mxu0 %v881
        %v883 = vand.u32 %v340, 4294901760
        %v884 = vsub.f32 %v340, %v883
        %v885 = vand.u32 %v884, 4294901760
        %886 = vmatpush.msra.mxu0 %v885
        %v887 = vand.u32 %v339, 4294901760
        %v888 = vsub.f32 %v339, %v887
        %v889 = vand.u32 %v888, 4294901760
        %890 = vmatpush.msra.mxu0 %v889
        %v891 = vand.u32 %v338, 4294901760
        %v892 = vsub.f32 %v338, %v891
        %v893 = vand.u32 %v892, 4294901760
        %894 = vmatpush.msra.mxu0 %v893
        %v895 = vand.u32 %v348, 4294901760
        %896 = vmatmul.f32.gmra.mxu0 %v895
        %v897 = vpop.f32.mrf.mxu0
        %v898 = vadd.f32 %v775, %v897
        %v899 = vand.u32 %v351, 4294901760
        %900 = vmatmul.f32.gmra.mxu0 %v899
        %v901 = vpop.f32.mrf.mxu0
        %v902 = vadd.f32 %v781, %v901
        %v903 = vand.u32 %v354, 4294901760
        %904 = vmatmul.f32.gmra.mxu0 %v903
        %v905 = vpop.f32.mrf.mxu0
        %v906 = vadd.f32 %v787, %v905
        %v907 = vand.u32 %v357, 4294901760
        %908 = vmatmul.f32.gmra.mxu0 %v907
        %v909 = vpop.f32.mrf.mxu0
        %v910 = vadd.f32 %v793, %v909
        %v911 = vand.u32 %v360, 4294901760
        %912 = vmatmul.f32.gmra.mxu0 %v911
        %v913 = vpop.f32.mrf.mxu0
        %v914 = vadd.f32 %v799, %v913
        %v915 = vand.u32 %v363, 4294901760
        %916 = vmatmul.f32.gmra.mxu0 %v915
        %v917 = vpop.f32.mrf.mxu0
        %v918 = vadd.f32 %v805, %v917
        %v919 = vand.u32 %v366, 4294901760
        %920 = vmatmul.f32.gmra.mxu0 %v919
        %v921 = vpop.f32.mrf.mxu0
        %v922 = vadd.f32 %v811, %v921
        %v923 = vand.u32 %v369, 4294901760
        %924 = vmatmul.f32.gmra.mxu0 %v923
        %v925 = vpop.f32.mrf.mxu0
        %v926 = vadd.f32 %v817, %v925
        %v927 = vand.u32 %v372, 4294901760
        %928 = vmatmul.f32.gmra.mxu0 %v927
        %v929 = vpop.f32.mrf.mxu0
        %v930 = vadd.f32 %v823, %v929
        %v931 = vand.u32 %v375, 4294901760
        %932 = vmatmul.f32.gmra.mxu0 %v931
        %v933 = vpop.f32.mrf.mxu0
        %v934 = vadd.f32 %v829, %v933
        %v935 = vand.u32 %v378, 4294901760
        %936 = vmatmul.f32.gmra.mxu0 %v935
        %v937 = vpop.f32.mrf.mxu0
        %v938 = vadd.f32 %v835, %v937
        %v939 = vand.u32 %v381, 4294901760
        %940 = vmatmul.f32.gmra.mxu0 %v939
        %v941 = vpop.f32.mrf.mxu0
        %v942 = vadd.f32 %v841, %v941
        %v943 = vand.u32 %v384, 4294901760
        %944 = vmatmul.f32.gmra.mxu0 %v943
        %v945 = vpop.f32.mrf.mxu0
        %v946 = vadd.f32 %v847, %v945
        %v947 = vand.u32 %v387, 4294901760
        %948 = vmatmul.f32.gmra.mxu0 %v947
        %v949 = vpop.f32.mrf.mxu0
        %v950 = vadd.f32 %v853, %v949
        %v951 = vand.u32 %v390, 4294901760
        %952 = vmatmul.f32.gmra.mxu0 %v951
        %v953 = vpop.f32.mrf.mxu0
        %v954 = vadd.f32 %v859, %v953
        %v955 = vand.u32 %v393, 4294901760
        %956 = vmatmul.f32.gmra.mxu0 %v955
        %v957 = vpop.f32.mrf.mxu0
        %v958 = vadd.f32 %v865, %v957
        %959 = vdwg.mxu0
        %960 = vmatpush.msra.mxu0 0.0
        %961 = vmatpush.msra.mxu0 0.0
        %962 = vmatpush.msra.mxu0 0.0
        %963 = vmatpush.msra.mxu0 0.0
        %964 = vmatpush.msra.mxu0 0.0
        %965 = vmatpush.msra.mxu0 0.0
        %966 = vmatpush.msra.mxu0 0.0
        %967 = vmatpush.msra.mxu0 0.0
        %968 = vmatpush.msra.mxu0 0.0
        %969 = vmatpush.msra.mxu0 0.0
        %970 = vmatpush.msra.mxu0 0.0
        %971 = vmatpush.msra.mxu0 0.0
        %v972 = vand.u32 %v341, 4294901760
        %973 = vmatpush.msra.mxu0 %v972
        %v974 = vand.u32 %v340, 4294901760
        %975 = vmatpush.msra.mxu0 %v974
        %v976 = vand.u32 %v339, 4294901760
        %977 = vmatpush.msra.mxu0 %v976
        %v978 = vand.u32 %v338, 4294901760
        %979 = vmatpush.msra.mxu0 %v978
        %v980 = vand.u32 %v348, 4294901760
        %981 = vmatmul.f32.gmra.mxu0 %v980
        %v982 = vpop.f32.mrf.mxu0
        %v983 = vadd.f32 %v898, %v982
        %v984 = vand.u32 %v351, 4294901760
        %985 = vmatmul.f32.gmra.mxu0 %v984
        %v986 = vpop.f32.mrf.mxu0
        %v987 = vadd.f32 %v902, %v986
        %v988 = vand.u32 %v354, 4294901760
        %989 = vmatmul.f32.gmra.mxu0 %v988
        %v990 = vpop.f32.mrf.mxu0
        %v991 = vadd.f32 %v906, %v990
        %v992 = vand.u32 %v357, 4294901760
        %993 = vmatmul.f32.gmra.mxu0 %v992
        %v994 = vpop.f32.mrf.mxu0
        %v995 = vadd.f32 %v910, %v994
        %v996 = vand.u32 %v360, 4294901760
        %997 = vmatmul.f32.gmra.mxu0 %v996
        %v998 = vpop.f32.mrf.mxu0
        %v999 = vadd.f32 %v914, %v998
        %v1000 = vand.u32 %v363, 4294901760
        %1001 = vmatmul.f32.gmra.mxu0 %v1000
        %v1002 = vpop.f32.mrf.mxu0
        %v1003 = vadd.f32 %v918, %v1002
        %v1004 = vand.u32 %v366, 4294901760
        %1005 = vmatmul.f32.gmra.mxu0 %v1004
        %v1006 = vpop.f32.mrf.mxu0
        %v1007 = vadd.f32 %v922, %v1006
        %v1008 = vand.u32 %v369, 4294901760
        %1009 = vmatmul.f32.gmra.mxu0 %v1008
        %v1010 = vpop.f32.mrf.mxu0
        %v1011 = vadd.f32 %v926, %v1010
        %v1012 = vand.u32 %v372, 4294901760
        %1013 = vmatmul.f32.gmra.mxu0 %v1012
        %v1014 = vpop.f32.mrf.mxu0
        %v1015 = vadd.f32 %v930, %v1014
        %v1016 = vand.u32 %v375, 4294901760
        %1017 = vmatmul.f32.gmra.mxu0 %v1016
        %v1018 = vpop.f32.mrf.mxu0
        %v1019 = vadd.f32 %v934, %v1018
        %v1020 = vand.u32 %v378, 4294901760
        %1021 = vmatmul.f32.gmra.mxu0 %v1020
        %v1022 = vpop.f32.mrf.mxu0
        %v1023 = vadd.f32 %v938, %v1022
        %v1024 = vand.u32 %v381, 4294901760
        %1025 = vmatmul.f32.gmra.mxu0 %v1024
        %v1026 = vpop.f32.mrf.mxu0
        %v1027 = vadd.f32 %v942, %v1026
        %v1028 = vand.u32 %v384, 4294901760
        %1029 = vmatmul.f32.gmra.mxu0 %v1028
        %v1030 = vpop.f32.mrf.mxu0
        %v1031 = vadd.f32 %v946, %v1030
        %v1032 = vand.u32 %v387, 4294901760
        %1033 = vmatmul.f32.gmra.mxu0 %v1032
        %v1034 = vpop.f32.mrf.mxu0
        %v1035 = vadd.f32 %v950, %v1034
        %v1036 = vand.u32 %v390, 4294901760
        %1037 = vmatmul.f32.gmra.mxu0 %v1036
        %v1038 = vpop.f32.mrf.mxu0
        %v1039 = vadd.f32 %v954, %v1038
        %v1040 = vand.u32 %v393, 4294901760
        %1041 = vmatmul.f32.gmra.mxu0 %v1040
        %v1042 = vpop.f32.mrf.mxu0
        %v1043 = vadd.f32 %v958, %v1042
        %1044 = vdwg.mxu0
        %v1046 = vsel %vm346, %v286, 0
        %v1049 = vsel %vm346, %v287, 0
        %v1052 = vsel %vm346, %v288, 0
        %v1055 = vsel %vm346, %v289, 0
        %v1058 = vsel %vm346, %v290, 0
        %v1061 = vsel %vm346, %v291, 0
        %v1064 = vsel %vm346, %v292, 0
        %v1067 = vsel %vm346, %v293, 0
        %v1070 = vsel %vm346, %v294, 0
        %v1073 = vsel %vm346, %v295, 0
        %v1076 = vsel %vm346, %v296, 0
        %v1079 = vsel %vm346, %v297, 0
        %v1082 = vsel %vm346, %v298, 0
        %v1085 = vsel %vm346, %v299, 0
        %v1088 = vsel %vm346, %v300, 0
        %v1091 = vsel %vm346, %v301, 0
        %1093 = vmatpush.msra.mxu0 0.0
        %1094 = vmatpush.msra.mxu0 0.0
        %1095 = vmatpush.msra.mxu0 0.0
        %1096 = vmatpush.msra.mxu0 0.0
        %1097 = vmatpush.msra.mxu0 0.0
        %1098 = vmatpush.msra.mxu0 0.0
        %1099 = vmatpush.msra.mxu0 0.0
        %1100 = vmatpush.msra.mxu0 0.0
        %1101 = vmatpush.msra.mxu0 0.0
        %1102 = vmatpush.msra.mxu0 0.0
        %1103 = vmatpush.msra.mxu0 0.0
        %1104 = vmatpush.msra.mxu0 0.0
        %v1105 = vand.u32 %v337, 4294901760
        %1106 = vmatpush.msra.mxu0 %v1105
        %v1107 = vand.u32 %v336, 4294901760
        %1108 = vmatpush.msra.mxu0 %v1107
        %v1109 = vand.u32 %v335, 4294901760
        %1110 = vmatpush.msra.mxu0 %v1109
        %v1111 = vand.u32 %v334, 4294901760
        %1112 = vmatpush.msra.mxu0 %v1111
        %v1113 = vand.u32 %v1046, 4294901760
        %v1114 = vsub.f32 %v1046, %v1113
        %v1115 = vand.u32 %v1114, 4294901760
        %v1116 = vsub.f32 %v1114, %v1115
        %v1117 = vand.u32 %v1116, 4294901760
        %1118 = vmatmul.f32.gmra.mxu0 %v1117
        %v1119 = vpop.f32.mrf.mxu0
        %v1120 = vadd.f32 %v983, %v1119
        %v1121 = vand.u32 %v1049, 4294901760
        %v1122 = vsub.f32 %v1049, %v1121
        %v1123 = vand.u32 %v1122, 4294901760
        %v1124 = vsub.f32 %v1122, %v1123
        %v1125 = vand.u32 %v1124, 4294901760
        %1126 = vmatmul.f32.gmra.mxu0 %v1125
        %v1127 = vpop.f32.mrf.mxu0
        %v1128 = vadd.f32 %v987, %v1127
        %v1129 = vand.u32 %v1052, 4294901760
        %v1130 = vsub.f32 %v1052, %v1129
        %v1131 = vand.u32 %v1130, 4294901760
        %v1132 = vsub.f32 %v1130, %v1131
        %v1133 = vand.u32 %v1132, 4294901760
        %1134 = vmatmul.f32.gmra.mxu0 %v1133
        %v1135 = vpop.f32.mrf.mxu0
        %v1136 = vadd.f32 %v991, %v1135
        %v1137 = vand.u32 %v1055, 4294901760
        %v1138 = vsub.f32 %v1055, %v1137
        %v1139 = vand.u32 %v1138, 4294901760
        %v1140 = vsub.f32 %v1138, %v1139
        %v1141 = vand.u32 %v1140, 4294901760
        %1142 = vmatmul.f32.gmra.mxu0 %v1141
        %v1143 = vpop.f32.mrf.mxu0
        %v1144 = vadd.f32 %v995, %v1143
        %v1145 = vand.u32 %v1058, 4294901760
        %v1146 = vsub.f32 %v1058, %v1145
        %v1147 = vand.u32 %v1146, 4294901760
        %v1148 = vsub.f32 %v1146, %v1147
        %v1149 = vand.u32 %v1148, 4294901760
        %1150 = vmatmul.f32.gmra.mxu0 %v1149
        %v1151 = vpop.f32.mrf.mxu0
        %v1152 = vadd.f32 %v999, %v1151
        %v1153 = vand.u32 %v1061, 4294901760
        %v1154 = vsub.f32 %v1061, %v1153
        %v1155 = vand.u32 %v1154, 4294901760
        %v1156 = vsub.f32 %v1154, %v1155
        %v1157 = vand.u32 %v1156, 4294901760
        %1158 = vmatmul.f32.gmra.mxu0 %v1157
        %v1159 = vpop.f32.mrf.mxu0
        %v1160 = vadd.f32 %v1003, %v1159
        %v1161 = vand.u32 %v1064, 4294901760
        %v1162 = vsub.f32 %v1064, %v1161
        %v1163 = vand.u32 %v1162, 4294901760
        %v1164 = vsub.f32 %v1162, %v1163
        %v1165 = vand.u32 %v1164, 4294901760
        %1166 = vmatmul.f32.gmra.mxu0 %v1165
        %v1167 = vpop.f32.mrf.mxu0
        %v1168 = vadd.f32 %v1007, %v1167
        %v1169 = vand.u32 %v1067, 4294901760
        %v1170 = vsub.f32 %v1067, %v1169
        %v1171 = vand.u32 %v1170, 4294901760
        %v1172 = vsub.f32 %v1170, %v1171
        %v1173 = vand.u32 %v1172, 4294901760
        %1174 = vmatmul.f32.gmra.mxu0 %v1173
        %v1175 = vpop.f32.mrf.mxu0
        %v1176 = vadd.f32 %v1011, %v1175
        %v1177 = vand.u32 %v1070, 4294901760
        %v1178 = vsub.f32 %v1070, %v1177
        %v1179 = vand.u32 %v1178, 4294901760
        %v1180 = vsub.f32 %v1178, %v1179
        %v1181 = vand.u32 %v1180, 4294901760
        %1182 = vmatmul.f32.gmra.mxu0 %v1181
        %v1183 = vpop.f32.mrf.mxu0
        %v1184 = vadd.f32 %v1015, %v1183
        %v1185 = vand.u32 %v1073, 4294901760
        %v1186 = vsub.f32 %v1073, %v1185
        %v1187 = vand.u32 %v1186, 4294901760
        %v1188 = vsub.f32 %v1186, %v1187
        %v1189 = vand.u32 %v1188, 4294901760
        %1190 = vmatmul.f32.gmra.mxu0 %v1189
        %v1191 = vpop.f32.mrf.mxu0
        %v1192 = vadd.f32 %v1019, %v1191
        %v1193 = vand.u32 %v1076, 4294901760
        %v1194 = vsub.f32 %v1076, %v1193
        %v1195 = vand.u32 %v1194, 4294901760
        %v1196 = vsub.f32 %v1194, %v1195
        %v1197 = vand.u32 %v1196, 4294901760
        %1198 = vmatmul.f32.gmra.mxu0 %v1197
        %v1199 = vpop.f32.mrf.mxu0
        %v1200 = vadd.f32 %v1023, %v1199
        %v1201 = vand.u32 %v1079, 4294901760
        %v1202 = vsub.f32 %v1079, %v1201
        %v1203 = vand.u32 %v1202, 4294901760
        %v1204 = vsub.f32 %v1202, %v1203
        %v1205 = vand.u32 %v1204, 4294901760
        %1206 = vmatmul.f32.gmra.mxu0 %v1205
        %v1207 = vpop.f32.mrf.mxu0
        %v1208 = vadd.f32 %v1027, %v1207
        %v1209 = vand.u32 %v1082, 4294901760
        %v1210 = vsub.f32 %v1082, %v1209
        %v1211 = vand.u32 %v1210, 4294901760
        %v1212 = vsub.f32 %v1210, %v1211
        %v1213 = vand.u32 %v1212, 4294901760
        %1214 = vmatmul.f32.gmra.mxu0 %v1213
        %v1215 = vpop.f32.mrf.mxu0
        %v1216 = vadd.f32 %v1031, %v1215
        %v1217 = vand.u32 %v1085, 4294901760
        %v1218 = vsub.f32 %v1085, %v1217
        %v1219 = vand.u32 %v1218, 4294901760
        %v1220 = vsub.f32 %v1218, %v1219
        %v1221 = vand.u32 %v1220, 4294901760
        %1222 = vmatmul.f32.gmra.mxu0 %v1221
        %v1223 = vpop.f32.mrf.mxu0
        %v1224 = vadd.f32 %v1035, %v1223
        %v1225 = vand.u32 %v1088, 4294901760
        %v1226 = vsub.f32 %v1088, %v1225
        %v1227 = vand.u32 %v1226, 4294901760
        %v1228 = vsub.f32 %v1226, %v1227
        %v1229 = vand.u32 %v1228, 4294901760
        %1230 = vmatmul.f32.gmra.mxu0 %v1229
        %v1231 = vpop.f32.mrf.mxu0
        %v1232 = vadd.f32 %v1039, %v1231
        %v1233 = vand.u32 %v1091, 4294901760
        %v1234 = vsub.f32 %v1091, %v1233
        %v1235 = vand.u32 %v1234, 4294901760
        %v1236 = vsub.f32 %v1234, %v1235
        %v1237 = vand.u32 %v1236, 4294901760
        %1238 = vmatmul.f32.gmra.mxu0 %v1237
        %v1239 = vpop.f32.mrf.mxu0
        %v1240 = vadd.f32 %v1043, %v1239
        %1241 = vdwg.mxu0
        %1242 = vmatpush.msra.mxu0 0.0
        %1243 = vmatpush.msra.mxu0 0.0
        %1244 = vmatpush.msra.mxu0 0.0
        %1245 = vmatpush.msra.mxu0 0.0
        %1246 = vmatpush.msra.mxu0 0.0
        %1247 = vmatpush.msra.mxu0 0.0
        %1248 = vmatpush.msra.mxu0 0.0
        %1249 = vmatpush.msra.mxu0 0.0
        %1250 = vmatpush.msra.mxu0 0.0
        %1251 = vmatpush.msra.mxu0 0.0
        %1252 = vmatpush.msra.mxu0 0.0
        %1253 = vmatpush.msra.mxu0 0.0
        %v1254 = vand.u32 %v337, 4294901760
        %v1255 = vsub.f32 %v337, %v1254
        %v1256 = vand.u32 %v1255, 4294901760
        %v1257 = vsub.f32 %v1255, %v1256
        %v1258 = vand.u32 %v1257, 4294901760
        %1259 = vmatpush.msra.mxu0 %v1258
        %v1260 = vand.u32 %v336, 4294901760
        %v1261 = vsub.f32 %v336, %v1260
        %v1262 = vand.u32 %v1261, 4294901760
        %v1263 = vsub.f32 %v1261, %v1262
        %v1264 = vand.u32 %v1263, 4294901760
        %1265 = vmatpush.msra.mxu0 %v1264
        %v1266 = vand.u32 %v335, 4294901760
        %v1267 = vsub.f32 %v335, %v1266
        %v1268 = vand.u32 %v1267, 4294901760
        %v1269 = vsub.f32 %v1267, %v1268
        %v1270 = vand.u32 %v1269, 4294901760
        %1271 = vmatpush.msra.mxu0 %v1270
        %v1272 = vand.u32 %v334, 4294901760
        %v1273 = vsub.f32 %v334, %v1272
        %v1274 = vand.u32 %v1273, 4294901760
        %v1275 = vsub.f32 %v1273, %v1274
        %v1276 = vand.u32 %v1275, 4294901760
        %1277 = vmatpush.msra.mxu0 %v1276
        %v1278 = vand.u32 %v1046, 4294901760
        %1279 = vmatmul.f32.gmra.mxu0 %v1278
        %v1280 = vpop.f32.mrf.mxu0
        %v1281 = vadd.f32 %v1120, %v1280
        %v1282 = vand.u32 %v1049, 4294901760
        %1283 = vmatmul.f32.gmra.mxu0 %v1282
        %v1284 = vpop.f32.mrf.mxu0
        %v1285 = vadd.f32 %v1128, %v1284
        %v1286 = vand.u32 %v1052, 4294901760
        %1287 = vmatmul.f32.gmra.mxu0 %v1286
        %v1288 = vpop.f32.mrf.mxu0
        %v1289 = vadd.f32 %v1136, %v1288
        %v1290 = vand.u32 %v1055, 4294901760
        %1291 = vmatmul.f32.gmra.mxu0 %v1290
        %v1292 = vpop.f32.mrf.mxu0
        %v1293 = vadd.f32 %v1144, %v1292
        %v1294 = vand.u32 %v1058, 4294901760
        %1295 = vmatmul.f32.gmra.mxu0 %v1294
        %v1296 = vpop.f32.mrf.mxu0
        %v1297 = vadd.f32 %v1152, %v1296
        %v1298 = vand.u32 %v1061, 4294901760
        %1299 = vmatmul.f32.gmra.mxu0 %v1298
        %v1300 = vpop.f32.mrf.mxu0
        %v1301 = vadd.f32 %v1160, %v1300
        %v1302 = vand.u32 %v1064, 4294901760
        %1303 = vmatmul.f32.gmra.mxu0 %v1302
        %v1304 = vpop.f32.mrf.mxu0
        %v1305 = vadd.f32 %v1168, %v1304
        %v1306 = vand.u32 %v1067, 4294901760
        %1307 = vmatmul.f32.gmra.mxu0 %v1306
        %v1308 = vpop.f32.mrf.mxu0
        %v1309 = vadd.f32 %v1176, %v1308
        %v1310 = vand.u32 %v1070, 4294901760
        %1311 = vmatmul.f32.gmra.mxu0 %v1310
        %v1312 = vpop.f32.mrf.mxu0
        %v1313 = vadd.f32 %v1184, %v1312
        %v1314 = vand.u32 %v1073, 4294901760
        %1315 = vmatmul.f32.gmra.mxu0 %v1314
        %v1316 = vpop.f32.mrf.mxu0
        %v1317 = vadd.f32 %v1192, %v1316
        %v1318 = vand.u32 %v1076, 4294901760
        %1319 = vmatmul.f32.gmra.mxu0 %v1318
        %v1320 = vpop.f32.mrf.mxu0
        %v1321 = vadd.f32 %v1200, %v1320
        %v1322 = vand.u32 %v1079, 4294901760
        %1323 = vmatmul.f32.gmra.mxu0 %v1322
        %v1324 = vpop.f32.mrf.mxu0
        %v1325 = vadd.f32 %v1208, %v1324
        %v1326 = vand.u32 %v1082, 4294901760
        %1327 = vmatmul.f32.gmra.mxu0 %v1326
        %v1328 = vpop.f32.mrf.mxu0
        %v1329 = vadd.f32 %v1216, %v1328
        %v1330 = vand.u32 %v1085, 4294901760
        %1331 = vmatmul.f32.gmra.mxu0 %v1330
        %v1332 = vpop.f32.mrf.mxu0
        %v1333 = vadd.f32 %v1224, %v1332
        %v1334 = vand.u32 %v1088, 4294901760
        %1335 = vmatmul.f32.gmra.mxu0 %v1334
        %v1336 = vpop.f32.mrf.mxu0
        %v1337 = vadd.f32 %v1232, %v1336
        %v1338 = vand.u32 %v1091, 4294901760
        %1339 = vmatmul.f32.gmra.mxu0 %v1338
        %v1340 = vpop.f32.mrf.mxu0
        %v1341 = vadd.f32 %v1240, %v1340
        %1342 = vdwg.mxu0
        %1343 = vmatpush.msra.mxu0 0.0
        %1344 = vmatpush.msra.mxu0 0.0
        %1345 = vmatpush.msra.mxu0 0.0
        %1346 = vmatpush.msra.mxu0 0.0
        %1347 = vmatpush.msra.mxu0 0.0
        %1348 = vmatpush.msra.mxu0 0.0
        %1349 = vmatpush.msra.mxu0 0.0
        %1350 = vmatpush.msra.mxu0 0.0
        %1351 = vmatpush.msra.mxu0 0.0
        %1352 = vmatpush.msra.mxu0 0.0
        %1353 = vmatpush.msra.mxu0 0.0
        %1354 = vmatpush.msra.mxu0 0.0
        %v1355 = vand.u32 %v337, 4294901760
        %v1356 = vsub.f32 %v337, %v1355
        %1357 = vmatpush.msra.mxu0 %v1356
        %v1358 = vand.u32 %v336, 4294901760
        %v1359 = vsub.f32 %v336, %v1358
        %1360 = vmatpush.msra.mxu0 %v1359
        %v1361 = vand.u32 %v335, 4294901760
        %v1362 = vsub.f32 %v335, %v1361
        %1363 = vmatpush.msra.mxu0 %v1362
        %v1364 = vand.u32 %v334, 4294901760
        %v1365 = vsub.f32 %v334, %v1364
        %1366 = vmatpush.msra.mxu0 %v1365
        %v1367 = vand.u32 %v1046, 4294901760
        %v1368 = vsub.f32 %v1046, %v1367
        %1369 = vmatmul.f32.gmra.mxu0 %v1368
        %v1370 = vpop.f32.mrf.mxu0
        %v1371 = vadd.f32 %v1281, %v1370
        %v1372 = vand.u32 %v1049, 4294901760
        %v1373 = vsub.f32 %v1049, %v1372
        %1374 = vmatmul.f32.gmra.mxu0 %v1373
        %v1375 = vpop.f32.mrf.mxu0
        %v1376 = vadd.f32 %v1285, %v1375
        %v1377 = vand.u32 %v1052, 4294901760
        %v1378 = vsub.f32 %v1052, %v1377
        %1379 = vmatmul.f32.gmra.mxu0 %v1378
        %v1380 = vpop.f32.mrf.mxu0
        %v1381 = vadd.f32 %v1289, %v1380
        %v1382 = vand.u32 %v1055, 4294901760
        %v1383 = vsub.f32 %v1055, %v1382
        %1384 = vmatmul.f32.gmra.mxu0 %v1383
        %v1385 = vpop.f32.mrf.mxu0
        %v1386 = vadd.f32 %v1293, %v1385
        %v1387 = vand.u32 %v1058, 4294901760
        %v1388 = vsub.f32 %v1058, %v1387
        %1389 = vmatmul.f32.gmra.mxu0 %v1388
        %v1390 = vpop.f32.mrf.mxu0
        %v1391 = vadd.f32 %v1297, %v1390
        %v1392 = vand.u32 %v1061, 4294901760
        %v1393 = vsub.f32 %v1061, %v1392
        %1394 = vmatmul.f32.gmra.mxu0 %v1393
        %v1395 = vpop.f32.mrf.mxu0
        %v1396 = vadd.f32 %v1301, %v1395
        %v1397 = vand.u32 %v1064, 4294901760
        %v1398 = vsub.f32 %v1064, %v1397
        %1399 = vmatmul.f32.gmra.mxu0 %v1398
        %v1400 = vpop.f32.mrf.mxu0
        %v1401 = vadd.f32 %v1305, %v1400
        %v1402 = vand.u32 %v1067, 4294901760
        %v1403 = vsub.f32 %v1067, %v1402
        %1404 = vmatmul.f32.gmra.mxu0 %v1403
        %v1405 = vpop.f32.mrf.mxu0
        %v1406 = vadd.f32 %v1309, %v1405
        %v1407 = vand.u32 %v1070, 4294901760
        %v1408 = vsub.f32 %v1070, %v1407
        %1409 = vmatmul.f32.gmra.mxu0 %v1408
        %v1410 = vpop.f32.mrf.mxu0
        %v1411 = vadd.f32 %v1313, %v1410
        %v1412 = vand.u32 %v1073, 4294901760
        %v1413 = vsub.f32 %v1073, %v1412
        %1414 = vmatmul.f32.gmra.mxu0 %v1413
        %v1415 = vpop.f32.mrf.mxu0
        %v1416 = vadd.f32 %v1317, %v1415
        %v1417 = vand.u32 %v1076, 4294901760
        %v1418 = vsub.f32 %v1076, %v1417
        %1419 = vmatmul.f32.gmra.mxu0 %v1418
        %v1420 = vpop.f32.mrf.mxu0
        %v1421 = vadd.f32 %v1321, %v1420
        %v1422 = vand.u32 %v1079, 4294901760
        %v1423 = vsub.f32 %v1079, %v1422
        %1424 = vmatmul.f32.gmra.mxu0 %v1423
        %v1425 = vpop.f32.mrf.mxu0
        %v1426 = vadd.f32 %v1325, %v1425
        %v1427 = vand.u32 %v1082, 4294901760
        %v1428 = vsub.f32 %v1082, %v1427
        %1429 = vmatmul.f32.gmra.mxu0 %v1428
        %v1430 = vpop.f32.mrf.mxu0
        %v1431 = vadd.f32 %v1329, %v1430
        %v1432 = vand.u32 %v1085, 4294901760
        %v1433 = vsub.f32 %v1085, %v1432
        %1434 = vmatmul.f32.gmra.mxu0 %v1433
        %v1435 = vpop.f32.mrf.mxu0
        %v1436 = vadd.f32 %v1333, %v1435
        %v1437 = vand.u32 %v1088, 4294901760
        %v1438 = vsub.f32 %v1088, %v1437
        %1439 = vmatmul.f32.gmra.mxu0 %v1438
        %v1440 = vpop.f32.mrf.mxu0
        %v1441 = vadd.f32 %v1337, %v1440
        %v1442 = vand.u32 %v1091, 4294901760
        %v1443 = vsub.f32 %v1091, %v1442
        %1444 = vmatmul.f32.gmra.mxu0 %v1443
        %v1445 = vpop.f32.mrf.mxu0
        %v1446 = vadd.f32 %v1341, %v1445
        %1447 = vdwg.mxu0
        %1448 = vmatpush.msra.mxu0 0.0
        %1449 = vmatpush.msra.mxu0 0.0
        %1450 = vmatpush.msra.mxu0 0.0
        %1451 = vmatpush.msra.mxu0 0.0
        %1452 = vmatpush.msra.mxu0 0.0
        %1453 = vmatpush.msra.mxu0 0.0
        %1454 = vmatpush.msra.mxu0 0.0
        %1455 = vmatpush.msra.mxu0 0.0
        %1456 = vmatpush.msra.mxu0 0.0
        %1457 = vmatpush.msra.mxu0 0.0
        %1458 = vmatpush.msra.mxu0 0.0
        %1459 = vmatpush.msra.mxu0 0.0
        %v1460 = vand.u32 %v337, 4294901760
        %1461 = vmatpush.msra.mxu0 %v1460
        %v1462 = vand.u32 %v336, 4294901760
        %1463 = vmatpush.msra.mxu0 %v1462
        %v1464 = vand.u32 %v335, 4294901760
        %1465 = vmatpush.msra.mxu0 %v1464
        %v1466 = vand.u32 %v334, 4294901760
        %1467 = vmatpush.msra.mxu0 %v1466
        %v1468 = vand.u32 %v1046, 4294901760
        %v1469 = vsub.f32 %v1046, %v1468
        %v1470 = vand.u32 %v1469, 4294901760
        %1471 = vmatmul.f32.gmra.mxu0 %v1470
        %v1472 = vpop.f32.mrf.mxu0
        %v1473 = vadd.f32 %v1371, %v1472
        %v1474 = vand.u32 %v1049, 4294901760
        %v1475 = vsub.f32 %v1049, %v1474
        %v1476 = vand.u32 %v1475, 4294901760
        %1477 = vmatmul.f32.gmra.mxu0 %v1476
        %v1478 = vpop.f32.mrf.mxu0
        %v1479 = vadd.f32 %v1376, %v1478
        %v1480 = vand.u32 %v1052, 4294901760
        %v1481 = vsub.f32 %v1052, %v1480
        %v1482 = vand.u32 %v1481, 4294901760
        %1483 = vmatmul.f32.gmra.mxu0 %v1482
        %v1484 = vpop.f32.mrf.mxu0
        %v1485 = vadd.f32 %v1381, %v1484
        %v1486 = vand.u32 %v1055, 4294901760
        %v1487 = vsub.f32 %v1055, %v1486
        %v1488 = vand.u32 %v1487, 4294901760
        %1489 = vmatmul.f32.gmra.mxu0 %v1488
        %v1490 = vpop.f32.mrf.mxu0
        %v1491 = vadd.f32 %v1386, %v1490
        %v1492 = vand.u32 %v1058, 4294901760
        %v1493 = vsub.f32 %v1058, %v1492
        %v1494 = vand.u32 %v1493, 4294901760
        %1495 = vmatmul.f32.gmra.mxu0 %v1494
        %v1496 = vpop.f32.mrf.mxu0
        %v1497 = vadd.f32 %v1391, %v1496
        %v1498 = vand.u32 %v1061, 4294901760
        %v1499 = vsub.f32 %v1061, %v1498
        %v1500 = vand.u32 %v1499, 4294901760
        %1501 = vmatmul.f32.gmra.mxu0 %v1500
        %v1502 = vpop.f32.mrf.mxu0
        %v1503 = vadd.f32 %v1396, %v1502
        %v1504 = vand.u32 %v1064, 4294901760
        %v1505 = vsub.f32 %v1064, %v1504
        %v1506 = vand.u32 %v1505, 4294901760
        %1507 = vmatmul.f32.gmra.mxu0 %v1506
        %v1508 = vpop.f32.mrf.mxu0
        %v1509 = vadd.f32 %v1401, %v1508
        %v1510 = vand.u32 %v1067, 4294901760
        %v1511 = vsub.f32 %v1067, %v1510
        %v1512 = vand.u32 %v1511, 4294901760
        %1513 = vmatmul.f32.gmra.mxu0 %v1512
        %v1514 = vpop.f32.mrf.mxu0
        %v1515 = vadd.f32 %v1406, %v1514
        %v1516 = vand.u32 %v1070, 4294901760
        %v1517 = vsub.f32 %v1070, %v1516
        %v1518 = vand.u32 %v1517, 4294901760
        %1519 = vmatmul.f32.gmra.mxu0 %v1518
        %v1520 = vpop.f32.mrf.mxu0
        %v1521 = vadd.f32 %v1411, %v1520
        %v1522 = vand.u32 %v1073, 4294901760
        %v1523 = vsub.f32 %v1073, %v1522
        %v1524 = vand.u32 %v1523, 4294901760
        %1525 = vmatmul.f32.gmra.mxu0 %v1524
        %v1526 = vpop.f32.mrf.mxu0
        %v1527 = vadd.f32 %v1416, %v1526
        %v1528 = vand.u32 %v1076, 4294901760
        %v1529 = vsub.f32 %v1076, %v1528
        %v1530 = vand.u32 %v1529, 4294901760
        %1531 = vmatmul.f32.gmra.mxu0 %v1530
        %v1532 = vpop.f32.mrf.mxu0
        %v1533 = vadd.f32 %v1421, %v1532
        %v1534 = vand.u32 %v1079, 4294901760
        %v1535 = vsub.f32 %v1079, %v1534
        %v1536 = vand.u32 %v1535, 4294901760
        %1537 = vmatmul.f32.gmra.mxu0 %v1536
        %v1538 = vpop.f32.mrf.mxu0
        %v1539 = vadd.f32 %v1426, %v1538
        %v1540 = vand.u32 %v1082, 4294901760
        %v1541 = vsub.f32 %v1082, %v1540
        %v1542 = vand.u32 %v1541, 4294901760
        %1543 = vmatmul.f32.gmra.mxu0 %v1542
        %v1544 = vpop.f32.mrf.mxu0
        %v1545 = vadd.f32 %v1431, %v1544
        %v1546 = vand.u32 %v1085, 4294901760
        %v1547 = vsub.f32 %v1085, %v1546
        %v1548 = vand.u32 %v1547, 4294901760
        %1549 = vmatmul.f32.gmra.mxu0 %v1548
        %v1550 = vpop.f32.mrf.mxu0
        %v1551 = vadd.f32 %v1436, %v1550
        %v1552 = vand.u32 %v1088, 4294901760
        %v1553 = vsub.f32 %v1088, %v1552
        %v1554 = vand.u32 %v1553, 4294901760
        %1555 = vmatmul.f32.gmra.mxu0 %v1554
        %v1556 = vpop.f32.mrf.mxu0
        %v1557 = vadd.f32 %v1441, %v1556
        %v1558 = vand.u32 %v1091, 4294901760
        %v1559 = vsub.f32 %v1091, %v1558
        %v1560 = vand.u32 %v1559, 4294901760
        %1561 = vmatmul.f32.gmra.mxu0 %v1560
        %v1562 = vpop.f32.mrf.mxu0
        %v1563 = vadd.f32 %v1446, %v1562
        %1564 = vdwg.mxu0
        %1565 = vmatpush.msra.mxu0 0.0
        %1566 = vmatpush.msra.mxu0 0.0
        %1567 = vmatpush.msra.mxu0 0.0
        %1568 = vmatpush.msra.mxu0 0.0
        %1569 = vmatpush.msra.mxu0 0.0
        %1570 = vmatpush.msra.mxu0 0.0
        %1571 = vmatpush.msra.mxu0 0.0
        %1572 = vmatpush.msra.mxu0 0.0
        %1573 = vmatpush.msra.mxu0 0.0
        %1574 = vmatpush.msra.mxu0 0.0
        %1575 = vmatpush.msra.mxu0 0.0
        %1576 = vmatpush.msra.mxu0 0.0
        %v1577 = vand.u32 %v337, 4294901760
        %v1578 = vsub.f32 %v337, %v1577
        %v1579 = vand.u32 %v1578, 4294901760
        %1580 = vmatpush.msra.mxu0 %v1579
        %v1581 = vand.u32 %v336, 4294901760
        %v1582 = vsub.f32 %v336, %v1581
        %v1583 = vand.u32 %v1582, 4294901760
        %1584 = vmatpush.msra.mxu0 %v1583
        %v1585 = vand.u32 %v335, 4294901760
        %v1586 = vsub.f32 %v335, %v1585
        %v1587 = vand.u32 %v1586, 4294901760
        %1588 = vmatpush.msra.mxu0 %v1587
        %v1589 = vand.u32 %v334, 4294901760
        %v1590 = vsub.f32 %v334, %v1589
        %v1591 = vand.u32 %v1590, 4294901760
        %1592 = vmatpush.msra.mxu0 %v1591
        %v1593 = vand.u32 %v1046, 4294901760
        %1594 = vmatmul.f32.gmra.mxu0 %v1593
        %v1595 = vpop.f32.mrf.mxu0
        %v1596 = vadd.f32 %v1473, %v1595
        %v1597 = vand.u32 %v1049, 4294901760
        %1598 = vmatmul.f32.gmra.mxu0 %v1597
        %v1599 = vpop.f32.mrf.mxu0
        %v1600 = vadd.f32 %v1479, %v1599
        %v1601 = vand.u32 %v1052, 4294901760
        %1602 = vmatmul.f32.gmra.mxu0 %v1601
        %v1603 = vpop.f32.mrf.mxu0
        %v1604 = vadd.f32 %v1485, %v1603
        %v1605 = vand.u32 %v1055, 4294901760
        %1606 = vmatmul.f32.gmra.mxu0 %v1605
        %v1607 = vpop.f32.mrf.mxu0
        %v1608 = vadd.f32 %v1491, %v1607
        %v1609 = vand.u32 %v1058, 4294901760
        %1610 = vmatmul.f32.gmra.mxu0 %v1609
        %v1611 = vpop.f32.mrf.mxu0
        %v1612 = vadd.f32 %v1497, %v1611
        %v1613 = vand.u32 %v1061, 4294901760
        %1614 = vmatmul.f32.gmra.mxu0 %v1613
        %v1615 = vpop.f32.mrf.mxu0
        %v1616 = vadd.f32 %v1503, %v1615
        %v1617 = vand.u32 %v1064, 4294901760
        %1618 = vmatmul.f32.gmra.mxu0 %v1617
        %v1619 = vpop.f32.mrf.mxu0
        %v1620 = vadd.f32 %v1509, %v1619
        %v1621 = vand.u32 %v1067, 4294901760
        %1622 = vmatmul.f32.gmra.mxu0 %v1621
        %v1623 = vpop.f32.mrf.mxu0
        %v1624 = vadd.f32 %v1515, %v1623
        %v1625 = vand.u32 %v1070, 4294901760
        %1626 = vmatmul.f32.gmra.mxu0 %v1625
        %v1627 = vpop.f32.mrf.mxu0
        %v1628 = vadd.f32 %v1521, %v1627
        %v1629 = vand.u32 %v1073, 4294901760
        %1630 = vmatmul.f32.gmra.mxu0 %v1629
        %v1631 = vpop.f32.mrf.mxu0
        %v1632 = vadd.f32 %v1527, %v1631
        %v1633 = vand.u32 %v1076, 4294901760
        %1634 = vmatmul.f32.gmra.mxu0 %v1633
        %v1635 = vpop.f32.mrf.mxu0
        %v1636 = vadd.f32 %v1533, %v1635
        %v1637 = vand.u32 %v1079, 4294901760
        %1638 = vmatmul.f32.gmra.mxu0 %v1637
        %v1639 = vpop.f32.mrf.mxu0
        %v1640 = vadd.f32 %v1539, %v1639
        %v1641 = vand.u32 %v1082, 4294901760
        %1642 = vmatmul.f32.gmra.mxu0 %v1641
        %v1643 = vpop.f32.mrf.mxu0
        %v1644 = vadd.f32 %v1545, %v1643
        %v1645 = vand.u32 %v1085, 4294901760
        %1646 = vmatmul.f32.gmra.mxu0 %v1645
        %v1647 = vpop.f32.mrf.mxu0
        %v1648 = vadd.f32 %v1551, %v1647
        %v1649 = vand.u32 %v1088, 4294901760
        %1650 = vmatmul.f32.gmra.mxu0 %v1649
        %v1651 = vpop.f32.mrf.mxu0
        %v1652 = vadd.f32 %v1557, %v1651
        %v1653 = vand.u32 %v1091, 4294901760
        %1654 = vmatmul.f32.gmra.mxu0 %v1653
        %v1655 = vpop.f32.mrf.mxu0
        %v1656 = vadd.f32 %v1563, %v1655
        %1657 = vdwg.mxu0
        %1658 = vmatpush.msra.mxu0 0.0
        %1659 = vmatpush.msra.mxu0 0.0
        %1660 = vmatpush.msra.mxu0 0.0
        %1661 = vmatpush.msra.mxu0 0.0
        %1662 = vmatpush.msra.mxu0 0.0
        %1663 = vmatpush.msra.mxu0 0.0
        %1664 = vmatpush.msra.mxu0 0.0
        %1665 = vmatpush.msra.mxu0 0.0
        %1666 = vmatpush.msra.mxu0 0.0
        %1667 = vmatpush.msra.mxu0 0.0
        %1668 = vmatpush.msra.mxu0 0.0
        %1669 = vmatpush.msra.mxu0 0.0
        %v1670 = vand.u32 %v337, 4294901760
        %1671 = vmatpush.msra.mxu0 %v1670
        %v1672 = vand.u32 %v336, 4294901760
        %1673 = vmatpush.msra.mxu0 %v1672
        %v1674 = vand.u32 %v335, 4294901760
        %1675 = vmatpush.msra.mxu0 %v1674
        %v1676 = vand.u32 %v334, 4294901760
        %1677 = vmatpush.msra.mxu0 %v1676
        %v1678 = vand.u32 %v1046, 4294901760
        %1679 = vmatmul.f32.gmra.mxu0 %v1678
        %v1680 = vpop.f32.mrf.mxu0
        %v1681 = vadd.f32 %v1596, %v1680
        %v1682 = vand.u32 %v1049, 4294901760
        %1683 = vmatmul.f32.gmra.mxu0 %v1682
        %v1684 = vpop.f32.mrf.mxu0
        %v1685 = vadd.f32 %v1600, %v1684
        %v1686 = vand.u32 %v1052, 4294901760
        %1687 = vmatmul.f32.gmra.mxu0 %v1686
        %v1688 = vpop.f32.mrf.mxu0
        %v1689 = vadd.f32 %v1604, %v1688
        %v1690 = vand.u32 %v1055, 4294901760
        %1691 = vmatmul.f32.gmra.mxu0 %v1690
        %v1692 = vpop.f32.mrf.mxu0
        %v1693 = vadd.f32 %v1608, %v1692
        %v1694 = vand.u32 %v1058, 4294901760
        %1695 = vmatmul.f32.gmra.mxu0 %v1694
        %v1696 = vpop.f32.mrf.mxu0
        %v1697 = vadd.f32 %v1612, %v1696
        %v1698 = vand.u32 %v1061, 4294901760
        %1699 = vmatmul.f32.gmra.mxu0 %v1698
        %v1700 = vpop.f32.mrf.mxu0
        %v1701 = vadd.f32 %v1616, %v1700
        %v1702 = vand.u32 %v1064, 4294901760
        %1703 = vmatmul.f32.gmra.mxu0 %v1702
        %v1704 = vpop.f32.mrf.mxu0
        %v1705 = vadd.f32 %v1620, %v1704
        %v1706 = vand.u32 %v1067, 4294901760
        %1707 = vmatmul.f32.gmra.mxu0 %v1706
        %v1708 = vpop.f32.mrf.mxu0
        %v1709 = vadd.f32 %v1624, %v1708
        %v1710 = vand.u32 %v1070, 4294901760
        %1711 = vmatmul.f32.gmra.mxu0 %v1710
        %v1712 = vpop.f32.mrf.mxu0
        %v1713 = vadd.f32 %v1628, %v1712
        %v1714 = vand.u32 %v1073, 4294901760
        %1715 = vmatmul.f32.gmra.mxu0 %v1714
        %v1716 = vpop.f32.mrf.mxu0
        %v1717 = vadd.f32 %v1632, %v1716
        %v1718 = vand.u32 %v1076, 4294901760
        %1719 = vmatmul.f32.gmra.mxu0 %v1718
        %v1720 = vpop.f32.mrf.mxu0
        %v1721 = vadd.f32 %v1636, %v1720
        %v1722 = vand.u32 %v1079, 4294901760
        %1723 = vmatmul.f32.gmra.mxu0 %v1722
        %v1724 = vpop.f32.mrf.mxu0
        %v1725 = vadd.f32 %v1640, %v1724
        %v1726 = vand.u32 %v1082, 4294901760
        %1727 = vmatmul.f32.gmra.mxu0 %v1726
        %v1728 = vpop.f32.mrf.mxu0
        %v1729 = vadd.f32 %v1644, %v1728
        %v1730 = vand.u32 %v1085, 4294901760
        %1731 = vmatmul.f32.gmra.mxu0 %v1730
        %v1732 = vpop.f32.mrf.mxu0
        %v1733 = vadd.f32 %v1648, %v1732
        %v1734 = vand.u32 %v1088, 4294901760
        %1735 = vmatmul.f32.gmra.mxu0 %v1734
        %v1736 = vpop.f32.mrf.mxu0
        %v1737 = vadd.f32 %v1652, %v1736
        %v1738 = vand.u32 %v1091, 4294901760
        %1739 = vmatmul.f32.gmra.mxu0 %v1738
        %v1740 = vpop.f32.mrf.mxu0
        %v1741 = vadd.f32 %v1656, %v1740
        %1742 = vdwg.mxu0
        %v1744 = vsel %vm346, %v318, 0
        %v1747 = vsel %vm346, %v319, 0
        %v1750 = vsel %vm346, %v320, 0
        %v1753 = vsel %vm346, %v321, 0
        %v1756 = vsel %vm346, %v322, 0
        %v1759 = vsel %vm346, %v323, 0
        %v1762 = vsel %vm346, %v324, 0
        %v1765 = vsel %vm346, %v325, 0
        %v1768 = vsel %vm346, %v326, 0
        %v1771 = vsel %vm346, %v327, 0
        %v1774 = vsel %vm346, %v328, 0
        %v1777 = vsel %vm346, %v329, 0
        %v1780 = vsel %vm346, %v330, 0
        %v1783 = vsel %vm346, %v331, 0
        %v1786 = vsel %vm346, %v332, 0
        %v1789 = vsel %vm346, %v333, 0
        %1791 = vmatpush.msra.mxu0 0.0
        %1792 = vmatpush.msra.mxu0 0.0
        %1793 = vmatpush.msra.mxu0 0.0
        %1794 = vmatpush.msra.mxu0 0.0
        %1795 = vmatpush.msra.mxu0 0.0
        %1796 = vmatpush.msra.mxu0 0.0
        %1797 = vmatpush.msra.mxu0 0.0
        %1798 = vmatpush.msra.mxu0 0.0
        %1799 = vmatpush.msra.mxu0 0.0
        %1800 = vmatpush.msra.mxu0 0.0
        %1801 = vmatpush.msra.mxu0 0.0
        %1802 = vmatpush.msra.mxu0 0.0
        %v1803 = vand.u32 %v345, 4294901760
        %1804 = vmatpush.msra.mxu0 %v1803
        %v1805 = vand.u32 %v344, 4294901760
        %1806 = vmatpush.msra.mxu0 %v1805
        %v1807 = vand.u32 %v343, 4294901760
        %1808 = vmatpush.msra.mxu0 %v1807
        %v1809 = vand.u32 %v342, 4294901760
        %1810 = vmatpush.msra.mxu0 %v1809
        %v1811 = vand.u32 %v1744, 4294901760
        %v1812 = vsub.f32 %v1744, %v1811
        %v1813 = vand.u32 %v1812, 4294901760
        %v1814 = vsub.f32 %v1812, %v1813
        %v1815 = vand.u32 %v1814, 4294901760
        %1816 = vmatmul.f32.gmra.mxu0 %v1815
        %v1817 = vpop.f32.mrf.mxu0
        %v1818 = vadd.f32 0.0, %v1817
        %v1819 = vand.u32 %v1747, 4294901760
        %v1820 = vsub.f32 %v1747, %v1819
        %v1821 = vand.u32 %v1820, 4294901760
        %v1822 = vsub.f32 %v1820, %v1821
        %v1823 = vand.u32 %v1822, 4294901760
        %1824 = vmatmul.f32.gmra.mxu0 %v1823
        %v1825 = vpop.f32.mrf.mxu0
        %v1826 = vadd.f32 0.0, %v1825
        %v1827 = vand.u32 %v1750, 4294901760
        %v1828 = vsub.f32 %v1750, %v1827
        %v1829 = vand.u32 %v1828, 4294901760
        %v1830 = vsub.f32 %v1828, %v1829
        %v1831 = vand.u32 %v1830, 4294901760
        %1832 = vmatmul.f32.gmra.mxu0 %v1831
        %v1833 = vpop.f32.mrf.mxu0
        %v1834 = vadd.f32 0.0, %v1833
        %v1835 = vand.u32 %v1753, 4294901760
        %v1836 = vsub.f32 %v1753, %v1835
        %v1837 = vand.u32 %v1836, 4294901760
        %v1838 = vsub.f32 %v1836, %v1837
        %v1839 = vand.u32 %v1838, 4294901760
        %1840 = vmatmul.f32.gmra.mxu0 %v1839
        %v1841 = vpop.f32.mrf.mxu0
        %v1842 = vadd.f32 0.0, %v1841
        %v1843 = vand.u32 %v1756, 4294901760
        %v1844 = vsub.f32 %v1756, %v1843
        %v1845 = vand.u32 %v1844, 4294901760
        %v1846 = vsub.f32 %v1844, %v1845
        %v1847 = vand.u32 %v1846, 4294901760
        %1848 = vmatmul.f32.gmra.mxu0 %v1847
        %v1849 = vpop.f32.mrf.mxu0
        %v1850 = vadd.f32 0.0, %v1849
        %v1851 = vand.u32 %v1759, 4294901760
        %v1852 = vsub.f32 %v1759, %v1851
        %v1853 = vand.u32 %v1852, 4294901760
        %v1854 = vsub.f32 %v1852, %v1853
        %v1855 = vand.u32 %v1854, 4294901760
        %1856 = vmatmul.f32.gmra.mxu0 %v1855
        %v1857 = vpop.f32.mrf.mxu0
        %v1858 = vadd.f32 0.0, %v1857
        %v1859 = vand.u32 %v1762, 4294901760
        %v1860 = vsub.f32 %v1762, %v1859
        %v1861 = vand.u32 %v1860, 4294901760
        %v1862 = vsub.f32 %v1860, %v1861
        %v1863 = vand.u32 %v1862, 4294901760
        %1864 = vmatmul.f32.gmra.mxu0 %v1863
        %v1865 = vpop.f32.mrf.mxu0
        %v1866 = vadd.f32 0.0, %v1865
        %v1867 = vand.u32 %v1765, 4294901760
        %v1868 = vsub.f32 %v1765, %v1867
        %v1869 = vand.u32 %v1868, 4294901760
        %v1870 = vsub.f32 %v1868, %v1869
        %v1871 = vand.u32 %v1870, 4294901760
        %1872 = vmatmul.f32.gmra.mxu0 %v1871
        %v1873 = vpop.f32.mrf.mxu0
        %v1874 = vadd.f32 0.0, %v1873
        %v1875 = vand.u32 %v1768, 4294901760
        %v1876 = vsub.f32 %v1768, %v1875
        %v1877 = vand.u32 %v1876, 4294901760
        %v1878 = vsub.f32 %v1876, %v1877
        %v1879 = vand.u32 %v1878, 4294901760
        %1880 = vmatmul.f32.gmra.mxu0 %v1879
        %v1881 = vpop.f32.mrf.mxu0
        %v1882 = vadd.f32 0.0, %v1881
        %v1883 = vand.u32 %v1771, 4294901760
        %v1884 = vsub.f32 %v1771, %v1883
        %v1885 = vand.u32 %v1884, 4294901760
        %v1886 = vsub.f32 %v1884, %v1885
        %v1887 = vand.u32 %v1886, 4294901760
        %1888 = vmatmul.f32.gmra.mxu0 %v1887
        %v1889 = vpop.f32.mrf.mxu0
        %v1890 = vadd.f32 0.0, %v1889
        %v1891 = vand.u32 %v1774, 4294901760
        %v1892 = vsub.f32 %v1774, %v1891
        %v1893 = vand.u32 %v1892, 4294901760
        %v1894 = vsub.f32 %v1892, %v1893
        %v1895 = vand.u32 %v1894, 4294901760
        %1896 = vmatmul.f32.gmra.mxu0 %v1895
        %v1897 = vpop.f32.mrf.mxu0
        %v1898 = vadd.f32 0.0, %v1897
        %v1899 = vand.u32 %v1777, 4294901760
        %v1900 = vsub.f32 %v1777, %v1899
        %v1901 = vand.u32 %v1900, 4294901760
        %v1902 = vsub.f32 %v1900, %v1901
        %v1903 = vand.u32 %v1902, 4294901760
        %1904 = vmatmul.f32.gmra.mxu0 %v1903
        %v1905 = vpop.f32.mrf.mxu0
        %v1906 = vadd.f32 0.0, %v1905
        %v1907 = vand.u32 %v1780, 4294901760
        %v1908 = vsub.f32 %v1780, %v1907
        %v1909 = vand.u32 %v1908, 4294901760
        %v1910 = vsub.f32 %v1908, %v1909
        %v1911 = vand.u32 %v1910, 4294901760
        %1912 = vmatmul.f32.gmra.mxu0 %v1911
        %v1913 = vpop.f32.mrf.mxu0
        %v1914 = vadd.f32 0.0, %v1913
        %v1915 = vand.u32 %v1783, 4294901760
        %v1916 = vsub.f32 %v1783, %v1915
        %v1917 = vand.u32 %v1916, 4294901760
        %v1918 = vsub.f32 %v1916, %v1917
        %v1919 = vand.u32 %v1918, 4294901760
        %1920 = vmatmul.f32.gmra.mxu0 %v1919
        %v1921 = vpop.f32.mrf.mxu0
        %v1922 = vadd.f32 0.0, %v1921
        %v1923 = vand.u32 %v1786, 4294901760
        %v1924 = vsub.f32 %v1786, %v1923
        %v1925 = vand.u32 %v1924, 4294901760
        %v1926 = vsub.f32 %v1924, %v1925
        %v1927 = vand.u32 %v1926, 4294901760
        %1928 = vmatmul.f32.gmra.mxu0 %v1927
        %v1929 = vpop.f32.mrf.mxu0
        %v1930 = vadd.f32 0.0, %v1929
        %v1931 = vand.u32 %v1789, 4294901760
        %v1932 = vsub.f32 %v1789, %v1931
        %v1933 = vand.u32 %v1932, 4294901760
        %v1934 = vsub.f32 %v1932, %v1933
        %v1935 = vand.u32 %v1934, 4294901760
        %1936 = vmatmul.f32.gmra.mxu0 %v1935
        %v1937 = vpop.f32.mrf.mxu0
        %v1938 = vadd.f32 0.0, %v1937
        %1939 = vdwg.mxu0
        %1940 = vmatpush.msra.mxu0 0.0
        %1941 = vmatpush.msra.mxu0 0.0
        %1942 = vmatpush.msra.mxu0 0.0
        %1943 = vmatpush.msra.mxu0 0.0
        %1944 = vmatpush.msra.mxu0 0.0
        %1945 = vmatpush.msra.mxu0 0.0
        %1946 = vmatpush.msra.mxu0 0.0
        %1947 = vmatpush.msra.mxu0 0.0
        %1948 = vmatpush.msra.mxu0 0.0
        %1949 = vmatpush.msra.mxu0 0.0
        %1950 = vmatpush.msra.mxu0 0.0
        %1951 = vmatpush.msra.mxu0 0.0
        %v1952 = vand.u32 %v345, 4294901760
        %v1953 = vsub.f32 %v345, %v1952
        %v1954 = vand.u32 %v1953, 4294901760
        %v1955 = vsub.f32 %v1953, %v1954
        %v1956 = vand.u32 %v1955, 4294901760
        %1957 = vmatpush.msra.mxu0 %v1956
        %v1958 = vand.u32 %v344, 4294901760
        %v1959 = vsub.f32 %v344, %v1958
        %v1960 = vand.u32 %v1959, 4294901760
        %v1961 = vsub.f32 %v1959, %v1960
        %v1962 = vand.u32 %v1961, 4294901760
        %1963 = vmatpush.msra.mxu0 %v1962
        %v1964 = vand.u32 %v343, 4294901760
        %v1965 = vsub.f32 %v343, %v1964
        %v1966 = vand.u32 %v1965, 4294901760
        %v1967 = vsub.f32 %v1965, %v1966
        %v1968 = vand.u32 %v1967, 4294901760
        %1969 = vmatpush.msra.mxu0 %v1968
        %v1970 = vand.u32 %v342, 4294901760
        %v1971 = vsub.f32 %v342, %v1970
        %v1972 = vand.u32 %v1971, 4294901760
        %v1973 = vsub.f32 %v1971, %v1972
        %v1974 = vand.u32 %v1973, 4294901760
        %1975 = vmatpush.msra.mxu0 %v1974
        %v1976 = vand.u32 %v1744, 4294901760
        %1977 = vmatmul.f32.gmra.mxu0 %v1976
        %v1978 = vpop.f32.mrf.mxu0
        %v1979 = vadd.f32 %v1818, %v1978
        %v1980 = vand.u32 %v1747, 4294901760
        %1981 = vmatmul.f32.gmra.mxu0 %v1980
        %v1982 = vpop.f32.mrf.mxu0
        %v1983 = vadd.f32 %v1826, %v1982
        %v1984 = vand.u32 %v1750, 4294901760
        %1985 = vmatmul.f32.gmra.mxu0 %v1984
        %v1986 = vpop.f32.mrf.mxu0
        %v1987 = vadd.f32 %v1834, %v1986
        %v1988 = vand.u32 %v1753, 4294901760
        %1989 = vmatmul.f32.gmra.mxu0 %v1988
        %v1990 = vpop.f32.mrf.mxu0
        %v1991 = vadd.f32 %v1842, %v1990
        %v1992 = vand.u32 %v1756, 4294901760
        %1993 = vmatmul.f32.gmra.mxu0 %v1992
        %v1994 = vpop.f32.mrf.mxu0
        %v1995 = vadd.f32 %v1850, %v1994
        %v1996 = vand.u32 %v1759, 4294901760
        %1997 = vmatmul.f32.gmra.mxu0 %v1996
        %v1998 = vpop.f32.mrf.mxu0
        %v1999 = vadd.f32 %v1858, %v1998
        %v2000 = vand.u32 %v1762, 4294901760
        %2001 = vmatmul.f32.gmra.mxu0 %v2000
        %v2002 = vpop.f32.mrf.mxu0
        %v2003 = vadd.f32 %v1866, %v2002
        %v2004 = vand.u32 %v1765, 4294901760
        %2005 = vmatmul.f32.gmra.mxu0 %v2004
        %v2006 = vpop.f32.mrf.mxu0
        %v2007 = vadd.f32 %v1874, %v2006
        %v2008 = vand.u32 %v1768, 4294901760
        %2009 = vmatmul.f32.gmra.mxu0 %v2008
        %v2010 = vpop.f32.mrf.mxu0
        %v2011 = vadd.f32 %v1882, %v2010
        %v2012 = vand.u32 %v1771, 4294901760
        %2013 = vmatmul.f32.gmra.mxu0 %v2012
        %v2014 = vpop.f32.mrf.mxu0
        %v2015 = vadd.f32 %v1890, %v2014
        %v2016 = vand.u32 %v1774, 4294901760
        %2017 = vmatmul.f32.gmra.mxu0 %v2016
        %v2018 = vpop.f32.mrf.mxu0
        %v2019 = vadd.f32 %v1898, %v2018
        %v2020 = vand.u32 %v1777, 4294901760
        %2021 = vmatmul.f32.gmra.mxu0 %v2020
        %v2022 = vpop.f32.mrf.mxu0
        %v2023 = vadd.f32 %v1906, %v2022
        %v2024 = vand.u32 %v1780, 4294901760
        %2025 = vmatmul.f32.gmra.mxu0 %v2024
        %v2026 = vpop.f32.mrf.mxu0
        %v2027 = vadd.f32 %v1914, %v2026
        %v2028 = vand.u32 %v1783, 4294901760
        %2029 = vmatmul.f32.gmra.mxu0 %v2028
        %v2030 = vpop.f32.mrf.mxu0
        %v2031 = vadd.f32 %v1922, %v2030
        %v2032 = vand.u32 %v1786, 4294901760
        %2033 = vmatmul.f32.gmra.mxu0 %v2032
        %v2034 = vpop.f32.mrf.mxu0
        %v2035 = vadd.f32 %v1930, %v2034
        %v2036 = vand.u32 %v1789, 4294901760
        %2037 = vmatmul.f32.gmra.mxu0 %v2036
        %v2038 = vpop.f32.mrf.mxu0
        %v2039 = vadd.f32 %v1938, %v2038
        %2040 = vdwg.mxu0
        %2041 = vmatpush.msra.mxu0 0.0
        %2042 = vmatpush.msra.mxu0 0.0
        %2043 = vmatpush.msra.mxu0 0.0
        %2044 = vmatpush.msra.mxu0 0.0
        %2045 = vmatpush.msra.mxu0 0.0
        %2046 = vmatpush.msra.mxu0 0.0
        %2047 = vmatpush.msra.mxu0 0.0
        %2048 = vmatpush.msra.mxu0 0.0
        %2049 = vmatpush.msra.mxu0 0.0
        %2050 = vmatpush.msra.mxu0 0.0
        %2051 = vmatpush.msra.mxu0 0.0
        %2052 = vmatpush.msra.mxu0 0.0
        %v2053 = vand.u32 %v345, 4294901760
        %v2054 = vsub.f32 %v345, %v2053
        %2055 = vmatpush.msra.mxu0 %v2054
        %v2056 = vand.u32 %v344, 4294901760
        %v2057 = vsub.f32 %v344, %v2056
        %2058 = vmatpush.msra.mxu0 %v2057
        %v2059 = vand.u32 %v343, 4294901760
        %v2060 = vsub.f32 %v343, %v2059
        %2061 = vmatpush.msra.mxu0 %v2060
        %v2062 = vand.u32 %v342, 4294901760
        %v2063 = vsub.f32 %v342, %v2062
        %2064 = vmatpush.msra.mxu0 %v2063
        %v2065 = vand.u32 %v1744, 4294901760
        %v2066 = vsub.f32 %v1744, %v2065
        %2067 = vmatmul.f32.gmra.mxu0 %v2066
        %v2068 = vpop.f32.mrf.mxu0
        %v2069 = vadd.f32 %v1979, %v2068
        %v2070 = vand.u32 %v1747, 4294901760
        %v2071 = vsub.f32 %v1747, %v2070
        %2072 = vmatmul.f32.gmra.mxu0 %v2071
        %v2073 = vpop.f32.mrf.mxu0
        %v2074 = vadd.f32 %v1983, %v2073
        %v2075 = vand.u32 %v1750, 4294901760
        %v2076 = vsub.f32 %v1750, %v2075
        %2077 = vmatmul.f32.gmra.mxu0 %v2076
        %v2078 = vpop.f32.mrf.mxu0
        %v2079 = vadd.f32 %v1987, %v2078
        %v2080 = vand.u32 %v1753, 4294901760
        %v2081 = vsub.f32 %v1753, %v2080
        %2082 = vmatmul.f32.gmra.mxu0 %v2081
        %v2083 = vpop.f32.mrf.mxu0
        %v2084 = vadd.f32 %v1991, %v2083
        %v2085 = vand.u32 %v1756, 4294901760
        %v2086 = vsub.f32 %v1756, %v2085
        %2087 = vmatmul.f32.gmra.mxu0 %v2086
        %v2088 = vpop.f32.mrf.mxu0
        %v2089 = vadd.f32 %v1995, %v2088
        %v2090 = vand.u32 %v1759, 4294901760
        %v2091 = vsub.f32 %v1759, %v2090
        %2092 = vmatmul.f32.gmra.mxu0 %v2091
        %v2093 = vpop.f32.mrf.mxu0
        %v2094 = vadd.f32 %v1999, %v2093
        %v2095 = vand.u32 %v1762, 4294901760
        %v2096 = vsub.f32 %v1762, %v2095
        %2097 = vmatmul.f32.gmra.mxu0 %v2096
        %v2098 = vpop.f32.mrf.mxu0
        %v2099 = vadd.f32 %v2003, %v2098
        %v2100 = vand.u32 %v1765, 4294901760
        %v2101 = vsub.f32 %v1765, %v2100
        %2102 = vmatmul.f32.gmra.mxu0 %v2101
        %v2103 = vpop.f32.mrf.mxu0
        %v2104 = vadd.f32 %v2007, %v2103
        %v2105 = vand.u32 %v1768, 4294901760
        %v2106 = vsub.f32 %v1768, %v2105
        %2107 = vmatmul.f32.gmra.mxu0 %v2106
        %v2108 = vpop.f32.mrf.mxu0
        %v2109 = vadd.f32 %v2011, %v2108
        %v2110 = vand.u32 %v1771, 4294901760
        %v2111 = vsub.f32 %v1771, %v2110
        %2112 = vmatmul.f32.gmra.mxu0 %v2111
        %v2113 = vpop.f32.mrf.mxu0
        %v2114 = vadd.f32 %v2015, %v2113
        %v2115 = vand.u32 %v1774, 4294901760
        %v2116 = vsub.f32 %v1774, %v2115
        %2117 = vmatmul.f32.gmra.mxu0 %v2116
        %v2118 = vpop.f32.mrf.mxu0
        %v2119 = vadd.f32 %v2019, %v2118
        %v2120 = vand.u32 %v1777, 4294901760
        %v2121 = vsub.f32 %v1777, %v2120
        %2122 = vmatmul.f32.gmra.mxu0 %v2121
        %v2123 = vpop.f32.mrf.mxu0
        %v2124 = vadd.f32 %v2023, %v2123
        %v2125 = vand.u32 %v1780, 4294901760
        %v2126 = vsub.f32 %v1780, %v2125
        %2127 = vmatmul.f32.gmra.mxu0 %v2126
        %v2128 = vpop.f32.mrf.mxu0
        %v2129 = vadd.f32 %v2027, %v2128
        %v2130 = vand.u32 %v1783, 4294901760
        %v2131 = vsub.f32 %v1783, %v2130
        %2132 = vmatmul.f32.gmra.mxu0 %v2131
        %v2133 = vpop.f32.mrf.mxu0
        %v2134 = vadd.f32 %v2031, %v2133
        %v2135 = vand.u32 %v1786, 4294901760
        %v2136 = vsub.f32 %v1786, %v2135
        %2137 = vmatmul.f32.gmra.mxu0 %v2136
        %v2138 = vpop.f32.mrf.mxu0
        %v2139 = vadd.f32 %v2035, %v2138
        %v2140 = vand.u32 %v1789, 4294901760
        %v2141 = vsub.f32 %v1789, %v2140
        %2142 = vmatmul.f32.gmra.mxu0 %v2141
        %v2143 = vpop.f32.mrf.mxu0
        %v2144 = vadd.f32 %v2039, %v2143
        %2145 = vdwg.mxu0
        %2146 = vmatpush.msra.mxu0 0.0
        %2147 = vmatpush.msra.mxu0 0.0
        %2148 = vmatpush.msra.mxu0 0.0
        %2149 = vmatpush.msra.mxu0 0.0
        %2150 = vmatpush.msra.mxu0 0.0
        %2151 = vmatpush.msra.mxu0 0.0
        %2152 = vmatpush.msra.mxu0 0.0
        %2153 = vmatpush.msra.mxu0 0.0
        %2154 = vmatpush.msra.mxu0 0.0
        %2155 = vmatpush.msra.mxu0 0.0
        %2156 = vmatpush.msra.mxu0 0.0
        %2157 = vmatpush.msra.mxu0 0.0
        %v2158 = vand.u32 %v345, 4294901760
        %2159 = vmatpush.msra.mxu0 %v2158
        %v2160 = vand.u32 %v344, 4294901760
        %2161 = vmatpush.msra.mxu0 %v2160
        %v2162 = vand.u32 %v343, 4294901760
        %2163 = vmatpush.msra.mxu0 %v2162
        %v2164 = vand.u32 %v342, 4294901760
        %2165 = vmatpush.msra.mxu0 %v2164
        %v2166 = vand.u32 %v1744, 4294901760
        %v2167 = vsub.f32 %v1744, %v2166
        %v2168 = vand.u32 %v2167, 4294901760
        %2169 = vmatmul.f32.gmra.mxu0 %v2168
        %v2170 = vpop.f32.mrf.mxu0
        %v2171 = vadd.f32 %v2069, %v2170
        %v2172 = vand.u32 %v1747, 4294901760
        %v2173 = vsub.f32 %v1747, %v2172
        %v2174 = vand.u32 %v2173, 4294901760
        %2175 = vmatmul.f32.gmra.mxu0 %v2174
        %v2176 = vpop.f32.mrf.mxu0
        %v2177 = vadd.f32 %v2074, %v2176
        %v2178 = vand.u32 %v1750, 4294901760
        %v2179 = vsub.f32 %v1750, %v2178
        %v2180 = vand.u32 %v2179, 4294901760
        %2181 = vmatmul.f32.gmra.mxu0 %v2180
        %v2182 = vpop.f32.mrf.mxu0
        %v2183 = vadd.f32 %v2079, %v2182
        %v2184 = vand.u32 %v1753, 4294901760
        %v2185 = vsub.f32 %v1753, %v2184
        %v2186 = vand.u32 %v2185, 4294901760
        %2187 = vmatmul.f32.gmra.mxu0 %v2186
        %v2188 = vpop.f32.mrf.mxu0
        %v2189 = vadd.f32 %v2084, %v2188
        %v2190 = vand.u32 %v1756, 4294901760
        %v2191 = vsub.f32 %v1756, %v2190
        %v2192 = vand.u32 %v2191, 4294901760
        %2193 = vmatmul.f32.gmra.mxu0 %v2192
        %v2194 = vpop.f32.mrf.mxu0
        %v2195 = vadd.f32 %v2089, %v2194
        %v2196 = vand.u32 %v1759, 4294901760
        %v2197 = vsub.f32 %v1759, %v2196
        %v2198 = vand.u32 %v2197, 4294901760
        %2199 = vmatmul.f32.gmra.mxu0 %v2198
        %v2200 = vpop.f32.mrf.mxu0
        %v2201 = vadd.f32 %v2094, %v2200
        %v2202 = vand.u32 %v1762, 4294901760
        %v2203 = vsub.f32 %v1762, %v2202
        %v2204 = vand.u32 %v2203, 4294901760
        %2205 = vmatmul.f32.gmra.mxu0 %v2204
        %v2206 = vpop.f32.mrf.mxu0
        %v2207 = vadd.f32 %v2099, %v2206
        %v2208 = vand.u32 %v1765, 4294901760
        %v2209 = vsub.f32 %v1765, %v2208
        %v2210 = vand.u32 %v2209, 4294901760
        %2211 = vmatmul.f32.gmra.mxu0 %v2210
        %v2212 = vpop.f32.mrf.mxu0
        %v2213 = vadd.f32 %v2104, %v2212
        %v2214 = vand.u32 %v1768, 4294901760
        %v2215 = vsub.f32 %v1768, %v2214
        %v2216 = vand.u32 %v2215, 4294901760
        %2217 = vmatmul.f32.gmra.mxu0 %v2216
        %v2218 = vpop.f32.mrf.mxu0
        %v2219 = vadd.f32 %v2109, %v2218
        %v2220 = vand.u32 %v1771, 4294901760
        %v2221 = vsub.f32 %v1771, %v2220
        %v2222 = vand.u32 %v2221, 4294901760
        %2223 = vmatmul.f32.gmra.mxu0 %v2222
        %v2224 = vpop.f32.mrf.mxu0
        %v2225 = vadd.f32 %v2114, %v2224
        %v2226 = vand.u32 %v1774, 4294901760
        %v2227 = vsub.f32 %v1774, %v2226
        %v2228 = vand.u32 %v2227, 4294901760
        %2229 = vmatmul.f32.gmra.mxu0 %v2228
        %v2230 = vpop.f32.mrf.mxu0
        %v2231 = vadd.f32 %v2119, %v2230
        %v2232 = vand.u32 %v1777, 4294901760
        %v2233 = vsub.f32 %v1777, %v2232
        %v2234 = vand.u32 %v2233, 4294901760
        %2235 = vmatmul.f32.gmra.mxu0 %v2234
        %v2236 = vpop.f32.mrf.mxu0
        %v2237 = vadd.f32 %v2124, %v2236
        %v2238 = vand.u32 %v1780, 4294901760
        %v2239 = vsub.f32 %v1780, %v2238
        %v2240 = vand.u32 %v2239, 4294901760
        %2241 = vmatmul.f32.gmra.mxu0 %v2240
        %v2242 = vpop.f32.mrf.mxu0
        %v2243 = vadd.f32 %v2129, %v2242
        %v2244 = vand.u32 %v1783, 4294901760
        %v2245 = vsub.f32 %v1783, %v2244
        %v2246 = vand.u32 %v2245, 4294901760
        %2247 = vmatmul.f32.gmra.mxu0 %v2246
        %v2248 = vpop.f32.mrf.mxu0
        %v2249 = vadd.f32 %v2134, %v2248
        %v2250 = vand.u32 %v1786, 4294901760
        %v2251 = vsub.f32 %v1786, %v2250
        %v2252 = vand.u32 %v2251, 4294901760
        %2253 = vmatmul.f32.gmra.mxu0 %v2252
        %v2254 = vpop.f32.mrf.mxu0
        %v2255 = vadd.f32 %v2139, %v2254
        %v2256 = vand.u32 %v1789, 4294901760
        %v2257 = vsub.f32 %v1789, %v2256
        %v2258 = vand.u32 %v2257, 4294901760
        %2259 = vmatmul.f32.gmra.mxu0 %v2258
        %v2260 = vpop.f32.mrf.mxu0
        %v2261 = vadd.f32 %v2144, %v2260
        %2262 = vdwg.mxu0
        %2263 = vmatpush.msra.mxu0 0.0
        %2264 = vmatpush.msra.mxu0 0.0
        %2265 = vmatpush.msra.mxu0 0.0
        %2266 = vmatpush.msra.mxu0 0.0
        %2267 = vmatpush.msra.mxu0 0.0
        %2268 = vmatpush.msra.mxu0 0.0
        %2269 = vmatpush.msra.mxu0 0.0
        %2270 = vmatpush.msra.mxu0 0.0
        %2271 = vmatpush.msra.mxu0 0.0
        %2272 = vmatpush.msra.mxu0 0.0
        %2273 = vmatpush.msra.mxu0 0.0
        %2274 = vmatpush.msra.mxu0 0.0
        %v2275 = vand.u32 %v345, 4294901760
        %v2276 = vsub.f32 %v345, %v2275
        %v2277 = vand.u32 %v2276, 4294901760
        %2278 = vmatpush.msra.mxu0 %v2277
        %v2279 = vand.u32 %v344, 4294901760
        %v2280 = vsub.f32 %v344, %v2279
        %v2281 = vand.u32 %v2280, 4294901760
        %2282 = vmatpush.msra.mxu0 %v2281
        %v2283 = vand.u32 %v343, 4294901760
        %v2284 = vsub.f32 %v343, %v2283
        %v2285 = vand.u32 %v2284, 4294901760
        %2286 = vmatpush.msra.mxu0 %v2285
        %v2287 = vand.u32 %v342, 4294901760
        %v2288 = vsub.f32 %v342, %v2287
        %v2289 = vand.u32 %v2288, 4294901760
        %2290 = vmatpush.msra.mxu0 %v2289
        %v2291 = vand.u32 %v1744, 4294901760
        %2292 = vmatmul.f32.gmra.mxu0 %v2291
        %v2293 = vpop.f32.mrf.mxu0
        %v2294 = vadd.f32 %v2171, %v2293
        %v2295 = vand.u32 %v1747, 4294901760
        %2296 = vmatmul.f32.gmra.mxu0 %v2295
        %v2297 = vpop.f32.mrf.mxu0
        %v2298 = vadd.f32 %v2177, %v2297
        %v2299 = vand.u32 %v1750, 4294901760
        %2300 = vmatmul.f32.gmra.mxu0 %v2299
        %v2301 = vpop.f32.mrf.mxu0
        %v2302 = vadd.f32 %v2183, %v2301
        %v2303 = vand.u32 %v1753, 4294901760
        %2304 = vmatmul.f32.gmra.mxu0 %v2303
        %v2305 = vpop.f32.mrf.mxu0
        %v2306 = vadd.f32 %v2189, %v2305
        %v2307 = vand.u32 %v1756, 4294901760
        %2308 = vmatmul.f32.gmra.mxu0 %v2307
        %v2309 = vpop.f32.mrf.mxu0
        %v2310 = vadd.f32 %v2195, %v2309
        %v2311 = vand.u32 %v1759, 4294901760
        %2312 = vmatmul.f32.gmra.mxu0 %v2311
        %v2313 = vpop.f32.mrf.mxu0
        %v2314 = vadd.f32 %v2201, %v2313
        %v2315 = vand.u32 %v1762, 4294901760
        %2316 = vmatmul.f32.gmra.mxu0 %v2315
        %v2317 = vpop.f32.mrf.mxu0
        %v2318 = vadd.f32 %v2207, %v2317
        %v2319 = vand.u32 %v1765, 4294901760
        %2320 = vmatmul.f32.gmra.mxu0 %v2319
        %v2321 = vpop.f32.mrf.mxu0
        %v2322 = vadd.f32 %v2213, %v2321
        %v2323 = vand.u32 %v1768, 4294901760
        %2324 = vmatmul.f32.gmra.mxu0 %v2323
        %v2325 = vpop.f32.mrf.mxu0
        %v2326 = vadd.f32 %v2219, %v2325
        %v2327 = vand.u32 %v1771, 4294901760
        %2328 = vmatmul.f32.gmra.mxu0 %v2327
        %v2329 = vpop.f32.mrf.mxu0
        %v2330 = vadd.f32 %v2225, %v2329
        %v2331 = vand.u32 %v1774, 4294901760
        %2332 = vmatmul.f32.gmra.mxu0 %v2331
        %v2333 = vpop.f32.mrf.mxu0
        %v2334 = vadd.f32 %v2231, %v2333
        %v2335 = vand.u32 %v1777, 4294901760
        %2336 = vmatmul.f32.gmra.mxu0 %v2335
        %v2337 = vpop.f32.mrf.mxu0
        %v2338 = vadd.f32 %v2237, %v2337
        %v2339 = vand.u32 %v1780, 4294901760
        %2340 = vmatmul.f32.gmra.mxu0 %v2339
        %v2341 = vpop.f32.mrf.mxu0
        %v2342 = vadd.f32 %v2243, %v2341
        %v2343 = vand.u32 %v1783, 4294901760
        %2344 = vmatmul.f32.gmra.mxu0 %v2343
        %v2345 = vpop.f32.mrf.mxu0
        %v2346 = vadd.f32 %v2249, %v2345
        %v2347 = vand.u32 %v1786, 4294901760
        %2348 = vmatmul.f32.gmra.mxu0 %v2347
        %v2349 = vpop.f32.mrf.mxu0
        %v2350 = vadd.f32 %v2255, %v2349
        %v2351 = vand.u32 %v1789, 4294901760
        %2352 = vmatmul.f32.gmra.mxu0 %v2351
        %v2353 = vpop.f32.mrf.mxu0
        %v2354 = vadd.f32 %v2261, %v2353
        %2355 = vdwg.mxu0
        %2356 = vmatpush.msra.mxu0 0.0
        %2357 = vmatpush.msra.mxu0 0.0
        %2358 = vmatpush.msra.mxu0 0.0
        %2359 = vmatpush.msra.mxu0 0.0
        %2360 = vmatpush.msra.mxu0 0.0
        %2361 = vmatpush.msra.mxu0 0.0
        %2362 = vmatpush.msra.mxu0 0.0
        %2363 = vmatpush.msra.mxu0 0.0
        %2364 = vmatpush.msra.mxu0 0.0
        %2365 = vmatpush.msra.mxu0 0.0
        %2366 = vmatpush.msra.mxu0 0.0
        %2367 = vmatpush.msra.mxu0 0.0
        %v2368 = vand.u32 %v345, 4294901760
        %2369 = vmatpush.msra.mxu0 %v2368
        %v2370 = vand.u32 %v344, 4294901760
        %2371 = vmatpush.msra.mxu0 %v2370
        %v2372 = vand.u32 %v343, 4294901760
        %2373 = vmatpush.msra.mxu0 %v2372
        %v2374 = vand.u32 %v342, 4294901760
        %2375 = vmatpush.msra.mxu0 %v2374
        %v2376 = vand.u32 %v1744, 4294901760
        %2377 = vmatmul.f32.gmra.mxu0 %v2376
        %v2378 = vpop.f32.mrf.mxu0
        %v2379 = vadd.f32 %v2294, %v2378
        %v2380 = vand.u32 %v1747, 4294901760
        %2381 = vmatmul.f32.gmra.mxu0 %v2380
        %v2382 = vpop.f32.mrf.mxu0
        %v2383 = vadd.f32 %v2298, %v2382
        %v2384 = vand.u32 %v1750, 4294901760
        %2385 = vmatmul.f32.gmra.mxu0 %v2384
        %v2386 = vpop.f32.mrf.mxu0
        %v2387 = vadd.f32 %v2302, %v2386
        %v2388 = vand.u32 %v1753, 4294901760
        %2389 = vmatmul.f32.gmra.mxu0 %v2388
        %v2390 = vpop.f32.mrf.mxu0
        %v2391 = vadd.f32 %v2306, %v2390
        %v2392 = vand.u32 %v1756, 4294901760
        %2393 = vmatmul.f32.gmra.mxu0 %v2392
        %v2394 = vpop.f32.mrf.mxu0
        %v2395 = vadd.f32 %v2310, %v2394
        %v2396 = vand.u32 %v1759, 4294901760
        %2397 = vmatmul.f32.gmra.mxu0 %v2396
        %v2398 = vpop.f32.mrf.mxu0
        %v2399 = vadd.f32 %v2314, %v2398
        %v2400 = vand.u32 %v1762, 4294901760
        %2401 = vmatmul.f32.gmra.mxu0 %v2400
        %v2402 = vpop.f32.mrf.mxu0
        %v2403 = vadd.f32 %v2318, %v2402
        %v2404 = vand.u32 %v1765, 4294901760
        %2405 = vmatmul.f32.gmra.mxu0 %v2404
        %v2406 = vpop.f32.mrf.mxu0
        %v2407 = vadd.f32 %v2322, %v2406
        %v2408 = vand.u32 %v1768, 4294901760
        %2409 = vmatmul.f32.gmra.mxu0 %v2408
        %v2410 = vpop.f32.mrf.mxu0
        %v2411 = vadd.f32 %v2326, %v2410
        %v2412 = vand.u32 %v1771, 4294901760
        %2413 = vmatmul.f32.gmra.mxu0 %v2412
        %v2414 = vpop.f32.mrf.mxu0
        %v2415 = vadd.f32 %v2330, %v2414
        %v2416 = vand.u32 %v1774, 4294901760
        %2417 = vmatmul.f32.gmra.mxu0 %v2416
        %v2418 = vpop.f32.mrf.mxu0
        %v2419 = vadd.f32 %v2334, %v2418
        %v2420 = vand.u32 %v1777, 4294901760
        %2421 = vmatmul.f32.gmra.mxu0 %v2420
        %v2422 = vpop.f32.mrf.mxu0
        %v2423 = vadd.f32 %v2338, %v2422
        %v2424 = vand.u32 %v1780, 4294901760
        %2425 = vmatmul.f32.gmra.mxu0 %v2424
        %v2426 = vpop.f32.mrf.mxu0
        %v2427 = vadd.f32 %v2342, %v2426
        %v2428 = vand.u32 %v1783, 4294901760
        %2429 = vmatmul.f32.gmra.mxu0 %v2428
        %v2430 = vpop.f32.mrf.mxu0
        %v2431 = vadd.f32 %v2346, %v2430
        %v2432 = vand.u32 %v1786, 4294901760
        %2433 = vmatmul.f32.gmra.mxu0 %v2432
        %v2434 = vpop.f32.mrf.mxu0
        %v2435 = vadd.f32 %v2350, %v2434
        %v2436 = vand.u32 %v1789, 4294901760
        %2437 = vmatmul.f32.gmra.mxu0 %v2436
        %v2438 = vpop.f32.mrf.mxu0
        %v2439 = vadd.f32 %v2354, %v2438
        %2440 = vdwg.mxu0
        %v2441 = vadd.f32 %v1681, %v2379
        %v2442 = vadd.f32 %v1685, %v2383
        %v2443 = vadd.f32 %v1689, %v2387
        %v2444 = vadd.f32 %v1693, %v2391
        %v2445 = vadd.f32 %v1697, %v2395
        %v2446 = vadd.f32 %v1701, %v2399
        %v2447 = vadd.f32 %v1705, %v2403
        %v2448 = vadd.f32 %v1709, %v2407
        %v2449 = vadd.f32 %v1713, %v2411
        %v2450 = vadd.f32 %v1717, %v2415
        %v2451 = vadd.f32 %v1721, %v2419
        %v2452 = vadd.f32 %v1725, %v2423
        %v2453 = vadd.f32 %v1729, %v2427
        %v2454 = vadd.f32 %v1733, %v2431
        %v2455 = vadd.f32 %v1737, %v2435
        %v2456 = vadd.f32 %v1741, %v2439
        %s2457 = sld [smem:[#allocation2]]
        %v2458 = vstv %s2457
        %v2459 = vadd.f32 %v2441, %v2458
        %v2460 = vadd.f32 %v2442, %v2458
        %v2461 = vadd.f32 %v2443, %v2458
        %v2462 = vadd.f32 %v2444, %v2458
        %v2463 = vadd.f32 %v2445, %v2458
        %v2464 = vadd.f32 %v2446, %v2458
        %v2465 = vadd.f32 %v2447, %v2458
        %v2466 = vadd.f32 %v2448, %v2458
        %v2467 = vadd.f32 %v2449, %v2458
        %v2468 = vadd.f32 %v2450, %v2458
        %v2469 = vadd.f32 %v2451, %v2458
        %v2470 = vadd.f32 %v2452, %v2458
        %v2471 = vadd.f32 %v2453, %v2458
        %v2472 = vadd.f32 %v2454, %v2458
        %v2473 = vadd.f32 %v2455, %v2458
        %v2474 = vadd.f32 %v2456, %v2458
        %s2475 = sld [smem:[#allocation2 + $0x1]]
        %v2476 = vstv %s2475
        %v2477 = vadd.f32 %v2441, %v2476
        %v2478 = vadd.f32 %v2442, %v2476
        %v2479 = vadd.f32 %v2443, %v2476
        %v2480 = vadd.f32 %v2444, %v2476
        %v2481 = vadd.f32 %v2445, %v2476
        %v2482 = vadd.f32 %v2446, %v2476
        %v2483 = vadd.f32 %v2447, %v2476
        %v2484 = vadd.f32 %v2448, %v2476
        %v2485 = vadd.f32 %v2449, %v2476
        %v2486 = vadd.f32 %v2450, %v2476
        %v2487 = vadd.f32 %v2451, %v2476
        %v2488 = vadd.f32 %v2452, %v2476
        %v2489 = vadd.f32 %v2453, %v2476
        %v2490 = vadd.f32 %v2454, %v2476
        %v2491 = vadd.f32 %v2455, %v2476
        %v2492 = vadd.f32 %v2456, %v2476
        %s2493 = sld [smem:[#allocation2 + $0x2]]
        %v2494 = vstv %s2493
        %v2495 = vadd.f32 %v2441, %v2494
        %v2496 = vadd.f32 %v2442, %v2494
        %v2497 = vadd.f32 %v2443, %v2494
        %v2498 = vadd.f32 %v2444, %v2494
        %v2499 = vadd.f32 %v2445, %v2494
        %v2500 = vadd.f32 %v2446, %v2494
        %v2501 = vadd.f32 %v2447, %v2494
        %v2502 = vadd.f32 %v2448, %v2494
        %v2503 = vadd.f32 %v2449, %v2494
        %v2504 = vadd.f32 %v2450, %v2494
        %v2505 = vadd.f32 %v2451, %v2494
        %v2506 = vadd.f32 %v2452, %v2494
        %v2507 = vadd.f32 %v2453, %v2494
        %v2508 = vadd.f32 %v2454, %v2494
        %v2509 = vadd.f32 %v2455, %v2494
        %v2510 = vadd.f32 %v2456, %v2494
        %2527 = vrot.lane.b32.xlu0 %v2477, 127
        %v2528 = vpop.permute.xlu0 %2527
        %2529 = vrot.lane.b32.xlu0 %v2478, 127
        %v2530 = vpop.permute.xlu0 %2529
        %2531 = vrot.lane.b32.xlu0 %v2479, 127
        %v2532 = vpop.permute.xlu0 %2531
        %2533 = vrot.lane.b32.xlu0 %v2480, 127
        %v2534 = vpop.permute.xlu0 %2533
        %2535 = vrot.lane.b32.xlu0 %v2481, 127
        %v2536 = vpop.permute.xlu0 %2535
        %2537 = vrot.lane.b32.xlu0 %v2482, 127
        %v2538 = vpop.permute.xlu0 %2537
        %2539 = vrot.lane.b32.xlu0 %v2483, 127
        %v2540 = vpop.permute.xlu0 %2539
        %2541 = vrot.lane.b32.xlu0 %v2484, 127
        %v2542 = vpop.permute.xlu0 %2541
        %2543 = vrot.lane.b32.xlu0 %v2485, 127
        %v2544 = vpop.permute.xlu0 %2543
        %2545 = vrot.lane.b32.xlu0 %v2486, 127
        %v2546 = vpop.permute.xlu0 %2545
        %2547 = vrot.lane.b32.xlu0 %v2487, 127
        %v2548 = vpop.permute.xlu0 %2547
        %2549 = vrot.lane.b32.xlu0 %v2488, 127
        %v2550 = vpop.permute.xlu0 %2549
        %2551 = vrot.lane.b32.xlu0 %v2489, 127
        %v2552 = vpop.permute.xlu0 %2551
        %2553 = vrot.lane.b32.xlu0 %v2490, 127
        %v2554 = vpop.permute.xlu0 %2553
        %2555 = vrot.lane.b32.xlu0 %v2491, 127
        %v2556 = vpop.permute.xlu0 %2555
        %2557 = vrot.lane.b32.xlu0 %v2492, 127
        %v2558 = vpop.permute.xlu0 %2557
        %v2575 = vmax.f32 %v2459, %v2528
        %v2576 = vmax.f32 %v2460, %v2530
        %v2577 = vmax.f32 %v2461, %v2532
        %v2578 = vmax.f32 %v2462, %v2534
        %v2579 = vmax.f32 %v2463, %v2536
        %v2580 = vmax.f32 %v2464, %v2538
        %v2581 = vmax.f32 %v2465, %v2540
        %v2582 = vmax.f32 %v2466, %v2542
        %v2583 = vmax.f32 %v2467, %v2544
        %v2584 = vmax.f32 %v2468, %v2546
        %v2585 = vmax.f32 %v2469, %v2548
        %v2586 = vmax.f32 %v2470, %v2550
        %v2587 = vmax.f32 %v2471, %v2552
        %v2588 = vmax.f32 %v2472, %v2554
        %v2589 = vmax.f32 %v2473, %v2556
        %v2590 = vmax.f32 %v2474, %v2558
        %2607 = vrot.lane.b32.xlu0 %v2495, 126
        %v2608 = vpop.permute.xlu0 %2607
        %2609 = vrot.lane.b32.xlu0 %v2496, 126
        %v2610 = vpop.permute.xlu0 %2609
        %2611 = vrot.lane.b32.xlu0 %v2497, 126
        %v2612 = vpop.permute.xlu0 %2611
        %2613 = vrot.lane.b32.xlu0 %v2498, 126
        %v2614 = vpop.permute.xlu0 %2613
        %2615 = vrot.lane.b32.xlu0 %v2499, 126
        %v2616 = vpop.permute.xlu0 %2615
        %2617 = vrot.lane.b32.xlu0 %v2500, 126
        %v2618 = vpop.permute.xlu0 %2617
        %2619 = vrot.lane.b32.xlu0 %v2501, 126
        %v2620 = vpop.permute.xlu0 %2619
        %2621 = vrot.lane.b32.xlu0 %v2502, 126
        %v2622 = vpop.permute.xlu0 %2621
        %2623 = vrot.lane.b32.xlu0 %v2503, 126
        %v2624 = vpop.permute.xlu0 %2623
        %2625 = vrot.lane.b32.xlu0 %v2504, 126
        %v2626 = vpop.permute.xlu0 %2625
        %2627 = vrot.lane.b32.xlu0 %v2505, 126
        %v2628 = vpop.permute.xlu0 %2627
        %2629 = vrot.lane.b32.xlu0 %v2506, 126
        %v2630 = vpop.permute.xlu0 %2629
        %2631 = vrot.lane.b32.xlu0 %v2507, 126
        %v2632 = vpop.permute.xlu0 %2631
        %2633 = vrot.lane.b32.xlu0 %v2508, 126
        %v2634 = vpop.permute.xlu0 %2633
        %2635 = vrot.lane.b32.xlu0 %v2509, 126
        %v2636 = vpop.permute.xlu0 %2635
        %2637 = vrot.lane.b32.xlu0 %v2510, 126
        %v2638 = vpop.permute.xlu0 %2637
        %v2655 = vmax.f32 %v2575, %v2608
        %v2656 = vmax.f32 %v2576, %v2610
        %v2657 = vmax.f32 %v2577, %v2612
        %v2658 = vmax.f32 %v2578, %v2614
        %v2659 = vmax.f32 %v2579, %v2616
        %v2660 = vmax.f32 %v2580, %v2618
        %v2661 = vmax.f32 %v2581, %v2620
        %v2662 = vmax.f32 %v2582, %v2622
        %v2663 = vmax.f32 %v2583, %v2624
        %v2664 = vmax.f32 %v2584, %v2626
        %v2665 = vmax.f32 %v2585, %v2628
        %v2666 = vmax.f32 %v2586, %v2630
        %v2667 = vmax.f32 %v2587, %v2632
        %v2668 = vmax.f32 %v2588, %v2634
        %v2669 = vmax.f32 %v2589, %v2636
        %v2670 = vmax.f32 %v2590, %v2638
        %v2671 = vsub.f32 %v2459, %v2655
        %v2672 = vsub.f32 %v2460, %v2656
        %v2673 = vsub.f32 %v2461, %v2657
        %v2674 = vsub.f32 %v2462, %v2658
        %v2675 = vsub.f32 %v2463, %v2659
        %v2676 = vsub.f32 %v2464, %v2660
        %v2677 = vsub.f32 %v2465, %v2661
        %v2678 = vsub.f32 %v2466, %v2662
        %v2679 = vsub.f32 %v2467, %v2663
        %v2680 = vsub.f32 %v2468, %v2664
        %v2681 = vsub.f32 %v2469, %v2665
        %v2682 = vsub.f32 %v2470, %v2666
        %v2683 = vsub.f32 %v2471, %v2667
        %v2684 = vsub.f32 %v2472, %v2668
        %v2685 = vsub.f32 %v2473, %v2669
        %v2686 = vsub.f32 %v2474, %v2670
        %v2687 = vmul.f32 %v2671, 1.442695
        %v2688 = vpow.pop %v2687
        %v2689 = vmul.f32 %v2672, 1.442695
        %v2690 = vpow.pop %v2689
        %v2691 = vmul.f32 %v2673, 1.442695
        %v2692 = vpow.pop %v2691
        %v2693 = vmul.f32 %v2674, 1.442695
        %v2694 = vpow.pop %v2693
        %v2695 = vmul.f32 %v2675, 1.442695
        %v2696 = vpow.pop %v2695
        %v2697 = vmul.f32 %v2676, 1.442695
        %v2698 = vpow.pop %v2697
        %v2699 = vmul.f32 %v2677, 1.442695
        %v2700 = vpow.pop %v2699
        %v2701 = vmul.f32 %v2678, 1.442695
        %v2702 = vpow.pop %v2701
        %v2703 = vmul.f32 %v2679, 1.442695
        %v2704 = vpow.pop %v2703
        %v2705 = vmul.f32 %v2680, 1.442695
        %v2706 = vpow.pop %v2705
        %v2707 = vmul.f32 %v2681, 1.442695
        %v2708 = vpow.pop %v2707
        %v2709 = vmul.f32 %v2682, 1.442695
        %v2710 = vpow.pop %v2709
        %v2711 = vmul.f32 %v2683, 1.442695
        %v2712 = vpow.pop %v2711
        %v2713 = vmul.f32 %v2684, 1.442695
        %v2714 = vpow.pop %v2713
        %v2715 = vmul.f32 %v2685, 1.442695
        %v2716 = vpow.pop %v2715
        %v2717 = vmul.f32 %v2686, 1.442695
        %v2718 = vpow.pop %v2717
        %2735 = vrot.lane.b32.xlu0 %v2655, 1
        %v2736 = vpop.permute.xlu0 %2735
        %2737 = vrot.lane.b32.xlu0 %v2656, 1
        %v2738 = vpop.permute.xlu0 %2737
        %2739 = vrot.lane.b32.xlu0 %v2657, 1
        %v2740 = vpop.permute.xlu0 %2739
        %2741 = vrot.lane.b32.xlu0 %v2658, 1
        %v2742 = vpop.permute.xlu0 %2741
        %2743 = vrot.lane.b32.xlu0 %v2659, 1
        %v2744 = vpop.permute.xlu0 %2743
        %2745 = vrot.lane.b32.xlu0 %v2660, 1
        %v2746 = vpop.permute.xlu0 %2745
        %2747 = vrot.lane.b32.xlu0 %v2661, 1
        %v2748 = vpop.permute.xlu0 %2747
        %2749 = vrot.lane.b32.xlu0 %v2662, 1
        %v2750 = vpop.permute.xlu0 %2749
        %2751 = vrot.lane.b32.xlu0 %v2663, 1
        %v2752 = vpop.permute.xlu0 %2751
        %2753 = vrot.lane.b32.xlu0 %v2664, 1
        %v2754 = vpop.permute.xlu0 %2753
        %2755 = vrot.lane.b32.xlu0 %v2665, 1
        %v2756 = vpop.permute.xlu0 %2755
        %2757 = vrot.lane.b32.xlu0 %v2666, 1
        %v2758 = vpop.permute.xlu0 %2757
        %2759 = vrot.lane.b32.xlu0 %v2667, 1
        %v2760 = vpop.permute.xlu0 %2759
        %2761 = vrot.lane.b32.xlu0 %v2668, 1
        %v2762 = vpop.permute.xlu0 %2761
        %2763 = vrot.lane.b32.xlu0 %v2669, 1
        %v2764 = vpop.permute.xlu0 %2763
        %2765 = vrot.lane.b32.xlu0 %v2670, 1
        %v2766 = vpop.permute.xlu0 %2765
        %v2783 = vsub.f32 %v2477, %v2736
        %v2784 = vsub.f32 %v2478, %v2738
        %v2785 = vsub.f32 %v2479, %v2740
        %v2786 = vsub.f32 %v2480, %v2742
        %v2787 = vsub.f32 %v2481, %v2744
        %v2788 = vsub.f32 %v2482, %v2746
        %v2789 = vsub.f32 %v2483, %v2748
        %v2790 = vsub.f32 %v2484, %v2750
        %v2791 = vsub.f32 %v2485, %v2752
        %v2792 = vsub.f32 %v2486, %v2754
        %v2793 = vsub.f32 %v2487, %v2756
        %v2794 = vsub.f32 %v2488, %v2758
        %v2795 = vsub.f32 %v2489, %v2760
        %v2796 = vsub.f32 %v2490, %v2762
        %v2797 = vsub.f32 %v2491, %v2764
        %v2798 = vsub.f32 %v2492, %v2766
        %v2799 = vmul.f32 %v2783, 1.442695
        %v2800 = vpow.pop %v2799
        %v2801 = vmul.f32 %v2784, 1.442695
        %v2802 = vpow.pop %v2801
        %v2803 = vmul.f32 %v2785, 1.442695
        %v2804 = vpow.pop %v2803
        %v2805 = vmul.f32 %v2786, 1.442695
        %v2806 = vpow.pop %v2805
        %v2807 = vmul.f32 %v2787, 1.442695
        %v2808 = vpow.pop %v2807
        %v2809 = vmul.f32 %v2788, 1.442695
        %v2810 = vpow.pop %v2809
        %v2811 = vmul.f32 %v2789, 1.442695
        %v2812 = vpow.pop %v2811
        %v2813 = vmul.f32 %v2790, 1.442695
        %v2814 = vpow.pop %v2813
        %v2815 = vmul.f32 %v2791, 1.442695
        %v2816 = vpow.pop %v2815
        %v2817 = vmul.f32 %v2792, 1.442695
        %v2818 = vpow.pop %v2817
        %v2819 = vmul.f32 %v2793, 1.442695
        %v2820 = vpow.pop %v2819
        %v2821 = vmul.f32 %v2794, 1.442695
        %v2822 = vpow.pop %v2821
        %v2823 = vmul.f32 %v2795, 1.442695
        %v2824 = vpow.pop %v2823
        %v2825 = vmul.f32 %v2796, 1.442695
        %v2826 = vpow.pop %v2825
        %v2827 = vmul.f32 %v2797, 1.442695
        %v2828 = vpow.pop %v2827
        %v2829 = vmul.f32 %v2798, 1.442695
        %v2830 = vpow.pop %v2829
        %2831 = vrot.lane.b32.xlu0 %v2655, 2
        %v2832 = vpop.permute.xlu0 %2831
        %2833 = vrot.lane.b32.xlu0 %v2656, 2
        %v2834 = vpop.permute.xlu0 %2833
        %2835 = vrot.lane.b32.xlu0 %v2657, 2
        %v2836 = vpop.permute.xlu0 %2835
        %2837 = vrot.lane.b32.xlu0 %v2658, 2
        %v2838 = vpop.permute.xlu0 %2837
        %2839 = vrot.lane.b32.xlu0 %v2659, 2
        %v2840 = vpop.permute.xlu0 %2839
        %2841 = vrot.lane.b32.xlu0 %v2660, 2
        %v2842 = vpop.permute.xlu0 %2841
        %2843 = vrot.lane.b32.xlu0 %v2661, 2
        %v2844 = vpop.permute.xlu0 %2843
        %2845 = vrot.lane.b32.xlu0 %v2662, 2
        %v2846 = vpop.permute.xlu0 %2845
        %2847 = vrot.lane.b32.xlu0 %v2663, 2
        %v2848 = vpop.permute.xlu0 %2847
        %2849 = vrot.lane.b32.xlu0 %v2664, 2
        %v2850 = vpop.permute.xlu0 %2849
        %2851 = vrot.lane.b32.xlu0 %v2665, 2
        %v2852 = vpop.permute.xlu0 %2851
        %2853 = vrot.lane.b32.xlu0 %v2666, 2
        %v2854 = vpop.permute.xlu0 %2853
        %2855 = vrot.lane.b32.xlu0 %v2667, 2
        %v2856 = vpop.permute.xlu0 %2855
        %2857 = vrot.lane.b32.xlu0 %v2668, 2
        %v2858 = vpop.permute.xlu0 %2857
        %2859 = vrot.lane.b32.xlu0 %v2669, 2
        %v2860 = vpop.permute.xlu0 %2859
        %2861 = vrot.lane.b32.xlu0 %v2670, 2
        %v2862 = vpop.permute.xlu0 %2861
        %v2879 = vsub.f32 %v2495, %v2832
        %v2880 = vsub.f32 %v2496, %v2834
        %v2881 = vsub.f32 %v2497, %v2836
        %v2882 = vsub.f32 %v2498, %v2838
        %v2883 = vsub.f32 %v2499, %v2840
        %v2884 = vsub.f32 %v2500, %v2842
        %v2885 = vsub.f32 %v2501, %v2844
        %v2886 = vsub.f32 %v2502, %v2846
        %v2887 = vsub.f32 %v2503, %v2848
        %v2888 = vsub.f32 %v2504, %v2850
        %v2889 = vsub.f32 %v2505, %v2852
        %v2890 = vsub.f32 %v2506, %v2854
        %v2891 = vsub.f32 %v2507, %v2856
        %v2892 = vsub.f32 %v2508, %v2858
        %v2893 = vsub.f32 %v2509, %v2860
        %v2894 = vsub.f32 %v2510, %v2862
        %v2895 = vmul.f32 %v2879, 1.442695
        %v2896 = vpow.pop %v2895
        %v2897 = vmul.f32 %v2880, 1.442695
        %v2898 = vpow.pop %v2897
        %v2899 = vmul.f32 %v2881, 1.442695
        %v2900 = vpow.pop %v2899
        %v2901 = vmul.f32 %v2882, 1.442695
        %v2902 = vpow.pop %v2901
        %v2903 = vmul.f32 %v2883, 1.442695
        %v2904 = vpow.pop %v2903
        %v2905 = vmul.f32 %v2884, 1.442695
        %v2906 = vpow.pop %v2905
        %v2907 = vmul.f32 %v2885, 1.442695
        %v2908 = vpow.pop %v2907
        %v2909 = vmul.f32 %v2886, 1.442695
        %v2910 = vpow.pop %v2909
        %v2911 = vmul.f32 %v2887, 1.442695
        %v2912 = vpow.pop %v2911
        %v2913 = vmul.f32 %v2888, 1.442695
        %v2914 = vpow.pop %v2913
        %v2915 = vmul.f32 %v2889, 1.442695
        %v2916 = vpow.pop %v2915
        %v2917 = vmul.f32 %v2890, 1.442695
        %v2918 = vpow.pop %v2917
        %v2919 = vmul.f32 %v2891, 1.442695
        %v2920 = vpow.pop %v2919
        %v2921 = vmul.f32 %v2892, 1.442695
        %v2922 = vpow.pop %v2921
        %v2923 = vmul.f32 %v2893, 1.442695
        %v2924 = vpow.pop %v2923
        %v2925 = vmul.f32 %v2894, 1.442695
        %v2926 = vpow.pop %v2925
        %2943 = vrot.lane.b32.xlu0 %v2800, 127
        %v2944 = vpop.permute.xlu0 %2943
        %2945 = vrot.lane.b32.xlu0 %v2802, 127
        %v2946 = vpop.permute.xlu0 %2945
        %2947 = vrot.lane.b32.xlu0 %v2804, 127
        %v2948 = vpop.permute.xlu0 %2947
        %2949 = vrot.lane.b32.xlu0 %v2806, 127
        %v2950 = vpop.permute.xlu0 %2949
        %2951 = vrot.lane.b32.xlu0 %v2808, 127
        %v2952 = vpop.permute.xlu0 %2951
        %2953 = vrot.lane.b32.xlu0 %v2810, 127
        %v2954 = vpop.permute.xlu0 %2953
        %2955 = vrot.lane.b32.xlu0 %v2812, 127
        %v2956 = vpop.permute.xlu0 %2955
        %2957 = vrot.lane.b32.xlu0 %v2814, 127
        %v2958 = vpop.permute.xlu0 %2957
        %2959 = vrot.lane.b32.xlu0 %v2816, 127
        %v2960 = vpop.permute.xlu0 %2959
        %2961 = vrot.lane.b32.xlu0 %v2818, 127
        %v2962 = vpop.permute.xlu0 %2961
        %2963 = vrot.lane.b32.xlu0 %v2820, 127
        %v2964 = vpop.permute.xlu0 %2963
        %2965 = vrot.lane.b32.xlu0 %v2822, 127
        %v2966 = vpop.permute.xlu0 %2965
        %2967 = vrot.lane.b32.xlu0 %v2824, 127
        %v2968 = vpop.permute.xlu0 %2967
        %2969 = vrot.lane.b32.xlu0 %v2826, 127
        %v2970 = vpop.permute.xlu0 %2969
        %2971 = vrot.lane.b32.xlu0 %v2828, 127
        %v2972 = vpop.permute.xlu0 %2971
        %2973 = vrot.lane.b32.xlu0 %v2830, 127
        %v2974 = vpop.permute.xlu0 %2973
        %v2991 = vadd.f32 %v2688, %v2944
        %v2992 = vadd.f32 %v2690, %v2946
        %v2993 = vadd.f32 %v2692, %v2948
        %v2994 = vadd.f32 %v2694, %v2950
        %v2995 = vadd.f32 %v2696, %v2952
        %v2996 = vadd.f32 %v2698, %v2954
        %v2997 = vadd.f32 %v2700, %v2956
        %v2998 = vadd.f32 %v2702, %v2958
        %v2999 = vadd.f32 %v2704, %v2960
        %v3000 = vadd.f32 %v2706, %v2962
        %v3001 = vadd.f32 %v2708, %v2964
        %v3002 = vadd.f32 %v2710, %v2966
        %v3003 = vadd.f32 %v2712, %v2968
        %v3004 = vadd.f32 %v2714, %v2970
        %v3005 = vadd.f32 %v2716, %v2972
        %v3006 = vadd.f32 %v2718, %v2974
        %3023 = vrot.lane.b32.xlu0 %v2896, 126
        %v3024 = vpop.permute.xlu0 %3023
        %3025 = vrot.lane.b32.xlu0 %v2898, 126
        %v3026 = vpop.permute.xlu0 %3025
        %3027 = vrot.lane.b32.xlu0 %v2900, 126
        %v3028 = vpop.permute.xlu0 %3027
        %3029 = vrot.lane.b32.xlu0 %v2902, 126
        %v3030 = vpop.permute.xlu0 %3029
        %3031 = vrot.lane.b32.xlu0 %v2904, 126
        %v3032 = vpop.permute.xlu0 %3031
        %3033 = vrot.lane.b32.xlu0 %v2906, 126
        %v3034 = vpop.permute.xlu0 %3033
        %3035 = vrot.lane.b32.xlu0 %v2908, 126
        %v3036 = vpop.permute.xlu0 %3035
        %3037 = vrot.lane.b32.xlu0 %v2910, 126
        %v3038 = vpop.permute.xlu0 %3037
        %3039 = vrot.lane.b32.xlu0 %v2912, 126
        %v3040 = vpop.permute.xlu0 %3039
        %3041 = vrot.lane.b32.xlu0 %v2914, 126
        %v3042 = vpop.permute.xlu0 %3041
        %3043 = vrot.lane.b32.xlu0 %v2916, 126
        %v3044 = vpop.permute.xlu0 %3043
        %3045 = vrot.lane.b32.xlu0 %v2918, 126
        %v3046 = vpop.permute.xlu0 %3045
        %3047 = vrot.lane.b32.xlu0 %v2920, 126
        %v3048 = vpop.permute.xlu0 %3047
        %3049 = vrot.lane.b32.xlu0 %v2922, 126
        %v3050 = vpop.permute.xlu0 %3049
        %3051 = vrot.lane.b32.xlu0 %v2924, 126
        %v3052 = vpop.permute.xlu0 %3051
        %3053 = vrot.lane.b32.xlu0 %v2926, 126
        %v3054 = vpop.permute.xlu0 %3053
        %v3071 = vadd.f32 %v2991, %v3024
        %v3072 = vadd.f32 %v2992, %v3026
        %v3073 = vadd.f32 %v2993, %v3028
        %v3074 = vadd.f32 %v2994, %v3030
        %v3075 = vadd.f32 %v2995, %v3032
        %v3076 = vadd.f32 %v2996, %v3034
        %v3077 = vadd.f32 %v2997, %v3036
        %v3078 = vadd.f32 %v2998, %v3038
        %v3079 = vadd.f32 %v2999, %v3040
        %v3080 = vadd.f32 %v3000, %v3042
        %v3081 = vadd.f32 %v3001, %v3044
        %v3082 = vadd.f32 %v3002, %v3046
        %v3083 = vadd.f32 %v3003, %v3048
        %v3084 = vadd.f32 %v3004, %v3050
        %v3085 = vadd.f32 %v3005, %v3052
        %v3086 = vadd.f32 %v3006, %v3054
        %v3087 = vrcp.pop %v3071
        %v3088 = vmul.f32 %v3071, %v3087
        %v3089 = vsub.f32 1.0, %v3088
        %v3090 = vmul.f32 %v3087, %v3089
        %v3091 = vadd.f32 %v3087, %v3090
        %vm3092 = vweird.f32 %v3071
        %vm3093 = vweird.f32 %v3087
        %vm3094 = vmor %vm3092, %vm3093
        %v3095 = vsel %vm3094, %v3087, %v3091
        %v3096 = vand.u32 2147483647, %v3071
        %vm3097 = vcmp.eq.f32.partialorder %v3096, 8.507059e+37
        %v3098 = vand.u32 %v3071, 2147483648
        %v3099 = vor.u32 1.1754944e-38, %v3098
        %v3100 = vsel %vm3097, %v3099, %v3095
        %v3101 = vrcp.pop %v3072
        %v3102 = vmul.f32 %v3072, %v3101
        %v3103 = vsub.f32 1.0, %v3102
        %v3104 = vmul.f32 %v3101, %v3103
        %v3105 = vadd.f32 %v3101, %v3104
        %vm3106 = vweird.f32 %v3072
        %vm3107 = vweird.f32 %v3101
        %vm3108 = vmor %vm3106, %vm3107
        %v3109 = vsel %vm3108, %v3101, %v3105
        %v3110 = vand.u32 2147483647, %v3072
        %vm3111 = vcmp.eq.f32.partialorder %v3110, 8.507059e+37
        %v3112 = vand.u32 %v3072, 2147483648
        %v3113 = vor.u32 1.1754944e-38, %v3112
        %v3114 = vsel %vm3111, %v3113, %v3109
        %v3115 = vrcp.pop %v3073
        %v3116 = vmul.f32 %v3073, %v3115
        %v3117 = vsub.f32 1.0, %v3116
        %v3118 = vmul.f32 %v3115, %v3117
        %v3119 = vadd.f32 %v3115, %v3118
        %vm3120 = vweird.f32 %v3073
        %vm3121 = vweird.f32 %v3115
        %vm3122 = vmor %vm3120, %vm3121
        %v3123 = vsel %vm3122, %v3115, %v3119
        %v3124 = vand.u32 2147483647, %v3073
        %vm3125 = vcmp.eq.f32.partialorder %v3124, 8.507059e+37
        %v3126 = vand.u32 %v3073, 2147483648
        %v3127 = vor.u32 1.1754944e-38, %v3126
        %v3128 = vsel %vm3125, %v3127, %v3123
        %v3129 = vrcp.pop %v3074
        %v3130 = vmul.f32 %v3074, %v3129
        %v3131 = vsub.f32 1.0, %v3130
        %v3132 = vmul.f32 %v3129, %v3131
        %v3133 = vadd.f32 %v3129, %v3132
        %vm3134 = vweird.f32 %v3074
        %vm3135 = vweird.f32 %v3129
        %vm3136 = vmor %vm3134, %vm3135
        %v3137 = vsel %vm3136, %v3129, %v3133
        %v3138 = vand.u32 2147483647, %v3074
        %vm3139 = vcmp.eq.f32.partialorder %v3138, 8.507059e+37
        %v3140 = vand.u32 %v3074, 2147483648
        %v3141 = vor.u32 1.1754944e-38, %v3140
        %v3142 = vsel %vm3139, %v3141, %v3137
        %v3143 = vrcp.pop %v3075
        %v3144 = vmul.f32 %v3075, %v3143
        %v3145 = vsub.f32 1.0, %v3144
        %v3146 = vmul.f32 %v3143, %v3145
        %v3147 = vadd.f32 %v3143, %v3146
        %vm3148 = vweird.f32 %v3075
        %vm3149 = vweird.f32 %v3143
        %vm3150 = vmor %vm3148, %vm3149
        %v3151 = vsel %vm3150, %v3143, %v3147
        %v3152 = vand.u32 2147483647, %v3075
        %vm3153 = vcmp.eq.f32.partialorder %v3152, 8.507059e+37
        %v3154 = vand.u32 %v3075, 2147483648
        %v3155 = vor.u32 1.1754944e-38, %v3154
        %v3156 = vsel %vm3153, %v3155, %v3151
        %v3157 = vrcp.pop %v3076
        %v3158 = vmul.f32 %v3076, %v3157
        %v3159 = vsub.f32 1.0, %v3158
        %v3160 = vmul.f32 %v3157, %v3159
        %v3161 = vadd.f32 %v3157, %v3160
        %vm3162 = vweird.f32 %v3076
        %vm3163 = vweird.f32 %v3157
        %vm3164 = vmor %vm3162, %vm3163
        %v3165 = vsel %vm3164, %v3157, %v3161
        %v3166 = vand.u32 2147483647, %v3076
        %vm3167 = vcmp.eq.f32.partialorder %v3166, 8.507059e+37
        %v3168 = vand.u32 %v3076, 2147483648
        %v3169 = vor.u32 1.1754944e-38, %v3168
        %v3170 = vsel %vm3167, %v3169, %v3165
        %v3171 = vrcp.pop %v3077
        %v3172 = vmul.f32 %v3077, %v3171
        %v3173 = vsub.f32 1.0, %v3172
        %v3174 = vmul.f32 %v3171, %v3173
        %v3175 = vadd.f32 %v3171, %v3174
        %vm3176 = vweird.f32 %v3077
        %vm3177 = vweird.f32 %v3171
        %vm3178 = vmor %vm3176, %vm3177
        %v3179 = vsel %vm3178, %v3171, %v3175
        %v3180 = vand.u32 2147483647, %v3077
        %vm3181 = vcmp.eq.f32.partialorder %v3180, 8.507059e+37
        %v3182 = vand.u32 %v3077, 2147483648
        %v3183 = vor.u32 1.1754944e-38, %v3182
        %v3184 = vsel %vm3181, %v3183, %v3179
        %v3185 = vrcp.pop %v3078
        %v3186 = vmul.f32 %v3078, %v3185
        %v3187 = vsub.f32 1.0, %v3186
        %v3188 = vmul.f32 %v3185, %v3187
        %v3189 = vadd.f32 %v3185, %v3188
        %vm3190 = vweird.f32 %v3078
        %vm3191 = vweird.f32 %v3185
        %vm3192 = vmor %vm3190, %vm3191
        %v3193 = vsel %vm3192, %v3185, %v3189
        %v3194 = vand.u32 2147483647, %v3078
        %vm3195 = vcmp.eq.f32.partialorder %v3194, 8.507059e+37
        %v3196 = vand.u32 %v3078, 2147483648
        %v3197 = vor.u32 1.1754944e-38, %v3196
        %v3198 = vsel %vm3195, %v3197, %v3193
        %v3199 = vrcp.pop %v3079
        %v3200 = vmul.f32 %v3079, %v3199
        %v3201 = vsub.f32 1.0, %v3200
        %v3202 = vmul.f32 %v3199, %v3201
        %v3203 = vadd.f32 %v3199, %v3202
        %vm3204 = vweird.f32 %v3079
        %vm3205 = vweird.f32 %v3199
        %vm3206 = vmor %vm3204, %vm3205
        %v3207 = vsel %vm3206, %v3199, %v3203
        %v3208 = vand.u32 2147483647, %v3079
        %vm3209 = vcmp.eq.f32.partialorder %v3208, 8.507059e+37
        %v3210 = vand.u32 %v3079, 2147483648
        %v3211 = vor.u32 1.1754944e-38, %v3210
        %v3212 = vsel %vm3209, %v3211, %v3207
        %v3213 = vrcp.pop %v3080
        %v3214 = vmul.f32 %v3080, %v3213
        %v3215 = vsub.f32 1.0, %v3214
        %v3216 = vmul.f32 %v3213, %v3215
        %v3217 = vadd.f32 %v3213, %v3216
        %vm3218 = vweird.f32 %v3080
        %vm3219 = vweird.f32 %v3213
        %vm3220 = vmor %vm3218, %vm3219
        %v3221 = vsel %vm3220, %v3213, %v3217
        %v3222 = vand.u32 2147483647, %v3080
        %vm3223 = vcmp.eq.f32.partialorder %v3222, 8.507059e+37
        %v3224 = vand.u32 %v3080, 2147483648
        %v3225 = vor.u32 1.1754944e-38, %v3224
        %v3226 = vsel %vm3223, %v3225, %v3221
        %v3227 = vrcp.pop %v3081
        %v3228 = vmul.f32 %v3081, %v3227
        %v3229 = vsub.f32 1.0, %v3228
        %v3230 = vmul.f32 %v3227, %v3229
        %v3231 = vadd.f32 %v3227, %v3230
        %vm3232 = vweird.f32 %v3081
        %vm3233 = vweird.f32 %v3227
        %vm3234 = vmor %vm3232, %vm3233
        %v3235 = vsel %vm3234, %v3227, %v3231
        %v3236 = vand.u32 2147483647, %v3081
        %vm3237 = vcmp.eq.f32.partialorder %v3236, 8.507059e+37
        %v3238 = vand.u32 %v3081, 2147483648
        %v3239 = vor.u32 1.1754944e-38, %v3238
        %v3240 = vsel %vm3237, %v3239, %v3235
        %v3241 = vrcp.pop %v3082
        %v3242 = vmul.f32 %v3082, %v3241
        %v3243 = vsub.f32 1.0, %v3242
        %v3244 = vmul.f32 %v3241, %v3243
        %v3245 = vadd.f32 %v3241, %v3244
        %vm3246 = vweird.f32 %v3082
        %vm3247 = vweird.f32 %v3241
        %vm3248 = vmor %vm3246, %vm3247
        %v3249 = vsel %vm3248, %v3241, %v3245
        %v3250 = vand.u32 2147483647, %v3082
        %vm3251 = vcmp.eq.f32.partialorder %v3250, 8.507059e+37
        %v3252 = vand.u32 %v3082, 2147483648
        %v3253 = vor.u32 1.1754944e-38, %v3252
        %v3254 = vsel %vm3251, %v3253, %v3249
        %v3255 = vrcp.pop %v3083
        %v3256 = vmul.f32 %v3083, %v3255
        %v3257 = vsub.f32 1.0, %v3256
        %v3258 = vmul.f32 %v3255, %v3257
        %v3259 = vadd.f32 %v3255, %v3258
        %vm3260 = vweird.f32 %v3083
        %vm3261 = vweird.f32 %v3255
        %vm3262 = vmor %vm3260, %vm3261
        %v3263 = vsel %vm3262, %v3255, %v3259
        %v3264 = vand.u32 2147483647, %v3083
        %vm3265 = vcmp.eq.f32.partialorder %v3264, 8.507059e+37
        %v3266 = vand.u32 %v3083, 2147483648
        %v3267 = vor.u32 1.1754944e-38, %v3266
        %v3268 = vsel %vm3265, %v3267, %v3263
        %v3269 = vrcp.pop %v3084
        %v3270 = vmul.f32 %v3084, %v3269
        %v3271 = vsub.f32 1.0, %v3270
        %v3272 = vmul.f32 %v3269, %v3271
        %v3273 = vadd.f32 %v3269, %v3272
        %vm3274 = vweird.f32 %v3084
        %vm3275 = vweird.f32 %v3269
        %vm3276 = vmor %vm3274, %vm3275
        %v3277 = vsel %vm3276, %v3269, %v3273
        %v3278 = vand.u32 2147483647, %v3084
        %vm3279 = vcmp.eq.f32.partialorder %v3278, 8.507059e+37
        %v3280 = vand.u32 %v3084, 2147483648
        %v3281 = vor.u32 1.1754944e-38, %v3280
        %v3282 = vsel %vm3279, %v3281, %v3277
        %v3283 = vrcp.pop %v3085
        %v3284 = vmul.f32 %v3085, %v3283
        %v3285 = vsub.f32 1.0, %v3284
        %v3286 = vmul.f32 %v3283, %v3285
        %v3287 = vadd.f32 %v3283, %v3286
        %vm3288 = vweird.f32 %v3085
        %vm3289 = vweird.f32 %v3283
        %vm3290 = vmor %vm3288, %vm3289
        %v3291 = vsel %vm3290, %v3283, %v3287
        %v3292 = vand.u32 2147483647, %v3085
        %vm3293 = vcmp.eq.f32.partialorder %v3292, 8.507059e+37
        %v3294 = vand.u32 %v3085, 2147483648
        %v3295 = vor.u32 1.1754944e-38, %v3294
        %v3296 = vsel %vm3293, %v3295, %v3291
        %v3297 = vrcp.pop %v3086
        %v3298 = vmul.f32 %v3086, %v3297
        %v3299 = vsub.f32 1.0, %v3298
        %v3300 = vmul.f32 %v3297, %v3299
        %v3301 = vadd.f32 %v3297, %v3300
        %vm3302 = vweird.f32 %v3086
        %vm3303 = vweird.f32 %v3297
        %vm3304 = vmor %vm3302, %vm3303
        %v3305 = vsel %vm3304, %v3297, %v3301
        %v3306 = vand.u32 2147483647, %v3086
        %vm3307 = vcmp.eq.f32.partialorder %v3306, 8.507059e+37
        %v3308 = vand.u32 %v3086, 2147483648
        %v3309 = vor.u32 1.1754944e-38, %v3308
        %v3310 = vsel %vm3307, %v3309, %v3305
        %v3311 = vmul.f32 %v2688, %v3100
        %v3312 = vmul.f32 %v2690, %v3114
        %v3313 = vmul.f32 %v2692, %v3128
        %v3314 = vmul.f32 %v2694, %v3142
        %v3315 = vmul.f32 %v2696, %v3156
        %v3316 = vmul.f32 %v2698, %v3170
        %v3317 = vmul.f32 %v2700, %v3184
        %v3318 = vmul.f32 %v2702, %v3198
        %v3319 = vmul.f32 %v2704, %v3212
        %v3320 = vmul.f32 %v2706, %v3226
        %v3321 = vmul.f32 %v2708, %v3240
        %v3322 = vmul.f32 %v2710, %v3254
        %v3323 = vmul.f32 %v2712, %v3268
        %v3324 = vmul.f32 %v2714, %v3282
        %v3325 = vmul.f32 %v2716, %v3296
        %v3326 = vmul.f32 %v2718, %v3310
        %3328 = vset.pattern.permute.xlu0 0
        %3329 = vperm.xlu0 %3328, %v3311
        %v3330 = vpop.permute.xlu0 %3329
        %3333 = vset.pattern.permute.xlu0 0
        %3334 = vperm.xlu0 %3333, %v3312
        %v3335 = vpop.permute.xlu0 %3334
        %3338 = vset.pattern.permute.xlu0 0
        %3339 = vperm.xlu0 %3338, %v3313
        %v3340 = vpop.permute.xlu0 %3339
        %3343 = vset.pattern.permute.xlu0 0
        %3344 = vperm.xlu0 %3343, %v3314
        %v3345 = vpop.permute.xlu0 %3344
        %3348 = vset.pattern.permute.xlu0 0
        %3349 = vperm.xlu0 %3348, %v3315
        %v3350 = vpop.permute.xlu0 %3349
        %3353 = vset.pattern.permute.xlu0 0
        %3354 = vperm.xlu0 %3353, %v3316
        %v3355 = vpop.permute.xlu0 %3354
        %3358 = vset.pattern.permute.xlu0 0
        %3359 = vperm.xlu0 %3358, %v3317
        %v3360 = vpop.permute.xlu0 %3359
        %3363 = vset.pattern.permute.xlu0 0
        %3364 = vperm.xlu0 %3363, %v3318
        %v3365 = vpop.permute.xlu0 %3364
        %3368 = vset.pattern.permute.xlu0 0
        %3369 = vperm.xlu0 %3368, %v3319
        %v3370 = vpop.permute.xlu0 %3369
        %3373 = vset.pattern.permute.xlu0 0
        %3374 = vperm.xlu0 %3373, %v3320
        %v3375 = vpop.permute.xlu0 %3374
        %3378 = vset.pattern.permute.xlu0 0
        %3379 = vperm.xlu0 %3378, %v3321
        %v3380 = vpop.permute.xlu0 %3379
        %3383 = vset.pattern.permute.xlu0 0
        %3384 = vperm.xlu0 %3383, %v3322
        %v3385 = vpop.permute.xlu0 %3384
        %3388 = vset.pattern.permute.xlu0 0
        %3389 = vperm.xlu0 %3388, %v3323
        %v3390 = vpop.permute.xlu0 %3389
        %3393 = vset.pattern.permute.xlu0 0
        %3394 = vperm.xlu0 %3393, %v3324
        %v3395 = vpop.permute.xlu0 %3394
        %3398 = vset.pattern.permute.xlu0 0
        %3399 = vperm.xlu0 %3398, %v3325
        %v3400 = vpop.permute.xlu0 %3399
        %3403 = vset.pattern.permute.xlu0 0
        %3404 = vperm.xlu0 %3403, %v3326
        %v3405 = vpop.permute.xlu0 %3404
        %v3407 = vmul.f32 %v286, %v3330
        %v3408 = vmul.f32 %v287, %v3335
        %v3409 = vmul.f32 %v288, %v3340
        %v3410 = vmul.f32 %v289, %v3345
        %v3411 = vmul.f32 %v290, %v3350
        %v3412 = vmul.f32 %v291, %v3355
        %v3413 = vmul.f32 %v292, %v3360
        %v3414 = vmul.f32 %v293, %v3365
        %v3415 = vmul.f32 %v294, %v3370
        %v3416 = vmul.f32 %v295, %v3375
        %v3417 = vmul.f32 %v296, %v3380
        %v3418 = vmul.f32 %v297, %v3385
        %v3419 = vmul.f32 %v298, %v3390
        %v3420 = vmul.f32 %v299, %v3395
        %v3421 = vmul.f32 %v300, %v3400
        %v3422 = vmul.f32 %v301, %v3405
        %3439 = vrot.lane.b32.xlu0 %v3100, 1
        %v3440 = vpop.permute.xlu0 %3439
        %3441 = vrot.lane.b32.xlu0 %v3114, 1
        %v3442 = vpop.permute.xlu0 %3441
        %3443 = vrot.lane.b32.xlu0 %v3128, 1
        %v3444 = vpop.permute.xlu0 %3443
        %3445 = vrot.lane.b32.xlu0 %v3142, 1
        %v3446 = vpop.permute.xlu0 %3445
        %3447 = vrot.lane.b32.xlu0 %v3156, 1
        %v3448 = vpop.permute.xlu0 %3447
        %3449 = vrot.lane.b32.xlu0 %v3170, 1
        %v3450 = vpop.permute.xlu0 %3449
        %3451 = vrot.lane.b32.xlu0 %v3184, 1
        %v3452 = vpop.permute.xlu0 %3451
        %3453 = vrot.lane.b32.xlu0 %v3198, 1
        %v3454 = vpop.permute.xlu0 %3453
        %3455 = vrot.lane.b32.xlu0 %v3212, 1
        %v3456 = vpop.permute.xlu0 %3455
        %3457 = vrot.lane.b32.xlu0 %v3226, 1
        %v3458 = vpop.permute.xlu0 %3457
        %3459 = vrot.lane.b32.xlu0 %v3240, 1
        %v3460 = vpop.permute.xlu0 %3459
        %3461 = vrot.lane.b32.xlu0 %v3254, 1
        %v3462 = vpop.permute.xlu0 %3461
        %3463 = vrot.lane.b32.xlu0 %v3268, 1
        %v3464 = vpop.permute.xlu0 %3463
        %3465 = vrot.lane.b32.xlu0 %v3282, 1
        %v3466 = vpop.permute.xlu0 %3465
        %3467 = vrot.lane.b32.xlu0 %v3296, 1
        %v3468 = vpop.permute.xlu0 %3467
        %3469 = vrot.lane.b32.xlu0 %v3310, 1
        %v3470 = vpop.permute.xlu0 %3469
        %v3487 = vmul.f32 %v2800, %v3440
        %v3488 = vmul.f32 %v2802, %v3442
        %v3489 = vmul.f32 %v2804, %v3444
        %v3490 = vmul.f32 %v2806, %v3446
        %v3491 = vmul.f32 %v2808, %v3448
        %v3492 = vmul.f32 %v2810, %v3450
        %v3493 = vmul.f32 %v2812, %v3452
        %v3494 = vmul.f32 %v2814, %v3454
        %v3495 = vmul.f32 %v2816, %v3456
        %v3496 = vmul.f32 %v2818, %v3458
        %v3497 = vmul.f32 %v2820, %v3460
        %v3498 = vmul.f32 %v2822, %v3462
        %v3499 = vmul.f32 %v2824, %v3464
        %v3500 = vmul.f32 %v2826, %v3466
        %v3501 = vmul.f32 %v2828, %v3468
        %v3502 = vmul.f32 %v2830, %v3470
        %3504 = vset.pattern.permute.xlu0 1
        %3505 = vperm.xlu0 %3504, %v3487
        %v3506 = vpop.permute.xlu0 %3505
        %3509 = vset.pattern.permute.xlu0 1
        %3510 = vperm.xlu0 %3509, %v3488
        %v3511 = vpop.permute.xlu0 %3510
        %3514 = vset.pattern.permute.xlu0 1
        %3515 = vperm.xlu0 %3514, %v3489
        %v3516 = vpop.permute.xlu0 %3515
        %3519 = vset.pattern.permute.xlu0 1
        %3520 = vperm.xlu0 %3519, %v3490
        %v3521 = vpop.permute.xlu0 %3520
        %3524 = vset.pattern.permute.xlu0 1
        %3525 = vperm.xlu0 %3524, %v3491
        %v3526 = vpop.permute.xlu0 %3525
        %3529 = vset.pattern.permute.xlu0 1
        %3530 = vperm.xlu0 %3529, %v3492
        %v3531 = vpop.permute.xlu0 %3530
        %3534 = vset.pattern.permute.xlu0 1
        %3535 = vperm.xlu0 %3534, %v3493
        %v3536 = vpop.permute.xlu0 %3535
        %3539 = vset.pattern.permute.xlu0 1
        %3540 = vperm.xlu0 %3539, %v3494
        %v3541 = vpop.permute.xlu0 %3540
        %3544 = vset.pattern.permute.xlu0 1
        %3545 = vperm.xlu0 %3544, %v3495
        %v3546 = vpop.permute.xlu0 %3545
        %3549 = vset.pattern.permute.xlu0 1
        %3550 = vperm.xlu0 %3549, %v3496
        %v3551 = vpop.permute.xlu0 %3550
        %3554 = vset.pattern.permute.xlu0 1
        %3555 = vperm.xlu0 %3554, %v3497
        %v3556 = vpop.permute.xlu0 %3555
        %3559 = vset.pattern.permute.xlu0 1
        %3560 = vperm.xlu0 %3559, %v3498
        %v3561 = vpop.permute.xlu0 %3560
        %3564 = vset.pattern.permute.xlu0 1
        %3565 = vperm.xlu0 %3564, %v3499
        %v3566 = vpop.permute.xlu0 %3565
        %3569 = vset.pattern.permute.xlu0 1
        %3570 = vperm.xlu0 %3569, %v3500
        %v3571 = vpop.permute.xlu0 %3570
        %3574 = vset.pattern.permute.xlu0 1
        %3575 = vperm.xlu0 %3574, %v3501
        %v3576 = vpop.permute.xlu0 %3575
        %3579 = vset.pattern.permute.xlu0 1
        %3580 = vperm.xlu0 %3579, %v3502
        %v3581 = vpop.permute.xlu0 %3580
        %v3583 = vmul.f32 %v302, %v3506
        %v3584 = vmul.f32 %v303, %v3511
        %v3585 = vmul.f32 %v304, %v3516
        %v3586 = vmul.f32 %v305, %v3521
        %v3587 = vmul.f32 %v306, %v3526
        %v3588 = vmul.f32 %v307, %v3531
        %v3589 = vmul.f32 %v308, %v3536
        %v3590 = vmul.f32 %v309, %v3541
        %v3591 = vmul.f32 %v310, %v3546
        %v3592 = vmul.f32 %v311, %v3551
        %v3593 = vmul.f32 %v312, %v3556
        %v3594 = vmul.f32 %v313, %v3561
        %v3595 = vmul.f32 %v314, %v3566
        %v3596 = vmul.f32 %v315, %v3571
        %v3597 = vmul.f32 %v316, %v3576
        %v3598 = vmul.f32 %v317, %v3581
        %v3599 = vadd.f32 %v3407, %v3583
        %v3600 = vadd.f32 %v3408, %v3584
        %v3601 = vadd.f32 %v3409, %v3585
        %v3602 = vadd.f32 %v3410, %v3586
        %v3603 = vadd.f32 %v3411, %v3587
        %v3604 = vadd.f32 %v3412, %v3588
        %v3605 = vadd.f32 %v3413, %v3589
        %v3606 = vadd.f32 %v3414, %v3590
        %v3607 = vadd.f32 %v3415, %v3591
        %v3608 = vadd.f32 %v3416, %v3592
        %v3609 = vadd.f32 %v3417, %v3593
        %v3610 = vadd.f32 %v3418, %v3594
        %v3611 = vadd.f32 %v3419, %v3595
        %v3612 = vadd.f32 %v3420, %v3596
        %v3613 = vadd.f32 %v3421, %v3597
        %v3614 = vadd.f32 %v3422, %v3598
        %3615 = vrot.lane.b32.xlu0 %v3100, 2
        %v3616 = vpop.permute.xlu0 %3615
        %3617 = vrot.lane.b32.xlu0 %v3114, 2
        %v3618 = vpop.permute.xlu0 %3617
        %3619 = vrot.lane.b32.xlu0 %v3128, 2
        %v3620 = vpop.permute.xlu0 %3619
        %3621 = vrot.lane.b32.xlu0 %v3142, 2
        %v3622 = vpop.permute.xlu0 %3621
        %3623 = vrot.lane.b32.xlu0 %v3156, 2
        %v3624 = vpop.permute.xlu0 %3623
        %3625 = vrot.lane.b32.xlu0 %v3170, 2
        %v3626 = vpop.permute.xlu0 %3625
        %3627 = vrot.lane.b32.xlu0 %v3184, 2
        %v3628 = vpop.permute.xlu0 %3627
        %3629 = vrot.lane.b32.xlu0 %v3198, 2
        %v3630 = vpop.permute.xlu0 %3629
        %3631 = vrot.lane.b32.xlu0 %v3212, 2
        %v3632 = vpop.permute.xlu0 %3631
        %3633 = vrot.lane.b32.xlu0 %v3226, 2
        %v3634 = vpop.permute.xlu0 %3633
        %3635 = vrot.lane.b32.xlu0 %v3240, 2
        %v3636 = vpop.permute.xlu0 %3635
        %3637 = vrot.lane.b32.xlu0 %v3254, 2
        %v3638 = vpop.permute.xlu0 %3637
        %3639 = vrot.lane.b32.xlu0 %v3268, 2
        %v3640 = vpop.permute.xlu0 %3639
        %3641 = vrot.lane.b32.xlu0 %v3282, 2
        %v3642 = vpop.permute.xlu0 %3641
        %3643 = vrot.lane.b32.xlu0 %v3296, 2
        %v3644 = vpop.permute.xlu0 %3643
        %3645 = vrot.lane.b32.xlu0 %v3310, 2
        %v3646 = vpop.permute.xlu0 %3645
        %v3663 = vmul.f32 %v2896, %v3616
        %v3664 = vmul.f32 %v2898, %v3618
        %v3665 = vmul.f32 %v2900, %v3620
        %v3666 = vmul.f32 %v2902, %v3622
        %v3667 = vmul.f32 %v2904, %v3624
        %v3668 = vmul.f32 %v2906, %v3626
        %v3669 = vmul.f32 %v2908, %v3628
        %v3670 = vmul.f32 %v2910, %v3630
        %v3671 = vmul.f32 %v2912, %v3632
        %v3672 = vmul.f32 %v2914, %v3634
        %v3673 = vmul.f32 %v2916, %v3636
        %v3674 = vmul.f32 %v2918, %v3638
        %v3675 = vmul.f32 %v2920, %v3640
        %v3676 = vmul.f32 %v2922, %v3642
        %v3677 = vmul.f32 %v2924, %v3644
        %v3678 = vmul.f32 %v2926, %v3646
        %3680 = vset.pattern.permute.xlu0 2
        %3681 = vperm.xlu0 %3680, %v3663
        %v3682 = vpop.permute.xlu0 %3681
        %3685 = vset.pattern.permute.xlu0 2
        %3686 = vperm.xlu0 %3685, %v3664
        %v3687 = vpop.permute.xlu0 %3686
        %3690 = vset.pattern.permute.xlu0 2
        %3691 = vperm.xlu0 %3690, %v3665
        %v3692 = vpop.permute.xlu0 %3691
        %3695 = vset.pattern.permute.xlu0 2
        %3696 = vperm.xlu0 %3695, %v3666
        %v3697 = vpop.permute.xlu0 %3696
        %3700 = vset.pattern.permute.xlu0 2
        %3701 = vperm.xlu0 %3700, %v3667
        %v3702 = vpop.permute.xlu0 %3701
        %3705 = vset.pattern.permute.xlu0 2
        %3706 = vperm.xlu0 %3705, %v3668
        %v3707 = vpop.permute.xlu0 %3706
        %3710 = vset.pattern.permute.xlu0 2
        %3711 = vperm.xlu0 %3710, %v3669
        %v3712 = vpop.permute.xlu0 %3711
        %3715 = vset.pattern.permute.xlu0 2
        %3716 = vperm.xlu0 %3715, %v3670
        %v3717 = vpop.permute.xlu0 %3716
        %3720 = vset.pattern.permute.xlu0 2
        %3721 = vperm.xlu0 %3720, %v3671
        %v3722 = vpop.permute.xlu0 %3721
        %3725 = vset.pattern.permute.xlu0 2
        %3726 = vperm.xlu0 %3725, %v3672
        %v3727 = vpop.permute.xlu0 %3726
        %3730 = vset.pattern.permute.xlu0 2
        %3731 = vperm.xlu0 %3730, %v3673
        %v3732 = vpop.permute.xlu0 %3731
        %3735 = vset.pattern.permute.xlu0 2
        %3736 = vperm.xlu0 %3735, %v3674
        %v3737 = vpop.permute.xlu0 %3736
        %3740 = vset.pattern.permute.xlu0 2
        %3741 = vperm.xlu0 %3740, %v3675
        %v3742 = vpop.permute.xlu0 %3741
        %3745 = vset.pattern.permute.xlu0 2
        %3746 = vperm.xlu0 %3745, %v3676
        %v3747 = vpop.permute.xlu0 %3746
        %3750 = vset.pattern.permute.xlu0 2
        %3751 = vperm.xlu0 %3750, %v3677
        %v3752 = vpop.permute.xlu0 %3751
        %3755 = vset.pattern.permute.xlu0 2
        %3756 = vperm.xlu0 %3755, %v3678
        %v3757 = vpop.permute.xlu0 %3756
        %v3759 = vmul.f32 %v318, %v3682
        %v3760 = vmul.f32 %v319, %v3687
        %v3761 = vmul.f32 %v320, %v3692
        %v3762 = vmul.f32 %v321, %v3697
        %v3763 = vmul.f32 %v322, %v3702
        %v3764 = vmul.f32 %v323, %v3707
        %v3765 = vmul.f32 %v324, %v3712
        %v3766 = vmul.f32 %v325, %v3717
        %v3767 = vmul.f32 %v326, %v3722
        %v3768 = vmul.f32 %v327, %v3727
        %v3769 = vmul.f32 %v328, %v3732
        %v3770 = vmul.f32 %v329, %v3737
        %v3771 = vmul.f32 %v330, %v3742
        %v3772 = vmul.f32 %v331, %v3747
        %v3773 = vmul.f32 %v332, %v3752
        %v3774 = vmul.f32 %v333, %v3757
        %v3775 = vadd.f32 %v3599, %v3759
        %v3776 = vadd.f32 %v3600, %v3760
        %v3777 = vadd.f32 %v3601, %v3761
        %v3778 = vadd.f32 %v3602, %v3762
        %v3779 = vadd.f32 %v3603, %v3763
        %v3780 = vadd.f32 %v3604, %v3764
        %v3781 = vadd.f32 %v3605, %v3765
        %v3782 = vadd.f32 %v3606, %v3766
        %v3783 = vadd.f32 %v3607, %v3767
        %v3784 = vadd.f32 %v3608, %v3768
        %v3785 = vadd.f32 %v3609, %v3769
        %v3786 = vadd.f32 %v3610, %v3770
        %v3787 = vadd.f32 %v3611, %v3771
        %v3788 = vadd.f32 %v3612, %v3772
        %v3789 = vadd.f32 %v3613, %v3773
        %v3790 = vadd.f32 %v3614, %v3774
        %3791 = vst.msk [vmem:[%s284] sm:$0xff] %vm346, %v3775
        %3792 = vst.msk [vmem:[%s284 + $0x8] sm:$0xff] %vm346, %v3776
        %3793 = vst.msk [vmem:[%s284 + $0x10] sm:$0xff] %vm346, %v3777
        %3794 = vst.msk [vmem:[%s284 + $0x18] sm:$0xff] %vm346, %v3778
        %3795 = vst.msk [vmem:[%s284 + $0x20] sm:$0xff] %vm346, %v3779
        %3796 = vst.msk [vmem:[%s284 + $0x28] sm:$0xff] %vm346, %v3780
        %3797 = vst.msk [vmem:[%s284 + $0x30] sm:$0xff] %vm346, %v3781
        %3798 = vst.msk [vmem:[%s284 + $0x38] sm:$0xff] %vm346, %v3782
        %3799 = vst.msk [vmem:[%s284 + $0x40] sm:$0xff] %vm346, %v3783
        %3800 = vst.msk [vmem:[%s284 + $0x48] sm:$0xff] %vm346, %v3784
        %3801 = vst.msk [vmem:[%s284 + $0x50] sm:$0xff] %vm346, %v3785
        %3802 = vst.msk [vmem:[%s284 + $0x58] sm:$0xff] %vm346, %v3786
        %3803 = vst.msk [vmem:[%s284 + $0x60] sm:$0xff] %vm346, %v3787
        %3804 = vst.msk [vmem:[%s284 + $0x68] sm:$0xff] %vm346, %v3788
        %3805 = vst.msk [vmem:[%s284 + $0x70] sm:$0xff] %vm346, %v3789
        %3806 = vst.msk [vmem:[%s284 + $0x78] sm:$0xff] %vm346, %v3790
        %s3807 = smul.u32 16, %s17
        %p3808 = scmp.lt.s32.totalorder %s3807, 31
        %s3809 = scalar_select %p3808, %s3807, 31
        %s3810 = smul.addr %s3809, 8
        %s3811 = scalar_lea.vmem %s5, %s3810
        // Predicated region
        $region45: #{tpu_custom_call.1} parent=39 // pred_check
          %p3812 = pneg %p155
        $region46: #{tpu_custom_call.1} parent=39 // pred_check_branch
          %3814 = sbr.rel (%p3812) target = $region48
        $region47: #{tpu_custom_call.1} parent=39 // pred_region
          %s3815 = smul.u32 16, %s17
        $region48: #{tpu_custom_call.1} parent=39 // pred_fallthru
          _
      $region40: #{tpu_custom_call.1} parent=5 // pred_fallthru
        _
      %p3816 = scmp.le.s32.totalorder 2, %s12
      // Predicated region
      $region49: #{tpu_custom_call.1} parent=5 // pred_check
        %p3817 = pneg %p3816
      $region50: #{tpu_custom_call.1} parent=5 // pred_check_branch
        %3819 = sbr.rel (%p3817) target = $region52
      $region51: #{tpu_custom_call.1} parent=5 // pred_region
        %s3820 = ssub.s32 %s12, 2
        // Predicated region
        $region53: #{tpu_custom_call.1} parent=51 // pred_check
          %p3821 = pneg %p161
        $region54: #{tpu_custom_call.1} parent=51 // pred_check_branch
          %3823 = sbr.rel (%p3821) target = $region56
        $region55: #{tpu_custom_call.1} parent=51 // pred_region
          %s3824 = smul.u32 16, %s18
          %p3825 = scmp.lt.s32.totalorder %s3824, 31
          %s3826 = scalar_select %p3825, %s3824, 31
          %s3827 = smul.addr %s3826, 8
          %s3828 = scalar_lea.vmem %s5, %s3827
        $region56: #{tpu_custom_call.1} parent=51 // pred_fallthru
          _
      $region52: #{tpu_custom_call.1} parent=5 // pred_fallthru
        _
    $region6: #{tpu_custom_call.1} parent=1 // loop_footer
      %s16 = sadd.s32 1, %s12
    $region7: #{tpu_custom_call.1} parent=1 // loop_footer_branch
      %11 = sbr.rel target = $region3
    $region8: #{tpu_custom_call.1} parent=1 // loop_exit
      _
    %3829 = vsyncpa [#allocation3], 1
    %s3830 = scalar_lea.sflag [#allocation3], 1
    %3831 = vsyncpa %s3830, 1

</llo_original>
